<compile_context>
chip_gen: v7x
topology: tpu7x:2x2x1
jax: 0.10.0
libtpu: 0.0.40
codegen_flags: <defaults>
</compile_context>

<pallas_src>
import functools

import jax
import jax.numpy as jnp
import numpy as np
from jax.experimental import pallas as pl
from jax.experimental.pallas import tpu as pltpu

BN_EPS = 1e-5


# ---------------------------------------------------------------------------
# Pass 1: in-kernel (H+W) nearest upsample + halo/pad -> folded-tap 3x3 conv
#          (one MXU matmul per output-column parity) -> per-tile BN partials
# ---------------------------------------------------------------------------
def _conv_stats_kernel(xc_ref, xt_ref, xb_ref, w_ref,
                       conv_ref, sum_ref, sq_ref,
                       slab_ref, opnd_ref,
                       *, scale, h_in, compute_dtype):
    i = pl.program_id(1)

    th_in = xc_ref.shape[1]
    w_in = xc_ref.shape[2]
    cin = xc_ref.shape[3]
    cout = w_ref.shape[2]
    th_out = scale * th_in
    # Per output-column parity: which W-offset of the (non-upsampled, W-padded)
    # slab each packed tap reads.  scale==2 folds the duplicated upsample
    # columns into pre-summed weights, so only 2 taps per kh are needed.
    cols = ((0, 1, 2),) if scale == 1 else ((0, 1), (1, 2))
    ntap = len(cols[0])
    k_dim = 3 * ntap * cin
    mh = th_out * w_in

    # ---- Build the (H-upsampled + halo + W-zero-padded) input slab in VMEM. --
    #   slab row 0          : conv zero-pad / top halo (input row i*th_in-1)
    #   slab rows 1..th_out : H-upsampled rows of this tile
    #   slab row th_out+1   : conv zero-pad / bottom halo (input row (i+1)*th_in)
    #   slab col 0, w_in+1  : conv zero-pad columns (W upsample folded into taps)
    slab_ref[...] = jnp.zeros(slab_ref.shape, slab_ref.dtype)

    xc = xc_ref[0]                                            # (th_in, w_in, cin)
    # Zero the garbage rows of a ragged last tile (OOB block reads).
    row_ids = i * th_in + jax.lax.broadcasted_iota(jnp.int32, (th_in, 1, 1), 0)
    xc = jnp.where(row_ids < h_in, xc, 0.0).astype(compute_dtype)
    x_up = xc if scale == 1 else jnp.repeat(xc, scale, axis=0)  # (th_out, w_in, cin)
    slab_ref[1:1 + th_out, 1:1 + w_in, :] = x_up

    @pl.when(i > 0)
    def _():
        slab_ref[0:1, 1:1 + w_in, :] = xt_ref[0].astype(compute_dtype)

    @pl.when((i + 1) * th_in < h_in)
    def _():
        slab_ref[th_out + 1:th_out + 2, 1:1 + w_in, :] = xb_ref[0].astype(compute_dtype)

    # ---- Per parity: pack taps along K (im2col in VMEM), one MXU matmul. -----
    v_in = jnp.minimum(h_in - i * th_in, th_in)               # valid input rows
    valid_flat = scale * v_in * w_in                          # valid flattened rows
    rmask = jax.lax.broadcasted_iota(jnp.int32, (mh, 1), 0) < valid_flat

    psum = jnp.zeros((1, cout), jnp.float32)
    psq = jnp.zeros((1, cout), jnp.float32)
    for p in range(scale):
        for kh in range(3):
            for s, c0 in enumerate(cols[p]):
                slot = kh * ntap + s
                opnd_ref[:, :, slot * cin:(slot + 1) * cin] = (
                    slab_ref[kh:kh + th_out, c0:c0 + w_in, :])
        a = opnd_ref[...].reshape(mh, k_dim)
        res = jnp.dot(a, w_ref[p], preferred_element_type=jnp.float32)  # (mh, cout)
        conv_ref[0, :, :, p * cout:(p + 1) * cout] = (
            res.reshape(th_out, w_in, cout).astype(conv_ref.dtype))
        # Cross-tile BN partials (rows beyond the valid H range masked out).
        resm = jnp.where(rmask, res, 0.0)
        psum = psum + jnp.sum(resm, axis=0, keepdims=True)
        psq = psq + jnp.sum(resm * resm, axis=0, keepdims=True)

    sum_ref[...] = psum.reshape(1, 1, 1, cout)
    sq_ref[...] = psq.reshape(1, 1, 1, cout)


# ---------------------------------------------------------------------------
# Pass 2: fused BN affine (y = conv * s + t) + ReLU, lane-dense streaming.
# ---------------------------------------------------------------------------
def _bn_relu_kernel(conv_ref, s_ref, t_ref, out_ref):
    y = conv_ref[...].astype(jnp.float32) * s_ref[...] + t_ref[...]
    out_ref[...] = jnp.maximum(y, 0.0).astype(out_ref.dtype)


# ---------------------------------------------------------------------------
# Sizing helpers (padding-aware, per-generation VMEM budget).
# ---------------------------------------------------------------------------
def _round_up(x, m):
    return ((x + m - 1) // m) * m


def _vmem_limit_bytes():
    cap = 0
    try:
        cap = int(pltpu.get_tpu_info().vmem_capacity_bytes)
    except Exception:
        cap = 0
    if cap <= 0:
        cap = 64 * 1024 * 1024        # conservative fallback (v7x-sized)
    return int(min(100 * 1024 * 1024, max(32 * 1024 * 1024, (cap * 3) // 4)))


def _pass1_vmem_bytes(th_in, w_in, cin, cout, scale, cb):
    """Padding-aware per-grid-step VMEM footprint estimate for pass 1."""
    lane = 128
    su_in = 8                      # f32 input blocks
    su_cb = 8 * (4 // cb)          # sublane multiple of the compute dtype
    th_out = scale * th_in
    ntap = 3 if scale == 1 else 2
    k_dim = 3 * ntap * cin
    mh = th_out * w_in
    b = 0
    # double-buffered input blocks (center + 2 halo rows)
    b += 2 * 4 * th_in * _round_up(w_in, su_in) * _round_up(cin, lane)
    b += 2 * 2 * 4 * 1 * _round_up(w_in, su_in) * _round_up(cin, lane)
    # packed weights (conservatively double-buffered)
    b += 2 * cb * scale * _round_up(k_dim, su_cb) * _round_up(cout, lane)
    # double-buffered conv output block + stat blocks
    b += 2 * cb * th_out * _round_up(w_in, su_cb) * _round_up(scale * cout, lane)
    b += 2 * 2 * 4 * 8 * _round_up(cout, lane)
    # scratch: padded slab + im2col operand
    b += cb * (th_out + 2) * _round_up(w_in + 2, su_cb) * _round_up(cin, lane)
    b += cb * th_out * _round_up(w_in, su_cb) * _round_up(k_dim, lane)
    # live f32 matmul result (+ masked copy for the stats)
    b += 2 * 4 * _round_up(mh, 8) * _round_up(cout, lane)
    return b


def _pick_row_block(h_in, w_in, cin, cout, scale, cb, budget):
    align = 8 if scale == 1 else 4        # keep th_out a multiple of 8
    cap = max(1, min(h_in, 512 // scale))
    fit = 1
    for th in range(1, cap + 1):
        if _pass1_vmem_bytes(th, w_in, cin, cout, scale, cb) <= budget:
            fit = th
    if fit >= align:
        fit = (fit // align) * align
    return fit


def _pick_pass2_rows(total_rows, wcc, conv_bytes, out_bytes, budget):
    wcc_pad = _round_up(wcc, 128)
    per_row = 2 * wcc_pad * (conv_bytes + out_bytes) + 4 * wcc_pad
    th2 = max(8, ((budget // per_row) // 8) * 8)
    th2 = min(th2, 2048)
    if th2 >= total_rows:
        return total_rows
    return th2


# ---------------------------------------------------------------------------
# Wrapper: matches PyTorch up_conv.forward in train mode (BN uses batch stats).
# ---------------------------------------------------------------------------
@functools.partial(jax.jit, static_argnames=("same", "row_block", "compute_dtype"))
def up_conv_forward(x_nchw, weight, bias, gamma, beta, same=False, row_block=None,
                    compute_dtype=jnp.bfloat16):
    """x_nchw: (N, Cin, H, W); weight: (Cout, Cin, 3, 3); bias/gamma/beta: (Cout,).

    `bias` is accepted for interface parity but never added: under train-mode
    BatchNorm it is exactly cancelled by the mean subtraction.  (Not valid for
    eval-mode / running-stats BN.)
    """
    del bias
    n, cin, h_in, w_in = x_nchw.shape
    cout = weight.shape[0]
    assert weight.shape == (cout, cin, 3, 3), weight.shape
    scale = 1 if same else 2
    h_out, w_out = scale * h_in, scale * w_in

    vmem_limit = _vmem_limit_bytes()
    budget = (vmem_limit * 7) // 10
    cb = jnp.dtype(compute_dtype).itemsize

    # TODO(synk): keep activations NHWC end-to-end to drop this transpose glue.
    x = jnp.transpose(x_nchw, (0, 2, 3, 1))                    # NCHW -> NHWC

    # Pack conv weights per output-column parity, folding the nearest-upsample
    # column duplication into pre-summed taps:
    #   even cols: out = slab[j]*W0   + slab[j+1]*(W1+W2)
    #   odd  cols: out = slab[j+1]*(W0+W1) + slab[j+2]*W2
    w_k = jnp.transpose(weight, (2, 3, 1, 0)).astype(jnp.float32)   # (kh, kw, cin, cout)
    if scale == 1:
        w_packed = w_k.reshape(1, 9 * cin, cout)
    else:
        w0, w1, w2 = w_k[:, 0], w_k[:, 1], w_k[:, 2]                # (3, cin, cout)
        even = jnp.stack([w0, w1 + w2], axis=1)                     # taps: col+0, col+1
        odd = jnp.stack([w0 + w1, w2], axis=1)                      # taps: col+1, col+2
        w_packed = jnp.stack([even, odd], axis=0).reshape(2, 6 * cin, cout)
    w_packed = w_packed.astype(compute_dtype)
    k_dim = w_packed.shape[1]

    if row_block is None:
        row_block = _pick_row_block(h_in, w_in, cin, cout, scale, cb, budget)
    th_in = max(1, min(int(row_block), h_in))
    th_out = scale * th_in
    n_tiles = pl.cdiv(h_in, th_in)
    conv_dtype = compute_dtype

    conv, stat_sum, stat_sq = pl.pallas_call(
        functools.partial(_conv_stats_kernel, scale=scale, h_in=h_in,
                          compute_dtype=compute_dtype),
        grid_spec=pltpu.PrefetchScalarGridSpec(
            num_scalar_prefetch=0,
            grid=(n, n_tiles),
            in_specs=[
                # this tile's raw input rows (no W upsample/pad in HBM)
                pl.BlockSpec((1, th_in, w_in, cin), lambda b, i: (b, i, 0, 0)),
                # 1-row top halo (clamped; zeroed in-kernel at the boundary)
                pl.BlockSpec((1, 1, w_in, cin),
                             lambda b, i: (b, jnp.maximum(i * th_in - 1, 0), 0, 0)),
                # 1-row bottom halo (clamped; zeroed in-kernel at the boundary)
                pl.BlockSpec((1, 1, w_in, cin),
                             lambda b, i: (b, jnp.minimum((i + 1) * th_in, h_in - 1),
                                           0, 0)),
                # packed conv weights, resident across the grid
                pl.BlockSpec((scale, k_dim, cout), lambda b, i: (0, 0, 0)),
            ],
            out_specs=[
                pl.BlockSpec((1, th_out, w_in, scale * cout),
                             lambda b, i: (b, i, 0, 0)),
                pl.BlockSpec((1, 1, 1, cout), lambda b, i: (b, i, 0, 0)),
                pl.BlockSpec((1, 1, 1, cout), lambda b, i: (b, i, 0, 0)),
            ],
            scratch_shapes=[
                pltpu.VMEM((th_out + 2, w_in + 2, cin), compute_dtype),
                pltpu.VMEM((th_out, w_in, k_dim), compute_dtype),
            ]),
        out_shape=(
            jax.ShapeDtypeStruct((n, h_out, w_in, scale * cout), conv_dtype),
            jax.ShapeDtypeStruct((n, n_tiles, 1, cout), jnp.float32),
            jax.ShapeDtypeStruct((n, n_tiles, 1, cout), jnp.float32),
        ),
        compiler_params=pltpu.CompilerParams(
            dimension_semantics=("parallel", "parallel"),
            vmem_limit_bytes=vmem_limit),
    )(x, x, x, w_packed)

    # Tiny per-channel BN math (train mode: biased variance over (N, H, W)).
    # NOTE: E[x^2]-E[x]^2 in f32; the clamp guards small cancellation residue.
    cnt = jnp.float32(n * h_out * w_out)
    ch_sum = jnp.sum(stat_sum, axis=(0, 1, 2))
    ch_sq = jnp.sum(stat_sq, axis=(0, 1, 2))
    mean = ch_sum / cnt
    var = jnp.maximum(ch_sq / cnt - mean * mean, 0.0)
    s = gamma.astype(jnp.float32) * jax.lax.rsqrt(var + BN_EPS)
    t = beta.astype(jnp.float32) - mean * s

    # Pass 2: lane-dense streaming over (rows, W_out*Cout) slabs with its own
    # (much larger) row block.  The reshapes below are free (dense row-major).
    wcc = w_in * scale * cout
    total_rows = n * h_out
    conv2d = conv.reshape(total_rows, wcc)
    s_row = jnp.tile(s, w_in * scale).reshape(1, wcc)
    t_row = jnp.tile(t, w_in * scale).reshape(1, wcc)

    out_dtype = x_nchw.dtype
    th2 = _pick_pass2_rows(total_rows, wcc, jnp.dtype(conv_dtype).itemsize,
                           jnp.dtype(out_dtype).itemsize, budget)

    out2d = pl.pallas_call(
        _bn_relu_kernel,
        grid_spec=pltpu.PrefetchScalarGridSpec(
            num_scalar_prefetch=0,
            grid=(pl.cdiv(total_rows, th2),),
            in_specs=[
                pl.BlockSpec((th2, wcc), lambda r: (r, 0)),
                pl.BlockSpec((1, wcc), lambda r: (0, 0)),
                pl.BlockSpec((1, wcc), lambda r: (0, 0)),
            ],
            out_specs=pl.BlockSpec((th2, wcc), lambda r: (r, 0))),
        out_shape=jax.ShapeDtypeStruct((total_rows, wcc), out_dtype),
        compiler_params=pltpu.CompilerParams(
            dimension_semantics=("parallel",),
            vmem_limit_bytes=vmem_limit),
    )(conv2d, s_row, t_row)

    out_nhwc = out2d.reshape(n, h_out, w_out, cout)
    # TODO(synk): fuse this transpose into pass 2 / keep NHWC downstream.
    return jnp.transpose(out_nhwc, (0, 3, 1, 2))               # NHWC -> NCHW


def up_conv_reference(x, weight, bias, gamma, beta, same=False):
    """Pure-JAX reference matching PyTorch semantics (train-mode BN, with bias)."""
    if not same:
        x = jnp.repeat(jnp.repeat(x, 2, axis=2), 2, axis=3)
    y = jax.lax.conv_general_dilated(
        x, weight, window_strides=(1, 1), padding=((1, 1), (1, 1)),
        dimension_numbers=("NCHW", "OIHW", "NCHW"))
    y = y + bias.reshape(1, -1, 1, 1)
    mean = jnp.mean(y, axis=(0, 2, 3), keepdims=True)
    var = jnp.mean((y - mean) ** 2, axis=(0, 2, 3), keepdims=True)
    y = (y - mean) * jax.lax.rsqrt(var + BN_EPS)
    y = y * gamma.reshape(1, -1, 1, 1) + beta.reshape(1, -1, 1, 1)
    return jnp.maximum(y, 0.0)


if __name__ == "__main__":
    N, CH_IN, CH_OUT, H, W = 2, 4, 8, 16, 16

    key = jax.random.PRNGKey(0)
    kx, kw_key, kb_key, kg_key = jax.random.split(key, 4)

    x = jax.random.normal(kx, (N, CH_IN, H, W), dtype=jnp.float32)

    fan_in = CH_IN * 3 * 3
    bound = 1.0 / np.sqrt(fan_in)
    weight = jax.random.uniform(kw_key, (CH_OUT, CH_IN, 3, 3),
                                minval=-bound, maxval=bound, dtype=jnp.float32)
    bias = jax.random.uniform(kb_key, (CH_OUT,), minval=-bound, maxval=bound,
                              dtype=jnp.float32)
    gamma = 0.5 + jax.random.uniform(kg_key, (CH_OUT,), dtype=jnp.float32)
    beta = 0.1 * jnp.ones((CH_OUT,), jnp.float32)

    # 1) same=False, exact f32 path, forced ragged multi-tile grid (th_in=6 over
    #    H=16 -> tiles of 6/6/4): exercises halos, OOB-row masking, BN partials.
    out = jax.block_until_ready(
        up_conv_forward(x, weight, bias, gamma, beta, same=False, row_block=6,
                        compute_dtype=jnp.float32))
    ref = jax.block_until_ready(
        up_conv_reference(x, weight, bias, gamma, beta, same=False))
    assert out.shape == (N, CH_OUT, 2 * H, 2 * W), out.shape
    np.testing.assert_allclose(np.asarray(out), np.asarray(ref),
                               rtol=3e-4, atol=3e-4)

    # 2) same=True, exact f32 path, auto-picked row block.
    out_s = jax.block_until_ready(
        up_conv_forward(x, weight, bias, gamma, beta, same=True,
                        compute_dtype=jnp.float32))
    ref_s = jax.block_until_ready(
        up_conv_reference(x, weight, bias, gamma, beta, same=True))
    assert out_s.shape == (N, CH_OUT, H, W), out_s.shape
    np.testing.assert_allclose(np.asarray(out_s), np.asarray(ref_s),
                               rtol=3e-4, atol=3e-4)

    # 3) same=False, default perf path (bf16 MXU + bf16 conv intermediate):
    #    smoke/accuracy check against the f32 reference with loose tolerance.
    out_bf = jax.block_until_ready(
        up_conv_forward(x, weight, bias, gamma, beta, same=False))
    np.testing.assert_allclose(np.asarray(out_bf), np.asarray(ref),
                               rtol=1e-1, atol=1e-1)

    print("KERNEL_OK")
</pallas_src>

<mosaic_0001>
module attributes {stable_mosaic.version = 11 : i64} {
  func.func @_conv_stats_kernel(%arg0: i32, %arg1: i32, %arg2: memref<1x6x16x4xf32, #tpu.memory_space<vmem>>, %arg3: memref<1x1x16x4xf32, #tpu.memory_space<vmem>>, %arg4: memref<1x1x16x4xf32, #tpu.memory_space<vmem>>, %arg5: memref<2x24x8xf32, #tpu.memory_space<vmem>>, %arg6: memref<1x12x16x16xf32, #tpu.memory_space<vmem>>, %arg7: memref<1x1x1x8xf32, #tpu.memory_space<vmem>>, %arg8: memref<1x1x1x8xf32, #tpu.memory_space<vmem>>, %arg9: memref<14x18x4xf32, #tpu.memory_space<vmem>>, %arg10: memref<12x16x24xf32, #tpu.memory_space<vmem>>) attributes {dimension_semantics = [#tpu.dimension_semantics<parallel>, #tpu.dimension_semantics<parallel>], iteration_bounds = array<i64: 2, 3>, scalar_prefetch = 0 : i64, scratch_operands = 2 : i64, tpu.core_type = #tpu.core_type<tc>, window_params = [{transform_indices = @transform_0, window_bounds = array<i64: 1, 6, 16, 4>}, {transform_indices = @transform_1, window_bounds = array<i64: 1, 1, 16, 4>}, {transform_indices = @transform_2, window_bounds = array<i64: 1, 1, 16, 4>}, {pipeline_mode = #tpu.pipeline_mode<synchronous>, transform_indices = @transform_3, window_bounds = array<i64: 2, 24, 8>}, {transform_indices = @transform_4, window_bounds = array<i64: 1, 12, 16, 16>}, {transform_indices = @transform_5, window_bounds = array<i64: 1, 1, 1, 8>}, {transform_indices = @transform_6, window_bounds = array<i64: 1, 1, 1, 8>}]} {
    %cst = arith.constant 0.000000e+00 : f32
    %0 = vector.broadcast %cst : f32 to vector<14x18x4xf32>
    %c0 = arith.constant 0 : index
    %c0_0 = arith.constant 0 : index
    %c0_1 = arith.constant 0 : index
    %1 = vector.load %arg9[%c0, %c0_0, %c0_1] : memref<14x18x4xf32, #tpu.memory_space<vmem>>, vector<14x18x4xf32>
    tpu.vector_store %arg9[%c0, %c0_0, %c0_1], %0 {strides = array<i32>} : memref<14x18x4xf32, #tpu.memory_space<vmem>>, vector<14x18x4xf32>,
    %c0_2 = arith.constant 0 : index
    %c0_3 = arith.constant 0 : index
    %c0_4 = arith.constant 0 : index
    %c0_5 = arith.constant 0 : index
    %2 = vector.load %arg2[%c0_2, %c0_3, %c0_4, %c0_5] : memref<1x6x16x4xf32, #tpu.memory_space<vmem>>, vector<1x6x16x4xf32>
    %3 = vector.shape_cast %2 : vector<1x6x16x4xf32> to vector<6x16x4xf32>
    %c6_i32 = arith.constant 6 : i32
    %4 = arith.muli %arg1, %c6_i32 : i32
    %5 = tpu.iota {dimensions = array<i32: 0>} : vector<6x1x1xi32>
    %6 = vector.broadcast %4 : i32 to vector<6x1x1xi32>
    %7 = arith.addi %6, %5 : vector<6x1x1xi32>
    %c16_i32 = arith.constant 16 : i32
    %8 = vector.broadcast %c16_i32 : i32 to vector<6x1x1xi32>
    %9 = arith.cmpi slt, %7, %8 : vector<6x1x1xi32>
    %cst_6 = arith.constant 0.000000e+00 : f32
    %10 = vector.shape_cast %9 : vector<6x1x1xi1> to vector<6x1x1xi1>
    %11 = vector.broadcast %10 : vector<6x1x1xi1> to vector<6x16x4xi1>
    %12 = vector.broadcast %cst_6 : f32 to vector<6x16x4xf32>
    %13 = arith.select %11, %3, %12 : vector<6x16x4xi1>, vector<6x16x4xf32>
    %14 = vector.shape_cast %13 : vector<6x16x4xf32> to vector<6x1x16x4xf32>
    %15 = vector.broadcast %14 : vector<6x1x16x4xf32> to vector<6x2x16x4xf32>
    %16 = vector.shape_cast %15 : vector<6x2x16x4xf32> to vector<12x16x4xf32>
    %c1 = arith.constant 1 : index
    %c1_7 = arith.constant 1 : index
    %c0_8 = arith.constant 0 : index
    %17 = vector.load %arg9[%c1, %c1_7, %c0_8] : memref<14x18x4xf32, #tpu.memory_space<vmem>>, vector<12x16x4xf32>
    tpu.vector_store %arg9[%c1, %c1_7, %c0_8], %16 {strides = array<i32>} : memref<14x18x4xf32, #tpu.memory_space<vmem>>, vector<12x16x4xf32>,
    %c0_i32 = arith.constant 0 : i32
    %18 = arith.cmpi sgt, %arg1, %c0_i32 : i32
    %19 = arith.extui %18 : i1 to i32
    %c0_i32_9 = arith.constant 0 : i32
    %20 = arith.cmpi ne, %19, %c0_i32_9 : i32
    scf.if %20 {
      %c0_121 = arith.constant 0 : index
      %c0_122 = arith.constant 0 : index
      %c0_123 = arith.constant 0 : index
      %c0_124 = arith.constant 0 : index
      %104 = vector.load %arg3[%c0_121, %c0_122, %c0_123, %c0_124] : memref<1x1x16x4xf32, #tpu.memory_space<vmem>>, vector<1x1x16x4xf32>
      %105 = vector.shape_cast %104 : vector<1x1x16x4xf32> to vector<1x16x4xf32>
      %c0_125 = arith.constant 0 : index
      %c1_126 = arith.constant 1 : index
      %c0_127 = arith.constant 0 : index
      %106 = vector.load %arg9[%c0_125, %c1_126, %c0_127] : memref<14x18x4xf32, #tpu.memory_space<vmem>>, vector<1x16x4xf32>
      tpu.vector_store %arg9[%c0_125, %c1_126, %c0_127], %105 {strides = array<i32>} : memref<14x18x4xf32, #tpu.memory_space<vmem>>, vector<1x16x4xf32>,
    } else {
    }
    %c1_i32 = arith.constant 1 : i32
    %21 = arith.addi %arg1, %c1_i32 : i32
    %c6_i32_10 = arith.constant 6 : i32
    %22 = arith.muli %21, %c6_i32_10 : i32
    %c16_i32_11 = arith.constant 16 : i32
    %23 = arith.cmpi slt, %22, %c16_i32_11 : i32
    %24 = arith.extui %23 : i1 to i32
    %c0_i32_12 = arith.constant 0 : i32
    %25 = arith.cmpi ne, %24, %c0_i32_12 : i32
    scf.if %25 {
      %c0_121 = arith.constant 0 : index
      %c0_122 = arith.constant 0 : index
      %c0_123 = arith.constant 0 : index
      %c0_124 = arith.constant 0 : index
      %104 = vector.load %arg4[%c0_121, %c0_122, %c0_123, %c0_124] : memref<1x1x16x4xf32, #tpu.memory_space<vmem>>, vector<1x1x16x4xf32>
      %105 = vector.shape_cast %104 : vector<1x1x16x4xf32> to vector<1x16x4xf32>
      %c13 = arith.constant 13 : index
      %c1_125 = arith.constant 1 : index
      %c0_126 = arith.constant 0 : index
      %106 = vector.load %arg9[%c13, %c1_125, %c0_126] : memref<14x18x4xf32, #tpu.memory_space<vmem>>, vector<1x16x4xf32>
      tpu.vector_store %arg9[%c13, %c1_125, %c0_126], %105 {strides = array<i32>} : memref<14x18x4xf32, #tpu.memory_space<vmem>>, vector<1x16x4xf32>,
    } else {
    }
    %c6_i32_13 = arith.constant 6 : i32
    %26 = arith.muli %arg1, %c6_i32_13 : i32
    %c16_i32_14 = arith.constant 16 : i32
    %27 = arith.subi %c16_i32_14, %26 : i32
    %c6_i32_15 = arith.constant 6 : i32
    %28 = arith.minsi %27, %c6_i32_15 : i32
    %c2_i32 = arith.constant 2 : i32
    %29 = arith.muli %c2_i32, %28 : i32
    %c16_i32_16 = arith.constant 16 : i32
    %30 = arith.muli %29, %c16_i32_16 : i32
    %31 = tpu.iota {dimensions = array<i32: 0>} : vector<192x1xi32>
    %32 = vector.broadcast %30 : i32 to vector<192x1xi32>
    %33 = arith.cmpi slt, %31, %32 : vector<192x1xi32>
    %cst_17 = arith.constant 0.000000e+00 : f32
    %34 = vector.broadcast %cst_17 : f32 to vector<1x8xf32>
    %cst_18 = arith.constant 0.000000e+00 : f32
    %35 = vector.broadcast %cst_18 : f32 to vector<1x8xf32>
    %c0_19 = arith.constant 0 : index
    %c0_20 = arith.constant 0 : index
    %c0_21 = arith.constant 0 : index
    %36 = vector.load %arg9[%c0_19, %c0_20, %c0_21] : memref<14x18x4xf32, #tpu.memory_space<vmem>>, vector<12x16x4xf32>
    %c0_22 = arith.constant 0 : index
    %c0_23 = arith.constant 0 : index
    %c0_24 = arith.constant 0 : index
    %37 = vector.load %arg10[%c0_22, %c0_23, %c0_24] : memref<12x16x24xf32, #tpu.memory_space<vmem>>, vector<12x16x4xf32>
    tpu.vector_store %arg10[%c0_22, %c0_23, %c0_24], %36 {strides = array<i32>} : memref<12x16x24xf32, #tpu.memory_space<vmem>>, vector<12x16x4xf32>,
    %c0_25 = arith.constant 0 : index
    %c1_26 = arith.constant 1 : index
    %c0_27 = arith.constant 0 : index
    %38 = vector.load %arg9[%c0_25, %c1_26, %c0_27] : memref<14x18x4xf32, #tpu.memory_space<vmem>>, vector<12x16x4xf32>
    %c0_28 = arith.constant 0 : index
    %c0_29 = arith.constant 0 : index
    %c4 = arith.constant 4 : index
    %39 = vector.load %arg10[%c0_28, %c0_29, %c4] : memref<12x16x24xf32, #tpu.memory_space<vmem>>, vector<12x16x4xf32>
    tpu.vector_store %arg10[%c0_28, %c0_29, %c4], %38 {strides = array<i32>} : memref<12x16x24xf32, #tpu.memory_space<vmem>>, vector<12x16x4xf32>,
    %c1_30 = arith.constant 1 : index
    %c0_31 = arith.constant 0 : index
    %c0_32 = arith.constant 0 : index
    %40 = vector.load %arg9[%c1_30, %c0_31, %c0_32] : memref<14x18x4xf32, #tpu.memory_space<vmem>>, vector<12x16x4xf32>
    %c0_33 = arith.constant 0 : index
    %c0_34 = arith.constant 0 : index
    %c8 = arith.constant 8 : index
    %41 = vector.load %arg10[%c0_33, %c0_34, %c8] : memref<12x16x24xf32, #tpu.memory_space<vmem>>, vector<12x16x4xf32>
    tpu.vector_store %arg10[%c0_33, %c0_34, %c8], %40 {strides = array<i32>} : memref<12x16x24xf32, #tpu.memory_space<vmem>>, vector<12x16x4xf32>,
    %c1_35 = arith.constant 1 : index
    %c1_36 = arith.constant 1 : index
    %c0_37 = arith.constant 0 : index
    %42 = vector.load %arg9[%c1_35, %c1_36, %c0_37] : memref<14x18x4xf32, #tpu.memory_space<vmem>>, vector<12x16x4xf32>
    %c0_38 = arith.constant 0 : index
    %c0_39 = arith.constant 0 : index
    %c12 = arith.constant 12 : index
    %43 = vector.load %arg10[%c0_38, %c0_39, %c12] : memref<12x16x24xf32, #tpu.memory_space<vmem>>, vector<12x16x4xf32>
    tpu.vector_store %arg10[%c0_38, %c0_39, %c12], %42 {strides = array<i32>} : memref<12x16x24xf32, #tpu.memory_space<vmem>>, vector<12x16x4xf32>,
    %c2 = arith.constant 2 : index
    %c0_40 = arith.constant 0 : index
    %c0_41 = arith.constant 0 : index
    %44 = vector.load %arg9[%c2, %c0_40, %c0_41] : memref<14x18x4xf32, #tpu.memory_space<vmem>>, vector<12x16x4xf32>
    %c0_42 = arith.constant 0 : index
    %c0_43 = arith.constant 0 : index
    %c16 = arith.constant 16 : index
    %45 = vector.load %arg10[%c0_42, %c0_43, %c16] : memref<12x16x24xf32, #tpu.memory_space<vmem>>, vector<12x16x4xf32>
    tpu.vector_store %arg10[%c0_42, %c0_43, %c16], %44 {strides = array<i32>} : memref<12x16x24xf32, #tpu.memory_space<vmem>>, vector<12x16x4xf32>,
    %c2_44 = arith.constant 2 : index
    %c1_45 = arith.constant 1 : index
    %c0_46 = arith.constant 0 : index
    %46 = vector.load %arg9[%c2_44, %c1_45, %c0_46] : memref<14x18x4xf32, #tpu.memory_space<vmem>>, vector<12x16x4xf32>
    %c0_47 = arith.constant 0 : index
    %c0_48 = arith.constant 0 : index
    %c20 = arith.constant 20 : index
    %47 = vector.load %arg10[%c0_47, %c0_48, %c20] : memref<12x16x24xf32, #tpu.memory_space<vmem>>, vector<12x16x4xf32>
    tpu.vector_store %arg10[%c0_47, %c0_48, %c20], %46 {strides = array<i32>} : memref<12x16x24xf32, #tpu.memory_space<vmem>>, vector<12x16x4xf32>,
    %c0_49 = arith.constant 0 : index
    %c0_50 = arith.constant 0 : index
    %c0_51 = arith.constant 0 : index
    %48 = vector.load %arg10[%c0_49, %c0_50, %c0_51] : memref<12x16x24xf32, #tpu.memory_space<vmem>>, vector<12x16x24xf32>
    %49 = vector.shape_cast %48 : vector<12x16x24xf32> to vector<192x24xf32>
    %c0_52 = arith.constant 0 : index
    %c0_53 = arith.constant 0 : index
    %c0_54 = arith.constant 0 : index
    %50 = vector.load %arg5[%c0_52, %c0_53, %c0_54] : memref<2x24x8xf32, #tpu.memory_space<vmem>>, vector<1x24x8xf32>
    %51 = vector.shape_cast %50 : vector<1x24x8xf32> to vector<24x8xf32>
    %cst_55 = arith.constant dense<0.000000e+00> : vector<192x8xf32>
    %52 = tpu.matmul %49, %51, %cst_55 {dimension_numbers = #tpu.dot_dimension_numbers<[1], [0], [0], [1], [0, 0, 1, 1], [], []>} : vector<192x24xf32>, vector<24x8xf32>, vector<192x8xf32> -> vector<192x8xf32>
    %53 = vector.shape_cast %52 : vector<192x8xf32> to vector<12x16x8xf32>
    %c0_56 = arith.constant 0 : index
    %c0_57 = arith.constant 0 : index
    %c0_58 = arith.constant 0 : index
    %c0_59 = arith.constant 0 : index
    %54 = vector.load %arg6[%c0_56, %c0_57, %c0_58, %c0_59] : memref<1x12x16x16xf32, #tpu.memory_space<vmem>>, vector<1x12x16x8xf32>
    %55 = vector.shape_cast %54 : vector<1x12x16x8xf32> to vector<12x16x8xf32>
    %56 = vector.shape_cast %53 : vector<12x16x8xf32> to vector<1x12x16x8xf32>
    tpu.vector_store %arg6[%c0_56, %c0_57, %c0_58, %c0_59], %56 {strides = array<i32>} : memref<1x12x16x16xf32, #tpu.memory_space<vmem>>, vector<1x12x16x8xf32>,
    %cst_60 = arith.constant 0.000000e+00 : f32
    %57 = vector.shape_cast %33 : vector<192x1xi1> to vector<192x1xi1>
    %58 = vector.broadcast %57 : vector<192x1xi1> to vector<192x8xi1>
    %59 = vector.broadcast %cst_60 : f32 to vector<192x8xf32>
    %60 = arith.select %58, %52, %59 : vector<192x8xi1>, vector<192x8xf32>
    %cst_61 = arith.constant dense<0.000000e+00> : vector<8xf32>
    %61 = vector.multi_reduction <add>, %60, %cst_61 [0] : vector<192x8xf32> to vector<8xf32>
    %62 = vector.shape_cast %61 : vector<8xf32> to vector<1x8xf32>
    %63 = arith.addf %34, %62 : vector<1x8xf32>
    %64 = arith.mulf %60, %60 : vector<192x8xf32>
    %cst_62 = arith.constant dense<0.000000e+00> : vector<8xf32>
    %65 = vector.multi_reduction <add>, %64, %cst_62 [0] : vector<192x8xf32> to vector<8xf32>
    %66 = vector.shape_cast %65 : vector<8xf32> to vector<1x8xf32>
    %67 = arith.addf %35, %66 : vector<1x8xf32>
    %c0_63 = arith.constant 0 : index
    %c1_64 = arith.constant 1 : index
    %c0_65 = arith.constant 0 : index
    %68 = vector.load %arg9[%c0_63, %c1_64, %c0_65] : memref<14x18x4xf32, #tpu.memory_space<vmem>>, vector<12x16x4xf32>
    %c0_66 = arith.constant 0 : index
    %c0_67 = arith.constant 0 : index
    %c0_68 = arith.constant 0 : index
    %69 = vector.load %arg10[%c0_66, %c0_67, %c0_68] : memref<12x16x24xf32, #tpu.memory_space<vmem>>, vector<12x16x4xf32>
    tpu.vector_store %arg10[%c0_66, %c0_67, %c0_68], %68 {strides = array<i32>} : memref<12x16x24xf32, #tpu.memory_space<vmem>>, vector<12x16x4xf32>,
    %c0_69 = arith.constant 0 : index
    %c2_70 = arith.constant 2 : index
    %c0_71 = arith.constant 0 : index
    %70 = vector.load %arg9[%c0_69, %c2_70, %c0_71] : memref<14x18x4xf32, #tpu.memory_space<vmem>>, vector<12x16x4xf32>
    %c0_72 = arith.constant 0 : index
    %c0_73 = arith.constant 0 : index
    %c4_74 = arith.constant 4 : index
    %71 = vector.load %arg10[%c0_72, %c0_73, %c4_74] : memref<12x16x24xf32, #tpu.memory_space<vmem>>, vector<12x16x4xf32>
    tpu.vector_store %arg10[%c0_72, %c0_73, %c4_74], %70 {strides = array<i32>} : memref<12x16x24xf32, #tpu.memory_space<vmem>>, vector<12x16x4xf32>,
    %c1_75 = arith.constant 1 : index
    %c1_76 = arith.constant 1 : index
    %c0_77 = arith.constant 0 : index
    %72 = vector.load %arg9[%c1_75, %c1_76, %c0_77] : memref<14x18x4xf32, #tpu.memory_space<vmem>>, vector<12x16x4xf32>
    %c0_78 = arith.constant 0 : index
    %c0_79 = arith.constant 0 : index
    %c8_80 = arith.constant 8 : index
    %73 = vector.load %arg10[%c0_78, %c0_79, %c8_80] : memref<12x16x24xf32, #tpu.memory_space<vmem>>, vector<12x16x4xf32>
    tpu.vector_store %arg10[%c0_78, %c0_79, %c8_80], %72 {strides = array<i32>} : memref<12x16x24xf32, #tpu.memory_space<vmem>>, vector<12x16x4xf32>,
    %c1_81 = arith.constant 1 : index
    %c2_82 = arith.constant 2 : index
    %c0_83 = arith.constant 0 : index
    %74 = vector.load %arg9[%c1_81, %c2_82, %c0_83] : memref<14x18x4xf32, #tpu.memory_space<vmem>>, vector<12x16x4xf32>
    %c0_84 = arith.constant 0 : index
    %c0_85 = arith.constant 0 : index
    %c12_86 = arith.constant 12 : index
    %75 = vector.load %arg10[%c0_84, %c0_85, %c12_86] : memref<12x16x24xf32, #tpu.memory_space<vmem>>, vector<12x16x4xf32>
    tpu.vector_store %arg10[%c0_84, %c0_85, %c12_86], %74 {strides = array<i32>} : memref<12x16x24xf32, #tpu.memory_space<vmem>>, vector<12x16x4xf32>,
    %c2_87 = arith.constant 2 : index
    %c1_88 = arith.constant 1 : index
    %c0_89 = arith.constant 0 : index
    %76 = vector.load %arg9[%c2_87, %c1_88, %c0_89] : memref<14x18x4xf32, #tpu.memory_space<vmem>>, vector<12x16x4xf32>
    %c0_90 = arith.constant 0 : index
    %c0_91 = arith.constant 0 : index
    %c16_92 = arith.constant 16 : index
    %77 = vector.load %arg10[%c0_90, %c0_91, %c16_92] : memref<12x16x24xf32, #tpu.memory_space<vmem>>, vector<12x16x4xf32>
    tpu.vector_store %arg10[%c0_90, %c0_91, %c16_92], %76 {strides = array<i32>} : memref<12x16x24xf32, #tpu.memory_space<vmem>>, vector<12x16x4xf32>,
    %c2_93 = arith.constant 2 : index
    %c2_94 = arith.constant 2 : index
    %c0_95 = arith.constant 0 : index
    %78 = vector.load %arg9[%c2_93, %c2_94, %c0_95] : memref<14x18x4xf32, #tpu.memory_space<vmem>>, vector<12x16x4xf32>
    %c0_96 = arith.constant 0 : index
    %c0_97 = arith.constant 0 : index
    %c20_98 = arith.constant 20 : index
    %79 = vector.load %arg10[%c0_96, %c0_97, %c20_98] : memref<12x16x24xf32, #tpu.memory_space<vmem>>, vector<12x16x4xf32>
    tpu.vector_store %arg10[%c0_96, %c0_97, %c20_98], %78 {strides = array<i32>} : memref<12x16x24xf32, #tpu.memory_space<vmem>>, vector<12x16x4xf32>,
    %c0_99 = arith.constant 0 : index
    %c0_100 = arith.constant 0 : index
    %c0_101 = arith.constant 0 : index
    %80 = vector.load %arg10[%c0_99, %c0_100, %c0_101] : memref<12x16x24xf32, #tpu.memory_space<vmem>>, vector<12x16x24xf32>
    %81 = vector.shape_cast %80 : vector<12x16x24xf32> to vector<192x24xf32>
    %c1_102 = arith.constant 1 : index
    %c0_103 = arith.constant 0 : index
    %c0_104 = arith.constant 0 : index
    %82 = vector.load %arg5[%c1_102, %c0_103, %c0_104] : memref<2x24x8xf32, #tpu.memory_space<vmem>>, vector<1x24x8xf32>
    %83 = vector.shape_cast %82 : vector<1x24x8xf32> to vector<24x8xf32>
    %cst_105 = arith.constant dense<0.000000e+00> : vector<192x8xf32>
    %84 = tpu.matmul %81, %83, %cst_105 {dimension_numbers = #tpu.dot_dimension_numbers<[1], [0], [0], [1], [0, 0, 1, 1], [], []>} : vector<192x24xf32>, vector<24x8xf32>, vector<192x8xf32> -> vector<192x8xf32>
    %85 = vector.shape_cast %84 : vector<192x8xf32> to vector<12x16x8xf32>
    %c0_106 = arith.constant 0 : index
    %c0_107 = arith.constant 0 : index
    %c0_108 = arith.constant 0 : index
    %c8_109 = arith.constant 8 : index
    %86 = vector.load %arg6[%c0_106, %c0_107, %c0_108, %c8_109] : memref<1x12x16x16xf32, #tpu.memory_space<vmem>>, vector<1x12x16x8xf32>
    %87 = vector.shape_cast %86 : vector<1x12x16x8xf32> to vector<12x16x8xf32>
    %88 = vector.shape_cast %85 : vector<12x16x8xf32> to vector<1x12x16x8xf32>
    tpu.vector_store %arg6[%c0_106, %c0_107, %c0_108, %c8_109], %88 {strides = array<i32>} : memref<1x12x16x16xf32, #tpu.memory_space<vmem>>, vector<1x12x16x8xf32>,
    %cst_110 = arith.constant 0.000000e+00 : f32
    %89 = vector.shape_cast %33 : vector<192x1xi1> to vector<192x1xi1>
    %90 = vector.broadcast %89 : vector<192x1xi1> to vector<192x8xi1>
    %91 = vector.broadcast %cst_110 : f32 to vector<192x8xf32>
    %92 = arith.select %90, %84, %91 : vector<192x8xi1>, vector<192x8xf32>
    %cst_111 = arith.constant dense<0.000000e+00> : vector<8xf32>
    %93 = vector.multi_reduction <add>, %92, %cst_111 [0] : vector<192x8xf32> to vector<8xf32>
    %94 = vector.shape_cast %93 : vector<8xf32> to vector<1x8xf32>
    %95 = arith.addf %63, %94 : vector<1x8xf32>
    %96 = arith.mulf %92, %92 : vector<192x8xf32>
    %cst_112 = arith.constant dense<0.000000e+00> : vector<8xf32>
    %97 = vector.multi_reduction <add>, %96, %cst_112 [0] : vector<192x8xf32> to vector<8xf32>
    %98 = vector.shape_cast %97 : vector<8xf32> to vector<1x8xf32>
    %99 = arith.addf %67, %98 : vector<1x8xf32>
    %100 = vector.shape_cast %95 : vector<1x8xf32> to vector<1x1x1x8xf32>
    %c0_113 = arith.constant 0 : index
    %c0_114 = arith.constant 0 : index
    %c0_115 = arith.constant 0 : index
    %c0_116 = arith.constant 0 : index
    %101 = vector.load %arg7[%c0_113, %c0_114, %c0_115, %c0_116] : memref<1x1x1x8xf32, #tpu.memory_space<vmem>>, vector<1x1x1x8xf32>
    tpu.vector_store %arg7[%c0_113, %c0_114, %c0_115, %c0_116], %100 {strides = array<i32>} : memref<1x1x1x8xf32, #tpu.memory_space<vmem>>, vector<1x1x1x8xf32>,
    %102 = vector.shape_cast %99 : vector<1x8xf32> to vector<1x1x1x8xf32>
    %c0_117 = arith.constant 0 : index
    %c0_118 = arith.constant 0 : index
    %c0_119 = arith.constant 0 : index
    %c0_120 = arith.constant 0 : index
    %103 = vector.load %arg8[%c0_117, %c0_118, %c0_119, %c0_120] : memref<1x1x1x8xf32, #tpu.memory_space<vmem>>, vector<1x1x1x8xf32>
    tpu.vector_store %arg8[%c0_117, %c0_118, %c0_119, %c0_120], %102 {strides = array<i32>} : memref<1x1x1x8xf32, #tpu.memory_space<vmem>>, vector<1x1x1x8xf32>,
    return
  }
  func.func @transform_0(%arg0: i32, %arg1: i32) -> (i32, i32, i32, i32) {
    %c0_i32 = arith.constant 0 : i32
    %c0_i32_0 = arith.constant 0 : i32
    %c0_i32_1 = arith.constant 0 : i32
    return %arg0, %arg1, %c0_i32, %c0_i32_0 : i32, i32, i32, i32
  }
  func.func @transform_1(%arg0: i32, %arg1: i32) -> (i32, i32, i32, i32) {
    %c6_i32 = arith.constant 6 : i32
    %0 = arith.muli %arg1, %c6_i32 : i32
    %c1_i32 = arith.constant 1 : i32
    %1 = arith.subi %0, %c1_i32 : i32
    %c0_i32 = arith.constant 0 : i32
    %2 = arith.maxsi %1, %c0_i32 : i32
    %c0_i32_0 = arith.constant 0 : i32
    %c0_i32_1 = arith.constant 0 : i32
    %c0_i32_2 = arith.constant 0 : i32
    return %arg0, %2, %c0_i32_0, %c0_i32_1 : i32, i32, i32, i32
  }
  func.func @transform_2(%arg0: i32, %arg1: i32) -> (i32, i32, i32, i32) {
    %c1_i32 = arith.constant 1 : i32
    %0 = arith.addi %arg1, %c1_i32 : i32
    %c6_i32 = arith.constant 6 : i32
    %1 = arith.muli %0, %c6_i32 : i32
    %c15_i32 = arith.constant 15 : i32
    %2 = arith.minsi %1, %c15_i32 : i32
    %c0_i32 = arith.constant 0 : i32
    %c0_i32_0 = arith.constant 0 : i32
    %c0_i32_1 = arith.constant 0 : i32
    return %arg0, %2, %c0_i32, %c0_i32_0 : i32, i32, i32, i32
  }
  func.func @transform_3(%arg0: i32, %arg1: i32) -> (i32, i32, i32) {
    %c0_i32 = arith.constant 0 : i32
    %c0_i32_0 = arith.constant 0 : i32
    %c0_i32_1 = arith.constant 0 : i32
    %c0_i32_2 = arith.constant 0 : i32
    return %c0_i32, %c0_i32_0, %c0_i32_1 : i32, i32, i32
  }
  func.func @transform_4(%arg0: i32, %arg1: i32) -> (i32, i32, i32, i32) {
    %c0_i32 = arith.constant 0 : i32
    %c0_i32_0 = arith.constant 0 : i32
    %c0_i32_1 = arith.constant 0 : i32
    return %arg0, %arg1, %c0_i32, %c0_i32_0 : i32, i32, i32, i32
  }
  func.func @transform_5(%arg0: i32, %arg1: i32) -> (i32, i32, i32, i32) {
    %c0_i32 = arith.constant 0 : i32
    %c0_i32_0 = arith.constant 0 : i32
    %c0_i32_1 = arith.constant 0 : i32
    return %arg0, %arg1, %c0_i32, %c0_i32_0 : i32, i32, i32, i32
  }
  func.func @transform_6(%arg0: i32, %arg1: i32) -> (i32, i32, i32, i32) {
    %c0_i32 = arith.constant 0 : i32
    %c0_i32_0 = arith.constant 0 : i32
    %c0_i32_1 = arith.constant 0 : i32
    return %arg0, %arg1, %c0_i32, %c0_i32_0 : i32, i32, i32, i32
  }
}

module attributes {stable_mosaic.version = 11 : i64} {
  func.func @_bn_relu_kernel(%arg0: i32, %arg1: memref<64x256xf32, #tpu.memory_space<vmem>>, %arg2: memref<1x256xf32, #tpu.memory_space<vmem>>, %arg3: memref<1x256xf32, #tpu.memory_space<vmem>>, %arg4: memref<64x256xf32, #tpu.memory_space<vmem>>) attributes {dimension_semantics = [#tpu.dimension_semantics<parallel>], iteration_bounds = array<i64: 1>, scalar_prefetch = 0 : i64, scratch_operands = 0 : i64, tpu.core_type = #tpu.core_type<tc>, window_params = [{transform_indices = @transform_0, window_bounds = array<i64: 64, 256>}, {pipeline_mode = #tpu.pipeline_mode<synchronous>, transform_indices = @transform_1, window_bounds = array<i64: 1, 256>}, {pipeline_mode = #tpu.pipeline_mode<synchronous>, transform_indices = @transform_2, window_bounds = array<i64: 1, 256>}, {transform_indices = @transform_3, window_bounds = array<i64: 64, 256>}]} {
    %c0 = arith.constant 0 : index
    %c0_0 = arith.constant 0 : index
    %0 = vector.load %arg1[%c0, %c0_0] : memref<64x256xf32, #tpu.memory_space<vmem>>, vector<64x256xf32>
    %c0_1 = arith.constant 0 : index
    %c0_2 = arith.constant 0 : index
    %1 = vector.load %arg2[%c0_1, %c0_2] : memref<1x256xf32, #tpu.memory_space<vmem>>, vector<1x256xf32>
    %2 = vector.broadcast %1 : vector<1x256xf32> to vector<64x256xf32>
    %3 = arith.mulf %0, %2 : vector<64x256xf32>
    %c0_3 = arith.constant 0 : index
    %c0_4 = arith.constant 0 : index
    %4 = vector.load %arg3[%c0_3, %c0_4] : memref<1x256xf32, #tpu.memory_space<vmem>>, vector<1x256xf32>
    %5 = vector.broadcast %4 : vector<1x256xf32> to vector<64x256xf32>
    %6 = arith.addf %3, %5 : vector<64x256xf32>
    %cst = arith.constant 0.000000e+00 : f32
    %7 = vector.broadcast %cst : f32 to vector<64x256xf32>
    %8 = arith.maximumf %6, %7 : vector<64x256xf32>
    %c0_5 = arith.constant 0 : index
    %c0_6 = arith.constant 0 : index
    %9 = vector.load %arg4[%c0_5, %c0_6] : memref<64x256xf32, #tpu.memory_space<vmem>>, vector<64x256xf32>
    tpu.vector_store %arg4[%c0_5, %c0_6], %8 {strides = array<i32>} : memref<64x256xf32, #tpu.memory_space<vmem>>, vector<64x256xf32>,
    return
  }
  func.func @transform_0(%arg0: i32) -> (i32, i32) {
    %c0_i32 = arith.constant 0 : i32
    %c0_i32_0 = arith.constant 0 : i32
    return %arg0, %c0_i32 : i32, i32
  }
  func.func @transform_1(%arg0: i32) -> (i32, i32) {
    %c0_i32 = arith.constant 0 : i32
    %c0_i32_0 = arith.constant 0 : i32
    %c0_i32_1 = arith.constant 0 : i32
    return %c0_i32, %c0_i32_0 : i32, i32
  }
  func.func @transform_2(%arg0: i32) -> (i32, i32) {
    %c0_i32 = arith.constant 0 : i32
    %c0_i32_0 = arith.constant 0 : i32
    %c0_i32_1 = arith.constant 0 : i32
    return %c0_i32, %c0_i32_0 : i32, i32
  }
  func.func @transform_3(%arg0: i32) -> (i32, i32) {
    %c0_i32 = arith.constant 0 : i32
    %c0_i32_0 = arith.constant 0 : i32
    return %arg0, %c0_i32 : i32, i32
  }
}

</mosaic_0001>

<llo_original>
// kernel: tile.19
$region0: #{tile.19}
  %s0 = inlined_call_operand.vmem [shape: f32[32,8], index: 0, kind: input, shape index: {}]
  %s1 = inlined_call_operand.vmem [shape: f32[1,256], index: 1, kind: output, shape index: {}]
  $region1: #{tile.19} parent=0
    #allocation0 [shape = 'u8[8192]{0}', space=vmem, size = 0x2000, scoped, tag = 'scoped mem for output reshape']
    %s2 = smov 3
    %v3 = vld [vmem:[%s0] ss:$16 sm:%s2]
    %vm4 = vcmask 64512
    %5 = vst.msk [vmem:[#allocation0] ss:$8 sm:$0x3] %vm4, %v3
    %s6 = scalar_lea.vmem %s0, 15
    %s7 = smov 3
    %v8 = vld [vmem:[%s6] ss:$16 sm:%s7]
    %9 = vrot.lane.b32.xlu0 %v8, 120
    %v10 = vpop.permute.xlu0 %9
    %vm11 = vcmask 1048512
    %12 = vst.msk [vmem:[#allocation0] ss:$8 sm:$0x3] %vm11, %v10
    %s13 = scalar_lea.vmem %s0, 14
    %s14 = smov 3
    %v15 = vld [vmem:[%s13] ss:$16 sm:%s14]
    %16 = vrot.lane.b32.xlu0 %v15, 112
    %v17 = vpop.permute.xlu0 %16
    %vm18 = vcmask 982912
    %19 = vst.msk [vmem:[#allocation0] ss:$8 sm:$0x3] %vm18, %v17
    %s20 = scalar_lea.vmem %s0, 13
    %s21 = smov 3
    %v22 = vld [vmem:[%s20] ss:$16 sm:%s21]
    %23 = vrot.lane.b32.xlu0 %v22, 104
    %v24 = vpop.permute.xlu0 %23
    %vm25 = vcmask 917312
    %26 = vst.msk [vmem:[#allocation0] ss:$8 sm:$0x3] %vm25, %v24
    %s27 = scalar_lea.vmem %s0, 12
    %s28 = smov 3
    %v29 = vld [vmem:[%s27] ss:$16 sm:%s28]
    %30 = vrot.lane.b32.xlu0 %v29, 96
    %v31 = vpop.permute.xlu0 %30
    %vm32 = vcmask 851712
    %33 = vst.msk [vmem:[#allocation0] ss:$8 sm:$0x3] %vm32, %v31
    %s34 = scalar_lea.vmem %s0, 11
    %s35 = smov 3
    %v36 = vld [vmem:[%s34] ss:$16 sm:%s35]
    %37 = vrot.lane.b32.xlu0 %v36, 88
    %v38 = vpop.permute.xlu0 %37
    %vm39 = vcmask 786112
    %40 = vst.msk [vmem:[#allocation0] ss:$8 sm:$0x3] %vm39, %v38
    %s41 = scalar_lea.vmem %s0, 10
    %s42 = smov 3
    %v43 = vld [vmem:[%s41] ss:$16 sm:%s42]
    %44 = vrot.lane.b32.xlu0 %v43, 80
    %v45 = vpop.permute.xlu0 %44
    %vm46 = vcmask 720512
    %47 = vst.msk [vmem:[#allocation0] ss:$8 sm:$0x3] %vm46, %v45
    %s48 = scalar_lea.vmem %s0, 9
    %s49 = smov 3
    %v50 = vld [vmem:[%s48] ss:$16 sm:%s49]
    %51 = vrot.lane.b32.xlu0 %v50, 72
    %v52 = vpop.permute.xlu0 %51
    %vm53 = vcmask 654912
    %54 = vst.msk [vmem:[#allocation0] ss:$8 sm:$0x3] %vm53, %v52
    %s55 = scalar_lea.vmem %s0, 8
    %s56 = smov 3
    %v57 = vld [vmem:[%s55] ss:$16 sm:%s56]
    %58 = vrot.lane.b32.xlu0 %v57, 64
    %v59 = vpop.permute.xlu0 %58
    %vm60 = vcmask 589312
    %61 = vst.msk [vmem:[#allocation0] ss:$8 sm:$0x3] %vm60, %v59
    %s62 = scalar_lea.vmem %s0, 7
    %s63 = smov 3
    %v64 = vld [vmem:[%s62] ss:$16 sm:%s63]
    %65 = vrot.lane.b32.xlu0 %v64, 56
    %v66 = vpop.permute.xlu0 %65
    %vm67 = vcmask 523712
    %68 = vst.msk [vmem:[#allocation0] ss:$8 sm:$0x3] %vm67, %v66
    %s69 = scalar_lea.vmem %s0, 6
    %s70 = smov 3
    %v71 = vld [vmem:[%s69] ss:$16 sm:%s70]
    %72 = vrot.lane.b32.xlu0 %v71, 48
    %v73 = vpop.permute.xlu0 %72
    %vm74 = vcmask 458112
    %75 = vst.msk [vmem:[#allocation0] ss:$8 sm:$0x3] %vm74, %v73
    %s76 = scalar_lea.vmem %s0, 5
    %s77 = smov 3
    %v78 = vld [vmem:[%s76] ss:$16 sm:%s77]
    %79 = vrot.lane.b32.xlu0 %v78, 40
    %v80 = vpop.permute.xlu0 %79
    %vm81 = vcmask 392512
    %82 = vst.msk [vmem:[#allocation0] ss:$8 sm:$0x3] %vm81, %v80
    %s83 = scalar_lea.vmem %s0, 4
    %s84 = smov 3
    %v85 = vld [vmem:[%s83] ss:$16 sm:%s84]
    %86 = vrot.lane.b32.xlu0 %v85, 32
    %v87 = vpop.permute.xlu0 %86
    %vm88 = vcmask 326912
    %89 = vst.msk [vmem:[#allocation0] ss:$8 sm:$0x3] %vm88, %v87
    %s90 = scalar_lea.vmem %s0, 3
    %s91 = smov 3
    %v92 = vld [vmem:[%s90] ss:$16 sm:%s91]
    %93 = vrot.lane.b32.xlu0 %v92, 24
    %v94 = vpop.permute.xlu0 %93
    %vm95 = vcmask 261312
    %96 = vst.msk [vmem:[#allocation0] ss:$8 sm:$0x3] %vm95, %v94
    %s97 = scalar_lea.vmem %s0, 2
    %s98 = smov 3
    %v99 = vld [vmem:[%s97] ss:$16 sm:%s98]
    %100 = vrot.lane.b32.xlu0 %v99, 16
    %v101 = vpop.permute.xlu0 %100
    %vm102 = vcmask 195712
    %103 = vst.msk [vmem:[#allocation0] ss:$8 sm:$0x3] %vm102, %v101
    %s104 = scalar_lea.vmem %s0, 1
    %s105 = smov 3
    %v106 = vld [vmem:[%s104] ss:$16 sm:%s105]
    %107 = vrot.lane.b32.xlu0 %v106, 8
    %v108 = vpop.permute.xlu0 %107
    %vm109 = vcmask 130112
    %110 = vst.msk [vmem:[#allocation0] ss:$8 sm:$0x3] %vm109, %v108
    %s112 = sshllo.u32 0, 1
    %v114 = vld [vmem:[#allocation0] sm:%s112]
    %s115 = sshllo.u32 0, 1
    %116 = vst [vmem:[%s1] sm:%s115] %v114
    %s117 = scalar_lea.vmem [#allocation0], 8
    %v118 = vld [vmem:[%s117] sm:%s112]
    %s119 = sshllo.u32 0, 1
    %s120 = scalar_lea.vmem %s1, 1
    %121 = vst [vmem:[%s120] sm:%s119] %v118

// kernel: tile.18
$region0: #{tile.18}
  #allocation0 [shape = 's32[1]{0}', space=sflag, size = 0x4, scoped, tag = 'scoped memory for tile.18']
  %s0 = inlined_call_operand.vmem [shape: f32[8], index: 0, kind: input, shape index: {}]
  %s1 = inlined_call_operand.vmem [shape: f32[32,8], index: 1, kind: output, shape index: {}]
  // Predicated region
  $region2: #{tile.18} parent=0 // pred_check
    _
  $region3: #{tile.18} parent=0 // pred_check_branch
    %3 = sbr.rel (0) target = $region5
  $region4: #{tile.18} parent=0 // pred_region
    _
  $region5: #{tile.18} parent=0 // pred_fallthru
    _
  %v4 = vld [vmem:[%s0] ss:$0 sm:$0xff]
  %5 = vst [vmem:[%s1] sm:$0xff] %v4
  %s6 = scalar_lea.vmem %s1, 8
  %7 = vst [vmem:[%s6] sm:$0xff] %v4
  %s8 = scalar_lea.vmem %s1, 16
  %9 = vst [vmem:[%s8] sm:$0xff] %v4
  %s10 = scalar_lea.vmem %s1, 24
  %11 = vst [vmem:[%s10] sm:$0xff] %v4

// kernel: up_conv_forward.3
$region0: #{up_conv_forward.3}
  #allocation0 [shape = 'u32[]', space=smem, size = 0x4, offset = 0x4, fixed_abs, tag = 'smem constant byte address 0x4 - core index']
  #allocation1 [shape = 'u32[144,128]{1,0:T(1,128)}', space=vmem, size = 0x12000, scoped, tag = 'internal scratch']
  %s0 = inlined_call_operand.vmem [shape: f32[64,256], index: 0, kind: input, shape index: {}]
  %s1 = inlined_call_operand.vmem [shape: f32[1,256], index: 1, kind: input, shape index: {}]
  %s2 = inlined_call_operand.vmem [shape: f32[1,256], index: 2, kind: input, shape index: {}]
  %s3 = inlined_call_operand.vmem [shape: f32[64,256], index: 3, kind: output, shape index: {}]
  %s4 = sld [smem:[#allocation0]]
  $region22: #{up_conv_forward.3} parent=0
    _
  %s6 = ssub.s32 1, %s4
  %s7 = scalar_select 0, %s6, %s4
  // Predicated region
  $region2: #{up_conv_forward.3} parent=0 // pred_check
    _
  $region3: #{up_conv_forward.3} parent=0 // pred_check_branch
    %9 = sbr.rel (0) target = $region5
  $region4: #{up_conv_forward.3} parent=0 // pred_region
    _
  $region5: #{up_conv_forward.3} parent=0 // pred_fallthru
    _
  // Predicated region
  $region6: #{up_conv_forward.3} parent=0 // pred_check
    _
  $region7: #{up_conv_forward.3} parent=0 // pred_check_branch
    %11 = sbr.rel (0) target = $region9
  $region8: #{up_conv_forward.3} parent=0 // pred_region
    _
  $region9: #{up_conv_forward.3} parent=0 // pred_fallthru
    _
  // Predicated region
  $region10: #{up_conv_forward.3} parent=0 // pred_check
    _
  $region11: #{up_conv_forward.3} parent=0 // pred_check_branch
    %13 = sbr.rel (0) target = $region13
  $region12: #{up_conv_forward.3} parent=0 // pred_region
    _
  $region13: #{up_conv_forward.3} parent=0 // pred_fallthru
    _
  %v14 = vld [vmem:[%s0] sm:$0xff]
  %v15 = vld [vmem:[%s0 + $0x8] sm:$0xff]
  %v16 = vld [vmem:[%s0 + $0x10] sm:$0xff]
  %v17 = vld [vmem:[%s0 + $0x18] sm:$0xff]
  %v18 = vld [vmem:[%s0 + $0x20] sm:$0xff]
  %v19 = vld [vmem:[%s0 + $0x28] sm:$0xff]
  %v20 = vld [vmem:[%s0 + $0x30] sm:$0xff]
  %v21 = vld [vmem:[%s0 + $0x38] sm:$0xff]
  %v22 = vld [vmem:[%s0 + $0x40] sm:$0xff]
  %v23 = vld [vmem:[%s0 + $0x48] sm:$0xff]
  %v24 = vld [vmem:[%s0 + $0x50] sm:$0xff]
  %v25 = vld [vmem:[%s0 + $0x58] sm:$0xff]
  %v26 = vld [vmem:[%s0 + $0x60] sm:$0xff]
  %v27 = vld [vmem:[%s0 + $0x68] sm:$0xff]
  %v28 = vld [vmem:[%s0 + $0x70] sm:$0xff]
  %v29 = vld [vmem:[%s0 + $0x78] sm:$0xff]
  %v30 = vld [vmem:[%s1] sm:$0x3]
  %v32 = vlaneseq
  %v33 = vshrl.u32 %v32, 7
  %v34 = vsub.s32 0, %v33
  %v35 = vrot.slane %v30, %v34
  %v36 = vlaneseq
  %v37 = vshrl.u32 %v36, 7
  %v38 = vsub.s32 1, %v37
  %v39 = vrot.slane %v30, %v38
  %v42 = vmul.f32 %v14, %v35
  %v43 = vmul.f32 %v15, %v39
  %v44 = vmul.f32 %v16, %v35
  %v45 = vmul.f32 %v17, %v39
  %v46 = vmul.f32 %v18, %v35
  %v47 = vmul.f32 %v19, %v39
  %v48 = vmul.f32 %v20, %v35
  %v49 = vmul.f32 %v21, %v39
  %v50 = vmul.f32 %v22, %v35
  %v51 = vmul.f32 %v23, %v39
  %v52 = vmul.f32 %v24, %v35
  %v53 = vmul.f32 %v25, %v39
  %v54 = vmul.f32 %v26, %v35
  %v55 = vmul.f32 %v27, %v39
  %v56 = vmul.f32 %v28, %v35
  %v57 = vmul.f32 %v29, %v39
  %v58 = vld [vmem:[%s2] sm:$0x3]
  %v60 = vlaneseq
  %v61 = vshrl.u32 %v60, 7
  %v62 = vsub.s32 0, %v61
  %v63 = vrot.slane %v58, %v62
  %v64 = vlaneseq
  %v65 = vshrl.u32 %v64, 7
  %v66 = vsub.s32 1, %v65
  %v67 = vrot.slane %v58, %v66
  %v70 = vadd.f32 %v42, %v63
  %v71 = vadd.f32 %v43, %v67
  %v72 = vadd.f32 %v44, %v63
  %v73 = vadd.f32 %v45, %v67
  %v74 = vadd.f32 %v46, %v63
  %v75 = vadd.f32 %v47, %v67
  %v76 = vadd.f32 %v48, %v63
  %v77 = vadd.f32 %v49, %v67
  %v78 = vadd.f32 %v50, %v63
  %v79 = vadd.f32 %v51, %v67
  %v80 = vadd.f32 %v52, %v63
  %v81 = vadd.f32 %v53, %v67
  %v82 = vadd.f32 %v54, %v63
  %v83 = vadd.f32 %v55, %v67
  %v84 = vadd.f32 %v56, %v63
  %v85 = vadd.f32 %v57, %v67
  %v86 = vmax.f32 %v70, 0.0
  %v87 = vmax.f32 %v71, 0.0
  %v88 = vmax.f32 %v72, 0.0
  %v89 = vmax.f32 %v73, 0.0
  %v90 = vmax.f32 %v74, 0.0
  %v91 = vmax.f32 %v75, 0.0
  %v92 = vmax.f32 %v76, 0.0
  %v93 = vmax.f32 %v77, 0.0
  %v94 = vmax.f32 %v78, 0.0
  %v95 = vmax.f32 %v79, 0.0
  %v96 = vmax.f32 %v80, 0.0
  %v97 = vmax.f32 %v81, 0.0
  %v98 = vmax.f32 %v82, 0.0
  %v99 = vmax.f32 %v83, 0.0
  %v100 = vmax.f32 %v84, 0.0
  %v101 = vmax.f32 %v85, 0.0
  %102 = vst [vmem:[%s3] sm:$0xff] %v86
  %103 = vst [vmem:[%s3 + $0x8] sm:$0xff] %v87
  %104 = vst [vmem:[%s3 + $0x10] sm:$0xff] %v88
  %105 = vst [vmem:[%s3 + $0x18] sm:$0xff] %v89
  %106 = vst [vmem:[%s3 + $0x20] sm:$0xff] %v90
  %107 = vst [vmem:[%s3 + $0x28] sm:$0xff] %v91
  %108 = vst [vmem:[%s3 + $0x30] sm:$0xff] %v92
  %109 = vst [vmem:[%s3 + $0x38] sm:$0xff] %v93
  %110 = vst [vmem:[%s3 + $0x40] sm:$0xff] %v94
  %111 = vst [vmem:[%s3 + $0x48] sm:$0xff] %v95
  %112 = vst [vmem:[%s3 + $0x50] sm:$0xff] %v96
  %113 = vst [vmem:[%s3 + $0x58] sm:$0xff] %v97
  %114 = vst [vmem:[%s3 + $0x60] sm:$0xff] %v98
  %115 = vst [vmem:[%s3 + $0x68] sm:$0xff] %v99
  %116 = vst [vmem:[%s3 + $0x70] sm:$0xff] %v100
  %117 = vst [vmem:[%s3 + $0x78] sm:$0xff] %v101
  // Predicated region
  $region14: #{up_conv_forward.3} parent=0 // pred_check
    _
  $region15: #{up_conv_forward.3} parent=0 // pred_check_branch
    %119 = sbr.rel (0) target = $region17
  $region16: #{up_conv_forward.3} parent=0 // pred_region
    _
  $region17: #{up_conv_forward.3} parent=0 // pred_fallthru
    _
  // Predicated region
  $region18: #{up_conv_forward.3} parent=0 // pred_check
    _
  $region19: #{up_conv_forward.3} parent=0 // pred_check_branch
    %121 = sbr.rel (0) target = $region21
  $region20: #{up_conv_forward.3} parent=0 // pred_region
    _
  $region21: #{up_conv_forward.3} parent=0 // pred_fallthru
    _

// kernel: up_conv_forward.2
$region0: #{up_conv_forward.2}
  #allocation0 [shape = 'u32[]', space=smem, size = 0x4, offset = 0x4, fixed_abs, tag = 'smem constant byte address 0x4 - core index']
  #allocation1 [shape = 'u32[144,128]{1,0:T(1,128)}', space=vmem, size = 0x12000, scoped, tag = 'internal scratch']
  #allocation2 [shape = 'f32[14,18,4]{2,1,0:T(8,128)}', space=vmem, size = 0x2a000, scoped, tag = 'scratch operand']
  #allocation3 [shape = 'f32[12,16,24]{2,1,0:T(8,128)}', space=vmem, size = 0x18000, scoped, tag = 'scratch operand']
  %s0 = inlined_call_operand.vmem [shape: f32[2,16,16,4], index: 0, kind: input, shape index: {}, may-alias: {0,1,2}]
  %s1 = inlined_call_operand.vmem [shape: f32[2,16,16,4], index: 1, kind: input, shape index: {}, may-alias: {0,1,2}]
  %s2 = inlined_call_operand.vmem [shape: f32[2,16,16,4], index: 2, kind: input, shape index: {}, may-alias: {0,1,2}]
  %s3 = inlined_call_operand.vmem [shape: f32[2,24,8], index: 3, kind: input, shape index: {}]
  %s4 = inlined_call_operand.vmem [shape: f32[2,32,16,16], index: 4, kind: output, shape index: {0}]
  %s5 = inlined_call_operand.vmem [shape: f32[2,3,1,8], index: 5, kind: output, shape index: {1}]
  %s6 = inlined_call_operand.vmem [shape: f32[2,3,1,8], index: 6, kind: output, shape index: {2}]
  %7 = xla_tuple %s4, %s5, %s6
  %s8 = sld [smem:[#allocation0]]
  $region121: #{up_conv_forward.2} parent=0
    _
  %s10 = ssub.s32 1, %s8
  %s11 = scalar_select 0, %s10, %s8
  $region1: #{up_conv_forward.2} parent=0
    #allocation4 [shape = 'u8[196608]{0}', space=vmem, size = 0x30000, scoped, tag = 'output window, operand 0']
    loop: start=0, step=1, limit=8
    $region2: #{up_conv_forward.2} parent=1 // loop_pre_header
      _
    $region3: #{up_conv_forward.2} parent=1 // loop_header
      %s13 = sphi 0, %s17
      %p14 = scmp.ge.s32.totalorder %s13, 8
      %s20 = sphi 0, %s32
      %s21 = sphi 0, %s28
      %s22 = sphi 0, %s20
      %s23 = sphi 0, %s21
      %s24 = sphi 0, %s22
      %s25 = sphi 0, %s23
      %s37 = sphi 0, %s39
      %s40 = sphi 0, %s37
      %s41 = sphi 0, %s40
      %s57 = sphi 0, %s41
      %s73 = sphi 0, %s75
      %s76 = sphi 0, %s73
      %s77 = sphi 0, %s76
      %s93 = sphi 0, %s77
      %s109 = sphi 0, %s111
      %s112 = sphi 0, %s109
      %s113 = sphi 0, %s112
      %s129 = sphi 0, %s113
      %s133 = sphi 0, %s133
      %s135 = sphi 0, %s133
      %s136 = sphi 0, %s135
      %s150 = sphi 0, %s136
      %s158 = sphi 0, %s160
      %s161 = sphi 0, %s158
      %s162 = sphi 0, %s161
      %s178 = sphi 0, %s162
      %s186 = sphi 0, %s188
      %s189 = sphi 0, %s186
      %s190 = sphi 0, %s189
      %s206 = sphi 0, %s190
      %s214 = sphi 0, %s216
      %s217 = sphi 0, %s214
      %s218 = sphi 0, %s217
      %s234 = sphi 0, %s218
    $region4: #{up_conv_forward.2} parent=1 // loop_header_branch
      %16 = sbr.rel (%p14) target = $region8
    $region5: #{up_conv_forward.2} parent=1 // loop_body
      %s18 = ssub.s32 %s13, 1
      %s19 = ssub.s32 %s13, 2
      %s26 = sadd.s32 1, %s21
      %p27 = scmp.ge.s32.totalorder %s26, 3
      %s28 = scalar_select %p27, 0, %s26
      %s29 = sadd.s32 1, %s20
      %s30 = scalar_select %p27, %s29, %s20
      %p31 = scmp.ge.s32.totalorder %s30, 2
      %s32 = scalar_select %p31, 0, %s30
      %s33 = ssub.s32 %s20, %s32
      %s34 = ssub.s32 %s21, %s28
      %s35 = sor.u32 %s33, %s34
      %p36 = scmp.eq.s32.totalorder %s35, 0
      %s38 = sadd.s32 %s37, 1
      %s39 = scalar_select %p36, %s37, %s38
      %p42 = pneg %p36
      %p43 = scmp.eq.s32.totalorder %s13, 5
      %p44 = por %p42, %p43
      %p45 = scmp.ne.s32.totalorder %s37, %s40
      %p46 = scmp.eq.s32.totalorder %s13, 0
      %p47 = por %p45, %p46
      %p48 = scmp.ne.s32.totalorder %s37, %s40
      %p49 = scmp.eq.s32.totalorder %s18, 5
      %p50 = por %p48, %p49
      %p51 = scmp.ne.s32.totalorder %s40, %s41
      %p52 = scmp.eq.s32.totalorder %s18, 0
      %p53 = por %p51, %p52
      %p54 = scmp.ne.s32.totalorder %s40, %s41
      %p55 = scmp.eq.s32.totalorder %s19, 5
      %p56 = por %p54, %p55
      %p58 = scmp.ne.s32.totalorder %s41, %s57
      %p59 = scmp.eq.s32.totalorder %s19, 0
      %p60 = por %p58, %p59
      %s61 = smul.u32 %s21, 6
      %s62 = ssub.s32 %s61, 1
      %p63 = scmp.gt.s32.totalorder %s62, 0
      %s64 = scalar_select %p63, %s62, 0
      %s65 = smul.u32 %s28, 6
      %s66 = ssub.s32 %s65, 1
      %p67 = scmp.gt.s32.totalorder %s66, 0
      %s68 = scalar_select %p67, %s66, 0
      %s69 = ssub.s32 %s20, %s32
      %s70 = ssub.s32 %s64, %s68
      %s71 = sor.u32 %s69, %s70
      %p72 = scmp.eq.s32.totalorder %s71, 0
      %s74 = sadd.s32 %s73, 1
      %s75 = scalar_select %p72, %s73, %s74
      %p78 = pneg %p72
      %p79 = scmp.eq.s32.totalorder %s13, 5
      %p80 = por %p78, %p79
      %p81 = scmp.ne.s32.totalorder %s73, %s76
      %p82 = scmp.eq.s32.totalorder %s13, 0
      %p83 = por %p81, %p82
      %p84 = scmp.ne.s32.totalorder %s73, %s76
      %p85 = scmp.eq.s32.totalorder %s18, 5
      %p86 = por %p84, %p85
      %p87 = scmp.ne.s32.totalorder %s76, %s77
      %p88 = scmp.eq.s32.totalorder %s18, 0
      %p89 = por %p87, %p88
      %p90 = scmp.ne.s32.totalorder %s76, %s77
      %p91 = scmp.eq.s32.totalorder %s19, 5
      %p92 = por %p90, %p91
      %p94 = scmp.ne.s32.totalorder %s77, %s93
      %p95 = scmp.eq.s32.totalorder %s19, 0
      %p96 = por %p94, %p95
      %s97 = sadd.s32 %s21, 1
      %s98 = smul.u32 %s97, 6
      %p99 = scmp.lt.s32.totalorder %s98, 15
      %s100 = scalar_select %p99, %s98, 15
      %s101 = sadd.s32 %s28, 1
      %s102 = smul.u32 %s101, 6
      %p103 = scmp.lt.s32.totalorder %s102, 15
      %s104 = scalar_select %p103, %s102, 15
      %s105 = ssub.s32 %s20, %s32
      %s106 = ssub.s32 %s100, %s104
      %s107 = sor.u32 %s105, %s106
      %p108 = scmp.eq.s32.totalorder %s107, 0
      %s110 = sadd.s32 %s109, 1
      %s111 = scalar_select %p108, %s109, %s110
      %p114 = pneg %p108
      %p115 = scmp.eq.s32.totalorder %s13, 5
      %p116 = por %p114, %p115
      %p117 = scmp.ne.s32.totalorder %s109, %s112
      %p118 = scmp.eq.s32.totalorder %s13, 0
      %p119 = por %p117, %p118
      %p120 = scmp.ne.s32.totalorder %s109, %s112
      %p121 = scmp.eq.s32.totalorder %s18, 5
      %p122 = por %p120, %p121
      %p123 = scmp.ne.s32.totalorder %s112, %s113
      %p124 = scmp.eq.s32.totalorder %s18, 0
      %p125 = por %p123, %p124
      %p126 = scmp.ne.s32.totalorder %s112, %s113
      %p127 = scmp.eq.s32.totalorder %s19, 5
      %p128 = por %p126, %p127
      %p130 = scmp.ne.s32.totalorder %s113, %s129
      %p131 = scmp.eq.s32.totalorder %s19, 0
      %p132 = por %p130, %p131
      %s134 = sadd.s32 %s133, 1
      %p137 = scmp.eq.s32.totalorder %s13, 5
      %p138 = scmp.ne.s32.totalorder %s133, %s135
      %p139 = scmp.eq.s32.totalorder %s13, 0
      %p140 = por %p138, %p139
      %p141 = scmp.ne.s32.totalorder %s133, %s135
      %p142 = scmp.eq.s32.totalorder %s18, 5
      %p143 = por %p141, %p142
      %p144 = scmp.ne.s32.totalorder %s135, %s136
      %p145 = scmp.eq.s32.totalorder %s18, 0
      %p146 = por %p144, %p145
      %p147 = scmp.ne.s32.totalorder %s135, %s136
      %p148 = scmp.eq.s32.totalorder %s19, 5
      %p149 = por %p147, %p148
      %p151 = scmp.ne.s32.totalorder %s136, %s150
      %p152 = scmp.eq.s32.totalorder %s19, 0
      %p153 = por %p151, %p152
      %s154 = ssub.s32 %s20, %s32
      %s155 = ssub.s32 %s21, %s28
      %s156 = sor.u32 %s154, %s155
      %p157 = scmp.eq.s32.totalorder %s156, 0
      %s159 = sadd.s32 %s158, 1
      %s160 = scalar_select %p157, %s158, %s159
      %p163 = pneg %p157
      %p164 = scmp.eq.s32.totalorder %s13, 5
      %p165 = por %p163, %p164
      %p166 = scmp.ne.s32.totalorder %s158, %s161
      %p167 = scmp.eq.s32.totalorder %s13, 0
      %p168 = por %p166, %p167
      %p169 = scmp.ne.s32.totalorder %s158, %s161
      %p170 = scmp.eq.s32.totalorder %s18, 5
      %p171 = por %p169, %p170
      %p172 = scmp.ne.s32.totalorder %s161, %s162
      %p173 = scmp.eq.s32.totalorder %s18, 0
      %p174 = por %p172, %p173
      %p175 = scmp.ne.s32.totalorder %s161, %s162
      %p176 = scmp.eq.s32.totalorder %s19, 5
      %p177 = por %p175, %p176
      %p179 = scmp.ne.s32.totalorder %s162, %s178
      %p180 = scmp.eq.s32.totalorder %s19, 0
      %p181 = por %p179, %p180
      %s182 = ssub.s32 %s20, %s32
      %s183 = ssub.s32 %s21, %s28
      %s184 = sor.u32 %s182, %s183
      %p185 = scmp.eq.s32.totalorder %s184, 0
      %s187 = sadd.s32 %s186, 1
      %s188 = scalar_select %p185, %s186, %s187
      %p191 = pneg %p185
      %p192 = scmp.eq.s32.totalorder %s13, 5
      %p193 = por %p191, %p192
      %p194 = scmp.ne.s32.totalorder %s186, %s189
      %p195 = scmp.eq.s32.totalorder %s13, 0
      %p196 = por %p194, %p195
      %p197 = scmp.ne.s32.totalorder %s186, %s189
      %p198 = scmp.eq.s32.totalorder %s18, 5
      %p199 = por %p197, %p198
      %p200 = scmp.ne.s32.totalorder %s189, %s190
      %p201 = scmp.eq.s32.totalorder %s18, 0
      %p202 = por %p200, %p201
      %p203 = scmp.ne.s32.totalorder %s189, %s190
      %p204 = scmp.eq.s32.totalorder %s19, 5
      %p205 = por %p203, %p204
      %p207 = scmp.ne.s32.totalorder %s190, %s206
      %p208 = scmp.eq.s32.totalorder %s19, 0
      %p209 = por %p207, %p208
      %s210 = ssub.s32 %s20, %s32
      %s211 = ssub.s32 %s21, %s28
      %s212 = sor.u32 %s210, %s211
      %p213 = scmp.eq.s32.totalorder %s212, 0
      %s215 = sadd.s32 %s214, 1
      %s216 = scalar_select %p213, %s214, %s215
      %p219 = pneg %p213
      %p220 = scmp.eq.s32.totalorder %s13, 5
      %p221 = por %p219, %p220
      %p222 = scmp.ne.s32.totalorder %s214, %s217
      %p223 = scmp.eq.s32.totalorder %s13, 0
      %p224 = por %p222, %p223
      %p225 = scmp.ne.s32.totalorder %s214, %s217
      %p226 = scmp.eq.s32.totalorder %s18, 5
      %p227 = por %p225, %p226
      %p228 = scmp.ne.s32.totalorder %s217, %s218
      %p229 = scmp.eq.s32.totalorder %s18, 0
      %p230 = por %p228, %p229
      %p231 = scmp.ne.s32.totalorder %s217, %s218
      %p232 = scmp.eq.s32.totalorder %s19, 5
      %p233 = por %p231, %p232
      %p235 = scmp.ne.s32.totalorder %s218, %s234
      %p236 = scmp.eq.s32.totalorder %s19, 0
      %p237 = por %p235, %p236
      %p238 = scmp.le.s32.totalorder 1, %s13
      %p239 = scmp.lt.s32.totalorder %s13, 7
      %p240 = pnand %p238, %p239
      %p241 = pneg %p240
      // Predicated region
      $region9: #{up_conv_forward.2} parent=5 // pred_check
        _
      $region10: #{up_conv_forward.2} parent=5 // pred_check_branch
        %243 = sbr.rel (%p240) target = $region12
      $region11: #{up_conv_forward.2} parent=5 // pred_region
        %s244 = ssub.s32 %s13, 1
        // Predicated region
        $region13: #{up_conv_forward.2} parent=11 // pred_check
          %p245 = pneg %p146
        $region14: #{up_conv_forward.2} parent=11 // pred_check_branch
          %247 = sbr.rel (%p245) target = $region16
        $region15: #{up_conv_forward.2} parent=11 // pred_region
          _
        $region16: #{up_conv_forward.2} parent=11 // pred_fallthru
          _
      $region12: #{up_conv_forward.2} parent=5 // pred_fallthru
        _
      %p248 = scmp.lt.s32.totalorder %s13, 6
      // Predicated region
      $region17: #{up_conv_forward.2} parent=5 // pred_check
        %p249 = pneg %p248
      $region18: #{up_conv_forward.2} parent=5 // pred_check_branch
        %251 = sbr.rel (%p249) target = $region20
      $region19: #{up_conv_forward.2} parent=5 // pred_region
        // Predicated region
        $region21: #{up_conv_forward.2} parent=19 // pred_check
          %p252 = pneg %p47
        $region22: #{up_conv_forward.2} parent=19 // pred_check_branch
          %254 = sbr.rel (%p252) target = $region24
        $region23: #{up_conv_forward.2} parent=19 // pred_region
          %s255 = smul.u32 6, %s21
          %s256 = ssub.s32 16, %s255
          %p257 = scmp.lt.s32.totalorder %s256, 6
          %s258 = scalar_select %p257, %s256, 6
          %s259 = smul.u32 128, %s258
          %s260 = smul.u32 %s259, 2
          %p261 = scmp.lt.s32.totalorder %s20, 1
          %s262 = scalar_select %p261, %s20, 1
          %p263 = scmp.lt.s32.totalorder %s255, 15
          %s264 = scalar_select %p263, %s255, 15
          %s265 = smul.addr %s264, 2
          %s266 = smul.addr %s262, 32
          %s267 = sadd.s32 %s265, %s266
          %s268 = smul.addr %s267, 8
          %s269 = scalar_lea.vmem %s0, %s268
          %s270 = smul.u32 6, %s21
          %s271 = ssub.s32 16, %s270
          %p272 = scmp.lt.s32.totalorder %s271, 6
          %s273 = scalar_select %p272, %s271, 6
          %s274 = smul.u32 128, %s273
          %s275 = smul.u32 %s274, 2
        $region24: #{up_conv_forward.2} parent=19 // pred_fallthru
          _
        // Predicated region
        $region25: #{up_conv_forward.2} parent=19 // pred_check
          %p276 = pneg %p83
        $region26: #{up_conv_forward.2} parent=19 // pred_check_branch
          %278 = sbr.rel (%p276) target = $region28
        $region27: #{up_conv_forward.2} parent=19 // pred_region
          %s279 = smul.u32 %s21, 6
          %s280 = ssub.s32 %s279, 1
          %p281 = scmp.gt.s32.totalorder %s280, 0
          %s282 = scalar_select %p281, %s280, 0
          %p283 = scmp.lt.s32.totalorder %s20, 1
          %s284 = scalar_select %p283, %s20, 1
          %p285 = scmp.lt.s32.totalorder %s282, 15
          %s286 = scalar_select %p285, %s282, 15
          %s287 = smul.addr %s286, 2
          %s288 = smul.addr %s284, 32
          %s289 = sadd.s32 %s287, %s288
          %s290 = smul.addr %s289, 8
          %s291 = scalar_lea.vmem %s1, %s290
          %s292 = smul.u32 %s21, 6
          %s293 = ssub.s32 %s292, 1
          %p294 = scmp.gt.s32.totalorder %s293, 0
          %s295 = scalar_select %p294, %s293, 0
        $region28: #{up_conv_forward.2} parent=19 // pred_fallthru
          _
        // Predicated region
        $region29: #{up_conv_forward.2} parent=19 // pred_check
          %p296 = pneg %p119
        $region30: #{up_conv_forward.2} parent=19 // pred_check_branch
          %298 = sbr.rel (%p296) target = $region32
        $region31: #{up_conv_forward.2} parent=19 // pred_region
          %s299 = sadd.s32 %s21, 1
          %s300 = smul.u32 %s299, 6
          %p301 = scmp.lt.s32.totalorder %s300, 15
          %s302 = scalar_select %p301, %s300, 15
          %p303 = scmp.lt.s32.totalorder %s20, 1
          %s304 = scalar_select %p303, %s20, 1
          %p305 = scmp.lt.s32.totalorder %s302, 15
          %s306 = scalar_select %p305, %s302, 15
          %s307 = smul.addr %s306, 2
          %s308 = smul.addr %s304, 32
          %s309 = sadd.s32 %s307, %s308
          %s310 = smul.addr %s309, 8
          %s311 = scalar_lea.vmem %s2, %s310
          %s312 = sadd.s32 %s21, 1
          %s313 = smul.u32 %s312, 6
          %p314 = scmp.lt.s32.totalorder %s313, 15
          %s315 = scalar_select %p314, %s313, 15
        $region32: #{up_conv_forward.2} parent=19 // pred_fallthru
          _
      $region20: #{up_conv_forward.2} parent=5 // pred_fallthru
        _
      %p316 = scmp.le.s32.totalorder 1, %s13
      %p317 = scmp.lt.s32.totalorder %s13, 7
      %p318 = pnand %p316, %p317
      %p319 = pneg %p318
      // Predicated region
      $region33: #{up_conv_forward.2} parent=5 // pred_check
        _
      $region34: #{up_conv_forward.2} parent=5 // pred_check_branch
        %321 = sbr.rel (%p318) target = $region36
      $region35: #{up_conv_forward.2} parent=5 // pred_region
        %s322 = ssub.s32 %s13, 1
        %s323 = smul.u32 6, %s23
        %s324 = ssub.s32 16, %s323
        %p325 = scmp.lt.s32.totalorder %s324, 6
        %s326 = scalar_select %p325, %s324, 6
        %s327 = smul.u32 128, %s326
        %s328 = smul.u32 %s327, 2
        %p329 = scmp.lt.s32.totalorder %s22, 1
        %s330 = scalar_select %p329, %s22, 1
        %p331 = scmp.lt.s32.totalorder %s323, 15
        %s332 = scalar_select %p331, %s323, 15
        %s333 = smul.addr %s332, 2
        %s334 = smul.addr %s330, 32
        %s335 = sadd.s32 %s333, %s334
        %s336 = smul.addr %s335, 8
        %s337 = scalar_lea.vmem %s0, %s336
        %p338 = pneg %p53
        %p339 = pneg %p50
        %s340 = smul.u32 %s23, 6
        %s341 = ssub.s32 %s340, 1
        %p342 = scmp.gt.s32.totalorder %s341, 0
        %s343 = scalar_select %p342, %s341, 0
        %p344 = scmp.lt.s32.totalorder %s22, 1
        %s345 = scalar_select %p344, %s22, 1
        %p346 = scmp.lt.s32.totalorder %s343, 15
        %s347 = scalar_select %p346, %s343, 15
        %s348 = smul.addr %s347, 2
        %s349 = smul.addr %s345, 32
        %s350 = sadd.s32 %s348, %s349
        %s351 = smul.addr %s350, 8
        %s352 = scalar_lea.vmem %s1, %s351
        %p353 = pneg %p89
        %p354 = pneg %p86
        %s355 = sadd.s32 %s23, 1
        %s356 = smul.u32 %s355, 6
        %p357 = scmp.lt.s32.totalorder %s356, 15
        %s358 = scalar_select %p357, %s356, 15
        %p359 = scmp.lt.s32.totalorder %s22, 1
        %s360 = scalar_select %p359, %s22, 1
        %p361 = scmp.lt.s32.totalorder %s358, 15
        %s362 = scalar_select %p361, %s358, 15
        %s363 = smul.addr %s362, 2
        %s364 = smul.addr %s360, 32
        %s365 = sadd.s32 %s363, %s364
        %s366 = smul.addr %s365, 8
        %s367 = scalar_lea.vmem %s2, %s366
        %p368 = pneg %p125
        %p369 = pneg %p122
        %p370 = pneg %p146
        %p371 = pneg %p143
        %p372 = pneg %p174
        %p373 = pneg %p171
        %s374 = sand.u32 %s161, 1
        %s375 = sand.u32 %s161, 1
        %s376 = smul.addr %s375, 192
        %s377 = scalar_lea.vmem [#allocation4], %s376
        %p378 = pneg %p202
        %p379 = pneg %p199
        %p380 = scmp.lt.s32.totalorder %s22, 1
        %s381 = scalar_select %p380, %s22, 1
        %p382 = scmp.lt.s32.totalorder %s23, 2
        %s383 = scalar_select %p382, %s23, 2
        %s384 = smul.addr %s381, 3
        %s385 = sadd.s32 %s383, %s384
        %s386 = scalar_lea.vmem %s5, %s385
        %p387 = pneg %p230
        %p388 = pneg %p227
        %p389 = scmp.lt.s32.totalorder %s22, 1
        %s390 = scalar_select %p389, %s22, 1
        %p391 = scmp.lt.s32.totalorder %s23, 2
        %s392 = scalar_select %p391, %s23, 2
        %s393 = smul.addr %s390, 3
        %s394 = sadd.s32 %s392, %s393
        %s395 = scalar_lea.vmem %s6, %s394
        %s396 = smul.u32 6, %s23
        %s397 = ssub.s32 16, %s396
        %p398 = scmp.lt.s32.totalorder %s397, 6
        %s399 = scalar_select %p398, %s397, 6
        %s400 = smul.u32 128, %s399
        %s401 = smul.u32 %s400, 2
        %p402 = scmp.lt.s32.totalorder %s22, 1
        %s403 = scalar_select %p402, %s22, 1
        %p404 = scmp.lt.s32.totalorder %s396, 15
        %s405 = scalar_select %p404, %s396, 15
        %s406 = smul.addr %s405, 2
        %s407 = smul.addr %s403, 32
        %s408 = sadd.s32 %s406, %s407
        %s409 = smul.addr %s408, 8
        %s410 = scalar_lea.vmem %s0, %s409
        %s411 = smul.u32 6, %s23
        %s412 = ssub.s32 16, %s411
        %p413 = scmp.lt.s32.totalorder %s412, 6
        %s414 = scalar_select %p413, %s412, 6
        %s415 = smul.u32 128, %s414
        %s416 = smul.u32 %s415, 2
        %s417 = smul.u32 %s23, 6
        %s418 = ssub.s32 %s417, 1
        %p419 = scmp.gt.s32.totalorder %s418, 0
        %s420 = scalar_select %p419, %s418, 0
        %p421 = scmp.lt.s32.totalorder %s22, 1
        %s422 = scalar_select %p421, %s22, 1
        %p423 = scmp.lt.s32.totalorder %s420, 15
        %s424 = scalar_select %p423, %s420, 15
        %s425 = smul.addr %s424, 2
        %s426 = smul.addr %s422, 32
        %s427 = sadd.s32 %s425, %s426
        %s428 = smul.addr %s427, 8
        %s429 = scalar_lea.vmem %s1, %s428
        %s430 = smul.u32 %s23, 6
        %s431 = ssub.s32 %s430, 1
        %p432 = scmp.gt.s32.totalorder %s431, 0
        %s433 = scalar_select %p432, %s431, 0
        %s434 = sadd.s32 %s23, 1
        %s435 = smul.u32 %s434, 6
        %p436 = scmp.lt.s32.totalorder %s435, 15
        %s437 = scalar_select %p436, %s435, 15
        %p438 = scmp.lt.s32.totalorder %s22, 1
        %s439 = scalar_select %p438, %s22, 1
        %p440 = scmp.lt.s32.totalorder %s437, 15
        %s441 = scalar_select %p440, %s437, 15
        %s442 = smul.addr %s441, 2
        %s443 = smul.addr %s439, 32
        %s444 = sadd.s32 %s442, %s443
        %s445 = smul.addr %s444, 8
        %s446 = scalar_lea.vmem %s2, %s445
        %s447 = sadd.s32 %s23, 1
        %s448 = smul.u32 %s447, 6
        %p449 = scmp.lt.s32.totalorder %s448, 15
        %s450 = scalar_select %p449, %s448, 15
        %s451 = smul.u32 12, %s23
        %s452 = ssub.s32 32, %s451
        %p453 = scmp.lt.s32.totalorder %s452, 12
        %s454 = scalar_select %p453, %s452, 12
        %s455 = smul.u32 128, %s454
        %s456 = smul.u32 %s455, 2
        %p457 = scmp.lt.s32.totalorder %s22, 1
        %s458 = scalar_select %p457, %s22, 1
        %p459 = scmp.lt.s32.totalorder %s23, 2
        %s460 = scalar_select %p459, %s23, 2
        %s461 = smul.addr %s458, 3
        %s462 = sadd.s32 %s460, %s461
        %s463 = scalar_lea.vmem %s5, %s462
        %p464 = scmp.lt.s32.totalorder %s22, 1
        %s465 = scalar_select %p464, %s22, 1
        %p466 = scmp.lt.s32.totalorder %s23, 2
        %s467 = scalar_select %p466, %s23, 2
        %s468 = smul.addr %s465, 3
        %s469 = sadd.s32 %s467, %s468
        %s470 = scalar_lea.vmem %s6, %s469
        %vm471 = vcmask 31744
        %472 = vst.msk [vmem:[#allocation2] sm:$0xff] %vm471, 0.0
        %473 = vst.msk [vmem:[#allocation2 + $0x8] sm:$0xff] %vm471, 0.0
        %vm474 = vcmask 25600
        %475 = vst.msk [vmem:[#allocation2 + $0x10] sm:$0x3] %vm474, 0.0
        %476 = vst.msk [vmem:[#allocation2 + $0x18] sm:$0xff] %vm471, 0.0
        %477 = vst.msk [vmem:[#allocation2 + $0x20] sm:$0xff] %vm471, 0.0
        %478 = vst.msk [vmem:[#allocation2 + $0x28] sm:$0x3] %vm474, 0.0
        %479 = vst.msk [vmem:[#allocation2 + $0x30] sm:$0xff] %vm471, 0.0
        %480 = vst.msk [vmem:[#allocation2 + $0x38] sm:$0xff] %vm471, 0.0
        %481 = vst.msk [vmem:[#allocation2 + $0x40] sm:$0x3] %vm474, 0.0
        %482 = vst.msk [vmem:[#allocation2 + $0x48] sm:$0xff] %vm471, 0.0
        %483 = vst.msk [vmem:[#allocation2 + $0x50] sm:$0xff] %vm471, 0.0
        %484 = vst.msk [vmem:[#allocation2 + $0x58] sm:$0x3] %vm474, 0.0
        %485 = vst.msk [vmem:[#allocation2 + $0x60] sm:$0xff] %vm471, 0.0
        %486 = vst.msk [vmem:[#allocation2 + $0x68] sm:$0xff] %vm471, 0.0
        %487 = vst.msk [vmem:[#allocation2 + $0x70] sm:$0x3] %vm474, 0.0
        %488 = vst.msk [vmem:[#allocation2 + $0x78] sm:$0xff] %vm471, 0.0
        %489 = vst.msk [vmem:[#allocation2 + $0x80] sm:$0xff] %vm471, 0.0
        %490 = vst.msk [vmem:[#allocation2 + $0x88] sm:$0x3] %vm474, 0.0
        %491 = vst.msk [vmem:[#allocation2 + $0x90] sm:$0xff] %vm471, 0.0
        %492 = vst.msk [vmem:[#allocation2 + $0x98] sm:$0xff] %vm471, 0.0
        %493 = vst.msk [vmem:[#allocation2 + $0xa0] sm:$0x3] %vm474, 0.0
        %494 = vst.msk [vmem:[#allocation2 + $0xa8] sm:$0xff] %vm471, 0.0
        %495 = vst.msk [vmem:[#allocation2 + $0xb0] sm:$0xff] %vm471, 0.0
        %496 = vst.msk [vmem:[#allocation2 + $0xb8] sm:$0x3] %vm474, 0.0
        %497 = vst.msk [vmem:[#allocation2 + $0xc0] sm:$0xff] %vm471, 0.0
        %498 = vst.msk [vmem:[#allocation2 + $0xc8] sm:$0xff] %vm471, 0.0
        %499 = vst.msk [vmem:[#allocation2 + $0xd0] sm:$0x3] %vm474, 0.0
        %500 = vst.msk [vmem:[#allocation2 + $0xd8] sm:$0xff] %vm471, 0.0
        %501 = vst.msk [vmem:[#allocation2 + $0xe0] sm:$0xff] %vm471, 0.0
        %502 = vst.msk [vmem:[#allocation2 + $0xe8] sm:$0x3] %vm474, 0.0
        %503 = vst.msk [vmem:[#allocation2 + $0xf0] sm:$0xff] %vm471, 0.0
        %504 = vst.msk [vmem:[#allocation2 + $0xf8] sm:$0xff] %vm471, 0.0
        %505 = vst.msk [vmem:[#allocation2 + $0x100] sm:$0x3] %vm474, 0.0
        %506 = vst.msk [vmem:[#allocation2 + $0x108] sm:$0xff] %vm471, 0.0
        %507 = vst.msk [vmem:[#allocation2 + $0x110] sm:$0xff] %vm471, 0.0
        %508 = vst.msk [vmem:[#allocation2 + $0x118] sm:$0x3] %vm474, 0.0
        %509 = vst.msk [vmem:[#allocation2 + $0x120] sm:$0xff] %vm471, 0.0
        %510 = vst.msk [vmem:[#allocation2 + $0x128] sm:$0xff] %vm471, 0.0
        %511 = vst.msk [vmem:[#allocation2 + $0x130] sm:$0x3] %vm474, 0.0
        %512 = vst.msk [vmem:[#allocation2 + $0x138] sm:$0xff] %vm471, 0.0
        %513 = vst.msk [vmem:[#allocation2 + $0x140] sm:$0xff] %vm471, 0.0
        %514 = vst.msk [vmem:[#allocation2 + $0x148] sm:$0x3] %vm474, 0.0
        %v515 = vld [vmem:[%s410] sm:$0xff]
        %v516 = vld [vmem:[%s410 + $0x8] sm:$0xff]
        %v517 = vld [vmem:[%s410 + $0x10] sm:$0xff]
        %v518 = vld [vmem:[%s410 + $0x18] sm:$0xff]
        %v519 = vld [vmem:[%s410 + $0x20] sm:$0xff]
        %v520 = vld [vmem:[%s410 + $0x28] sm:$0xff]
        %v521 = vld [vmem:[%s410 + $0x30] sm:$0xff]
        %v522 = vld [vmem:[%s410 + $0x38] sm:$0xff]
        %v523 = vld [vmem:[%s410 + $0x40] sm:$0xff]
        %v524 = vld [vmem:[%s410 + $0x48] sm:$0xff]
        %v525 = vld [vmem:[%s410 + $0x50] sm:$0xff]
        %v526 = vld [vmem:[%s410 + $0x58] sm:$0xff]
        %s527 = smul.u32 %s23, 6
        %v528 = vstv %s527
        %v529 = vadd.s32 %v528, 1
        %v530 = vadd.s32 %v528, 2
        %v531 = vadd.s32 %v528, 3
        %v532 = vadd.s32 %v528, 4
        %v533 = vadd.s32 %v528, 5
        %vm534 = vcmp.lt.s32.totalorder %v528, 16
        %vm535 = vcmp.lt.s32.totalorder %v529, 16
        %vm536 = vcmp.lt.s32.totalorder %v530, 16
        %vm537 = vcmp.lt.s32.totalorder %v531, 16
        %vm538 = vcmp.lt.s32.totalorder %v532, 16
        %vm539 = vcmp.lt.s32.totalorder %v533, 16
        %v540 = vsel %vm534, 1, 0
        %v541 = vsel %vm535, 1, 0
        %v542 = vsel %vm536, 1, 0
        %v543 = vsel %vm537, 1, 0
        %v544 = vsel %vm538, 1, 0
        %v545 = vsel %vm539, 1, 0
        %vm546 = vcmp.eq.s32.totalorder %v540, 1
        %vm547 = vcmp.eq.s32.totalorder %v541, 1
        %vm548 = vcmp.eq.s32.totalorder %v542, 1
        %vm549 = vcmp.eq.s32.totalorder %v543, 1
        %vm550 = vcmp.eq.s32.totalorder %v544, 1
        %vm551 = vcmp.eq.s32.totalorder %v545, 1
        %v552 = vsel %vm546, %v515, 0.0
        %v553 = vsel %vm546, %v516, 0.0
        %v554 = vsel %vm547, %v517, 0.0
        %v555 = vsel %vm547, %v518, 0.0
        %v556 = vsel %vm548, %v519, 0.0
        %v557 = vsel %vm548, %v520, 0.0
        %v558 = vsel %vm549, %v521, 0.0
        %v559 = vsel %vm549, %v522, 0.0
        %v560 = vsel %vm550, %v523, 0.0
        %v561 = vsel %vm550, %v524, 0.0
        %v562 = vsel %vm551, %v525, 0.0
        %v563 = vsel %vm551, %v526, 0.0
        %s564 = scalar_lea.vmem [#allocation2], 24
        %565 = vst.msk [vmem:[%s564 + $0x1] sm:$0xff] %vm471, %v552
        %566 = vst.msk [vmem:[%s564 + $0x9] sm:$0xff] %vm471, %v553
        %567 = vst.msk [vmem:[%s564 + $0x19] sm:$0xff] %vm471, %v552
        %568 = vst.msk [vmem:[%s564 + $0x21] sm:$0xff] %vm471, %v553
        %569 = vst.msk [vmem:[%s564 + $0x31] sm:$0xff] %vm471, %v554
        %570 = vst.msk [vmem:[%s564 + $0x39] sm:$0xff] %vm471, %v555
        %571 = vst.msk [vmem:[%s564 + $0x49] sm:$0xff] %vm471, %v554
        %572 = vst.msk [vmem:[%s564 + $0x51] sm:$0xff] %vm471, %v555
        %573 = vst.msk [vmem:[%s564 + $0x61] sm:$0xff] %vm471, %v556
        %574 = vst.msk [vmem:[%s564 + $0x69] sm:$0xff] %vm471, %v557
        %575 = vst.msk [vmem:[%s564 + $0x79] sm:$0xff] %vm471, %v556
        %576 = vst.msk [vmem:[%s564 + $0x81] sm:$0xff] %vm471, %v557
        %577 = vst.msk [vmem:[%s564 + $0x91] sm:$0xff] %vm471, %v558
        %578 = vst.msk [vmem:[%s564 + $0x99] sm:$0xff] %vm471, %v559
        %579 = vst.msk [vmem:[%s564 + $0xa9] sm:$0xff] %vm471, %v558
        %580 = vst.msk [vmem:[%s564 + $0xb1] sm:$0xff] %vm471, %v559
        %581 = vst.msk [vmem:[%s564 + $0xc1] sm:$0xff] %vm471, %v560
        %582 = vst.msk [vmem:[%s564 + $0xc9] sm:$0xff] %vm471, %v561
        %583 = vst.msk [vmem:[%s564 + $0xd9] sm:$0xff] %vm471, %v560
        %584 = vst.msk [vmem:[%s564 + $0xe1] sm:$0xff] %vm471, %v561
        %585 = vst.msk [vmem:[%s564 + $0xf1] sm:$0xff] %vm471, %v562
        %586 = vst.msk [vmem:[%s564 + $0xf9] sm:$0xff] %vm471, %v563
        %587 = vst.msk [vmem:[%s564 + $0x109] sm:$0xff] %vm471, %v562
        %588 = vst.msk [vmem:[%s564 + $0x111] sm:$0xff] %vm471, %v563
        %p589 = scmp.gt.s32.totalorder %s23, 0
        // Predicated region
        $region37: #{up_conv_forward.2} parent=35 // pred_check
          %p590 = pneg %p589
        $region38: #{up_conv_forward.2} parent=35 // pred_check_branch
          %592 = sbr.rel (%p590) target = $region40
        $region39: #{up_conv_forward.2} parent=35 // pred_region
          %v593 = vld [vmem:[%s429] sm:$0xff]
          %v594 = vld [vmem:[%s429 + $0x8] sm:$0xff]
          %595 = vst.msk [vmem:[#allocation2 + $0x1] sm:$0xff] %vm471, %v593
          %596 = vst.msk [vmem:[#allocation2 + $0x9] sm:$0xff] %vm471, %v594
        $region40: #{up_conv_forward.2} parent=35 // pred_fallthru
          _
        %s597 = sadd.s32 %s23, 1
        %s598 = smul.u32 %s597, 6
        %p599 = scmp.lt.s32.totalorder %s598, 16
        // Predicated region
        $region41: #{up_conv_forward.2} parent=35 // pred_check
          %p600 = pneg %p599
        $region42: #{up_conv_forward.2} parent=35 // pred_check_branch
          %602 = sbr.rel (%p600) target = $region44
        $region43: #{up_conv_forward.2} parent=35 // pred_region
          %v603 = vld [vmem:[%s446] sm:$0xff]
          %v604 = vld [vmem:[%s446 + $0x8] sm:$0xff]
          %s605 = scalar_lea.vmem [#allocation2], 312
          %606 = vst.msk [vmem:[%s605 + $0x1] sm:$0xff] %vm471, %v603
          %607 = vst.msk [vmem:[%s605 + $0x9] sm:$0xff] %vm471, %v604
        $region44: #{up_conv_forward.2} parent=35 // pred_fallthru
          _
        %s608 = ssub.s32 16, %s527
        %p609 = scmp.lt.s32.totalorder %s608, 6
        %s610 = scalar_select %p609, %s608, 6
        %s611 = smul.u32 %s610, 32
        %v612 = vlaneseq
        %v613 = vshrl.u32 %v612, 7
        %v614 = vadd.s32 %v613, 8
        %v615 = vadd.s32 %v613, 16
        %v616 = vadd.s32 %v613, 24
        %v617 = vadd.s32 %v613, 32
        %v618 = vadd.s32 %v613, 40
        %v619 = vadd.s32 %v613, 48
        %v620 = vadd.s32 %v613, 56
        %v621 = vadd.s32 %v613, 64
        %v622 = vadd.s32 %v613, 72
        %v623 = vadd.s32 %v613, 80
        %v624 = vadd.s32 %v613, 88
        %v625 = vadd.s32 %v613, 96
        %v626 = vadd.s32 %v613, 104
        %v627 = vadd.s32 %v613, 112
        %v628 = vadd.s32 %v613, 120
        %v629 = vadd.s32 %v613, 128
        %v630 = vadd.s32 %v613, 136
        %v631 = vadd.s32 %v613, 144
        %v632 = vadd.s32 %v613, 152
        %v633 = vadd.s32 %v613, 160
        %v634 = vadd.s32 %v613, 168
        %v635 = vadd.s32 %v613, 176
        %v636 = vadd.s32 %v613, 184
        %v637 = vstv %s611
        %vm638 = vcmp.lt.s32.totalorder %v613, %v637
        %vm639 = vcmp.lt.s32.totalorder %v614, %v637
        %vm640 = vcmp.lt.s32.totalorder %v615, %v637
        %vm641 = vcmp.lt.s32.totalorder %v616, %v637
        %vm642 = vcmp.lt.s32.totalorder %v617, %v637
        %vm643 = vcmp.lt.s32.totalorder %v618, %v637
        %vm644 = vcmp.lt.s32.totalorder %v619, %v637
        %vm645 = vcmp.lt.s32.totalorder %v620, %v637
        %vm646 = vcmp.lt.s32.totalorder %v621, %v637
        %vm647 = vcmp.lt.s32.totalorder %v622, %v637
        %vm648 = vcmp.lt.s32.totalorder %v623, %v637
        %vm649 = vcmp.lt.s32.totalorder %v624, %v637
        %vm650 = vcmp.lt.s32.totalorder %v625, %v637
        %vm651 = vcmp.lt.s32.totalorder %v626, %v637
        %vm652 = vcmp.lt.s32.totalorder %v627, %v637
        %vm653 = vcmp.lt.s32.totalorder %v628, %v637
        %vm654 = vcmp.lt.s32.totalorder %v629, %v637
        %vm655 = vcmp.lt.s32.totalorder %v630, %v637
        %vm656 = vcmp.lt.s32.totalorder %v631, %v637
        %vm657 = vcmp.lt.s32.totalorder %v632, %v637
        %vm658 = vcmp.lt.s32.totalorder %v633, %v637
        %vm659 = vcmp.lt.s32.totalorder %v634, %v637
        %vm660 = vcmp.lt.s32.totalorder %v635, %v637
        %vm661 = vcmp.lt.s32.totalorder %v636, %v637
        %v662 = vld [vmem:[#allocation2] sm:$0xff]
        %v663 = vld [vmem:[#allocation2 + $0x8] sm:$0xff]
        %v664 = vld [vmem:[#allocation2 + $0x18] sm:$0xff]
        %v665 = vld [vmem:[#allocation2 + $0x20] sm:$0xff]
        %v666 = vld [vmem:[#allocation2 + $0x30] sm:$0xff]
        %v667 = vld [vmem:[#allocation2 + $0x38] sm:$0xff]
        %v668 = vld [vmem:[#allocation2 + $0x48] sm:$0xff]
        %v669 = vld [vmem:[#allocation2 + $0x50] sm:$0xff]
        %v670 = vld [vmem:[#allocation2 + $0x60] sm:$0xff]
        %v671 = vld [vmem:[#allocation2 + $0x68] sm:$0xff]
        %v672 = vld [vmem:[#allocation2 + $0x78] sm:$0xff]
        %v673 = vld [vmem:[#allocation2 + $0x80] sm:$0xff]
        %v674 = vld [vmem:[#allocation2 + $0x90] sm:$0xff]
        %v675 = vld [vmem:[#allocation2 + $0x98] sm:$0xff]
        %v676 = vld [vmem:[#allocation2 + $0xa8] sm:$0xff]
        %v677 = vld [vmem:[#allocation2 + $0xb0] sm:$0xff]
        %v678 = vld [vmem:[#allocation2 + $0xc0] sm:$0xff]
        %v679 = vld [vmem:[#allocation2 + $0xc8] sm:$0xff]
        %v680 = vld [vmem:[#allocation2 + $0xd8] sm:$0xff]
        %v681 = vld [vmem:[#allocation2 + $0xe0] sm:$0xff]
        %v682 = vld [vmem:[#allocation2 + $0xf0] sm:$0xff]
        %v683 = vld [vmem:[#allocation2 + $0xf8] sm:$0xff]
        %v684 = vld [vmem:[#allocation2 + $0x108] sm:$0xff]
        %v685 = vld [vmem:[#allocation2 + $0x110] sm:$0xff]
        %686 = vst.msk [vmem:[#allocation3] sm:$0xff] %vm471, %v662
        %687 = vst.msk [vmem:[#allocation3 + $0x8] sm:$0xff] %vm471, %v663
        %688 = vst.msk [vmem:[#allocation3 + $0x10] sm:$0xff] %vm471, %v664
        %689 = vst.msk [vmem:[#allocation3 + $0x18] sm:$0xff] %vm471, %v665
        %690 = vst.msk [vmem:[#allocation3 + $0x20] sm:$0xff] %vm471, %v666
        %691 = vst.msk [vmem:[#allocation3 + $0x28] sm:$0xff] %vm471, %v667
        %692 = vst.msk [vmem:[#allocation3 + $0x30] sm:$0xff] %vm471, %v668
        %693 = vst.msk [vmem:[#allocation3 + $0x38] sm:$0xff] %vm471, %v669
        %694 = vst.msk [vmem:[#allocation3 + $0x40] sm:$0xff] %vm471, %v670
        %695 = vst.msk [vmem:[#allocation3 + $0x48] sm:$0xff] %vm471, %v671
        %696 = vst.msk [vmem:[#allocation3 + $0x50] sm:$0xff] %vm471, %v672
        %697 = vst.msk [vmem:[#allocation3 + $0x58] sm:$0xff] %vm471, %v673
        %698 = vst.msk [vmem:[#allocation3 + $0x60] sm:$0xff] %vm471, %v674
        %699 = vst.msk [vmem:[#allocation3 + $0x68] sm:$0xff] %vm471, %v675
        %700 = vst.msk [vmem:[#allocation3 + $0x70] sm:$0xff] %vm471, %v676
        %701 = vst.msk [vmem:[#allocation3 + $0x78] sm:$0xff] %vm471, %v677
        %702 = vst.msk [vmem:[#allocation3 + $0x80] sm:$0xff] %vm471, %v678
        %703 = vst.msk [vmem:[#allocation3 + $0x88] sm:$0xff] %vm471, %v679
        %704 = vst.msk [vmem:[#allocation3 + $0x90] sm:$0xff] %vm471, %v680
        %705 = vst.msk [vmem:[#allocation3 + $0x98] sm:$0xff] %vm471, %v681
        %706 = vst.msk [vmem:[#allocation3 + $0xa0] sm:$0xff] %vm471, %v682
        %707 = vst.msk [vmem:[#allocation3 + $0xa8] sm:$0xff] %vm471, %v683
        %708 = vst.msk [vmem:[#allocation3 + $0xb0] sm:$0xff] %vm471, %v684
        %709 = vst.msk [vmem:[#allocation3 + $0xb8] sm:$0xff] %vm471, %v685
        %v710 = vld [vmem:[#allocation2 + $0x1] sm:$0xff]
        %v711 = vld [vmem:[#allocation2 + $0x9] sm:$0xff]
        %v712 = vld [vmem:[#allocation2 + $0x19] sm:$0xff]
        %v713 = vld [vmem:[#allocation2 + $0x21] sm:$0xff]
        %v714 = vld [vmem:[#allocation2 + $0x31] sm:$0xff]
        %v715 = vld [vmem:[#allocation2 + $0x39] sm:$0xff]
        %v716 = vld [vmem:[#allocation2 + $0x49] sm:$0xff]
        %v717 = vld [vmem:[#allocation2 + $0x51] sm:$0xff]
        %v718 = vld [vmem:[#allocation2 + $0x61] sm:$0xff]
        %v719 = vld [vmem:[#allocation2 + $0x69] sm:$0xff]
        %v720 = vld [vmem:[#allocation2 + $0x79] sm:$0xff]
        %v721 = vld [vmem:[#allocation2 + $0x81] sm:$0xff]
        %v722 = vld [vmem:[#allocation2 + $0x91] sm:$0xff]
        %v723 = vld [vmem:[#allocation2 + $0x99] sm:$0xff]
        %v724 = vld [vmem:[#allocation2 + $0xa9] sm:$0xff]
        %v725 = vld [vmem:[#allocation2 + $0xb1] sm:$0xff]
        %v726 = vld [vmem:[#allocation2 + $0xc1] sm:$0xff]
        %v727 = vld [vmem:[#allocation2 + $0xc9] sm:$0xff]
        %v728 = vld [vmem:[#allocation2 + $0xd9] sm:$0xff]
        %v729 = vld [vmem:[#allocation2 + $0xe1] sm:$0xff]
        %v730 = vld [vmem:[#allocation2 + $0xf1] sm:$0xff]
        %v731 = vld [vmem:[#allocation2 + $0xf9] sm:$0xff]
        %v732 = vld [vmem:[#allocation2 + $0x109] sm:$0xff]
        %v733 = vld [vmem:[#allocation2 + $0x111] sm:$0xff]
        %758 = vrot.lane.b32.xlu0 %v710, 4
        %v759 = vpop.permute.xlu0 %758
        %760 = vrot.lane.b32.xlu0 %v711, 4
        %v761 = vpop.permute.xlu0 %760
        %762 = vrot.lane.b32.xlu0 %v712, 4
        %v763 = vpop.permute.xlu0 %762
        %764 = vrot.lane.b32.xlu0 %v713, 4
        %v765 = vpop.permute.xlu0 %764
        %766 = vrot.lane.b32.xlu0 %v714, 4
        %v767 = vpop.permute.xlu0 %766
        %768 = vrot.lane.b32.xlu0 %v715, 4
        %v769 = vpop.permute.xlu0 %768
        %770 = vrot.lane.b32.xlu0 %v716, 4
        %v771 = vpop.permute.xlu0 %770
        %772 = vrot.lane.b32.xlu0 %v717, 4
        %v773 = vpop.permute.xlu0 %772
        %774 = vrot.lane.b32.xlu0 %v718, 4
        %v775 = vpop.permute.xlu0 %774
        %776 = vrot.lane.b32.xlu0 %v719, 4
        %v777 = vpop.permute.xlu0 %776
        %778 = vrot.lane.b32.xlu0 %v720, 4
        %v779 = vpop.permute.xlu0 %778
        %780 = vrot.lane.b32.xlu0 %v721, 4
        %v781 = vpop.permute.xlu0 %780
        %782 = vrot.lane.b32.xlu0 %v722, 4
        %v783 = vpop.permute.xlu0 %782
        %784 = vrot.lane.b32.xlu0 %v723, 4
        %v785 = vpop.permute.xlu0 %784
        %786 = vrot.lane.b32.xlu0 %v724, 4
        %v787 = vpop.permute.xlu0 %786
        %788 = vrot.lane.b32.xlu0 %v725, 4
        %v789 = vpop.permute.xlu0 %788
        %790 = vrot.lane.b32.xlu0 %v726, 4
        %v791 = vpop.permute.xlu0 %790
        %792 = vrot.lane.b32.xlu0 %v727, 4
        %v793 = vpop.permute.xlu0 %792
        %794 = vrot.lane.b32.xlu0 %v728, 4
        %v795 = vpop.permute.xlu0 %794
        %796 = vrot.lane.b32.xlu0 %v729, 4
        %v797 = vpop.permute.xlu0 %796
        %798 = vrot.lane.b32.xlu0 %v730, 4
        %v799 = vpop.permute.xlu0 %798
        %800 = vrot.lane.b32.xlu0 %v731, 4
        %v801 = vpop.permute.xlu0 %800
        %802 = vrot.lane.b32.xlu0 %v732, 4
        %v803 = vpop.permute.xlu0 %802
        %804 = vrot.lane.b32.xlu0 %v733, 4
        %v805 = vpop.permute.xlu0 %804
        %vm830 = vcmask 64544
        %831 = vst.msk [vmem:[#allocation3] sm:$0xff] %vm830, %v759
        %832 = vst.msk [vmem:[#allocation3 + $0x8] sm:$0xff] %vm830, %v761
        %833 = vst.msk [vmem:[#allocation3 + $0x10] sm:$0xff] %vm830, %v763
        %834 = vst.msk [vmem:[#allocation3 + $0x18] sm:$0xff] %vm830, %v765
        %835 = vst.msk [vmem:[#allocation3 + $0x20] sm:$0xff] %vm830, %v767
        %836 = vst.msk [vmem:[#allocation3 + $0x28] sm:$0xff] %vm830, %v769
        %837 = vst.msk [vmem:[#allocation3 + $0x30] sm:$0xff] %vm830, %v771
        %838 = vst.msk [vmem:[#allocation3 + $0x38] sm:$0xff] %vm830, %v773
        %839 = vst.msk [vmem:[#allocation3 + $0x40] sm:$0xff] %vm830, %v775
        %840 = vst.msk [vmem:[#allocation3 + $0x48] sm:$0xff] %vm830, %v777
        %841 = vst.msk [vmem:[#allocation3 + $0x50] sm:$0xff] %vm830, %v779
        %842 = vst.msk [vmem:[#allocation3 + $0x58] sm:$0xff] %vm830, %v781
        %843 = vst.msk [vmem:[#allocation3 + $0x60] sm:$0xff] %vm830, %v783
        %844 = vst.msk [vmem:[#allocation3 + $0x68] sm:$0xff] %vm830, %v785
        %845 = vst.msk [vmem:[#allocation3 + $0x70] sm:$0xff] %vm830, %v787
        %846 = vst.msk [vmem:[#allocation3 + $0x78] sm:$0xff] %vm830, %v789
        %847 = vst.msk [vmem:[#allocation3 + $0x80] sm:$0xff] %vm830, %v791
        %848 = vst.msk [vmem:[#allocation3 + $0x88] sm:$0xff] %vm830, %v793
        %849 = vst.msk [vmem:[#allocation3 + $0x90] sm:$0xff] %vm830, %v795
        %850 = vst.msk [vmem:[#allocation3 + $0x98] sm:$0xff] %vm830, %v797
        %851 = vst.msk [vmem:[#allocation3 + $0xa0] sm:$0xff] %vm830, %v799
        %852 = vst.msk [vmem:[#allocation3 + $0xa8] sm:$0xff] %vm830, %v801
        %853 = vst.msk [vmem:[#allocation3 + $0xb0] sm:$0xff] %vm830, %v803
        %854 = vst.msk [vmem:[#allocation3 + $0xb8] sm:$0xff] %vm830, %v805
        %v855 = vld [vmem:[%s564] sm:$0xff]
        %v856 = vld [vmem:[%s564 + $0x8] sm:$0xff]
        %v857 = vld [vmem:[%s564 + $0x18] sm:$0xff]
        %v858 = vld [vmem:[%s564 + $0x20] sm:$0xff]
        %v859 = vld [vmem:[%s564 + $0x30] sm:$0xff]
        %v860 = vld [vmem:[%s564 + $0x38] sm:$0xff]
        %v861 = vld [vmem:[%s564 + $0x48] sm:$0xff]
        %v862 = vld [vmem:[%s564 + $0x50] sm:$0xff]
        %v863 = vld [vmem:[%s564 + $0x60] sm:$0xff]
        %v864 = vld [vmem:[%s564 + $0x68] sm:$0xff]
        %v865 = vld [vmem:[%s564 + $0x78] sm:$0xff]
        %v866 = vld [vmem:[%s564 + $0x80] sm:$0xff]
        %v867 = vld [vmem:[%s564 + $0x90] sm:$0xff]
        %v868 = vld [vmem:[%s564 + $0x98] sm:$0xff]
        %v869 = vld [vmem:[%s564 + $0xa8] sm:$0xff]
        %v870 = vld [vmem:[%s564 + $0xb0] sm:$0xff]
        %v871 = vld [vmem:[%s564 + $0xc0] sm:$0xff]
        %v872 = vld [vmem:[%s564 + $0xc8] sm:$0xff]
        %v873 = vld [vmem:[%s564 + $0xd8] sm:$0xff]
        %v874 = vld [vmem:[%s564 + $0xe0] sm:$0xff]
        %v875 = vld [vmem:[%s564 + $0xf0] sm:$0xff]
        %v876 = vld [vmem:[%s564 + $0xf8] sm:$0xff]
        %v877 = vld [vmem:[%s564 + $0x108] sm:$0xff]
        %v878 = vld [vmem:[%s564 + $0x110] sm:$0xff]
        %903 = vrot.lane.b32.xlu0 %v855, 8
        %v904 = vpop.permute.xlu0 %903
        %905 = vrot.lane.b32.xlu0 %v856, 8
        %v906 = vpop.permute.xlu0 %905
        %907 = vrot.lane.b32.xlu0 %v857, 8
        %v908 = vpop.permute.xlu0 %907
        %909 = vrot.lane.b32.xlu0 %v858, 8
        %v910 = vpop.permute.xlu0 %909
        %911 = vrot.lane.b32.xlu0 %v859, 8
        %v912 = vpop.permute.xlu0 %911
        %913 = vrot.lane.b32.xlu0 %v860, 8
        %v914 = vpop.permute.xlu0 %913
        %915 = vrot.lane.b32.xlu0 %v861, 8
        %v916 = vpop.permute.xlu0 %915
        %917 = vrot.lane.b32.xlu0 %v862, 8
        %v918 = vpop.permute.xlu0 %917
        %919 = vrot.lane.b32.xlu0 %v863, 8
        %v920 = vpop.permute.xlu0 %919
        %921 = vrot.lane.b32.xlu0 %v864, 8
        %v922 = vpop.permute.xlu0 %921
        %923 = vrot.lane.b32.xlu0 %v865, 8
        %v924 = vpop.permute.xlu0 %923
        %925 = vrot.lane.b32.xlu0 %v866, 8
        %v926 = vpop.permute.xlu0 %925
        %927 = vrot.lane.b32.xlu0 %v867, 8
        %v928 = vpop.permute.xlu0 %927
        %929 = vrot.lane.b32.xlu0 %v868, 8
        %v930 = vpop.permute.xlu0 %929
        %931 = vrot.lane.b32.xlu0 %v869, 8
        %v932 = vpop.permute.xlu0 %931
        %933 = vrot.lane.b32.xlu0 %v870, 8
        %v934 = vpop.permute.xlu0 %933
        %935 = vrot.lane.b32.xlu0 %v871, 8
        %v936 = vpop.permute.xlu0 %935
        %937 = vrot.lane.b32.xlu0 %v872, 8
        %v938 = vpop.permute.xlu0 %937
        %939 = vrot.lane.b32.xlu0 %v873, 8
        %v940 = vpop.permute.xlu0 %939
        %941 = vrot.lane.b32.xlu0 %v874, 8
        %v942 = vpop.permute.xlu0 %941
        %943 = vrot.lane.b32.xlu0 %v875, 8
        %v944 = vpop.permute.xlu0 %943
        %945 = vrot.lane.b32.xlu0 %v876, 8
        %v946 = vpop.permute.xlu0 %945
        %947 = vrot.lane.b32.xlu0 %v877, 8
        %v948 = vpop.permute.xlu0 %947
        %949 = vrot.lane.b32.xlu0 %v878, 8
        %v950 = vpop.permute.xlu0 %949
        %vm975 = vcmask 97344
        %976 = vst.msk [vmem:[#allocation3] sm:$0xff] %vm975, %v904
        %977 = vst.msk [vmem:[#allocation3 + $0x8] sm:$0xff] %vm975, %v906
        %978 = vst.msk [vmem:[#allocation3 + $0x10] sm:$0xff] %vm975, %v908
        %979 = vst.msk [vmem:[#allocation3 + $0x18] sm:$0xff] %vm975, %v910
        %980 = vst.msk [vmem:[#allocation3 + $0x20] sm:$0xff] %vm975, %v912
        %981 = vst.msk [vmem:[#allocation3 + $0x28] sm:$0xff] %vm975, %v914
        %982 = vst.msk [vmem:[#allocation3 + $0x30] sm:$0xff] %vm975, %v916
        %983 = vst.msk [vmem:[#allocation3 + $0x38] sm:$0xff] %vm975, %v918
        %984 = vst.msk [vmem:[#allocation3 + $0x40] sm:$0xff] %vm975, %v920
        %985 = vst.msk [vmem:[#allocation3 + $0x48] sm:$0xff] %vm975, %v922
        %986 = vst.msk [vmem:[#allocation3 + $0x50] sm:$0xff] %vm975, %v924
        %987 = vst.msk [vmem:[#allocation3 + $0x58] sm:$0xff] %vm975, %v926
        %988 = vst.msk [vmem:[#allocation3 + $0x60] sm:$0xff] %vm975, %v928
        %989 = vst.msk [vmem:[#allocation3 + $0x68] sm:$0xff] %vm975, %v930
        %990 = vst.msk [vmem:[#allocation3 + $0x70] sm:$0xff] %vm975, %v932
        %991 = vst.msk [vmem:[#allocation3 + $0x78] sm:$0xff] %vm975, %v934
        %992 = vst.msk [vmem:[#allocation3 + $0x80] sm:$0xff] %vm975, %v936
        %993 = vst.msk [vmem:[#allocation3 + $0x88] sm:$0xff] %vm975, %v938
        %994 = vst.msk [vmem:[#allocation3 + $0x90] sm:$0xff] %vm975, %v940
        %995 = vst.msk [vmem:[#allocation3 + $0x98] sm:$0xff] %vm975, %v942
        %996 = vst.msk [vmem:[#allocation3 + $0xa0] sm:$0xff] %vm975, %v944
        %997 = vst.msk [vmem:[#allocation3 + $0xa8] sm:$0xff] %vm975, %v946
        %998 = vst.msk [vmem:[#allocation3 + $0xb0] sm:$0xff] %vm975, %v948
        %999 = vst.msk [vmem:[#allocation3 + $0xb8] sm:$0xff] %vm975, %v950
        %v1000 = vld [vmem:[%s564 + $0x1] sm:$0xff]
        %v1001 = vld [vmem:[%s564 + $0x9] sm:$0xff]
        %v1002 = vld [vmem:[%s564 + $0x19] sm:$0xff]
        %v1003 = vld [vmem:[%s564 + $0x21] sm:$0xff]
        %v1004 = vld [vmem:[%s564 + $0x31] sm:$0xff]
        %v1005 = vld [vmem:[%s564 + $0x39] sm:$0xff]
        %v1006 = vld [vmem:[%s564 + $0x49] sm:$0xff]
        %v1007 = vld [vmem:[%s564 + $0x51] sm:$0xff]
        %v1008 = vld [vmem:[%s564 + $0x61] sm:$0xff]
        %v1009 = vld [vmem:[%s564 + $0x69] sm:$0xff]
        %v1010 = vld [vmem:[%s564 + $0x79] sm:$0xff]
        %v1011 = vld [vmem:[%s564 + $0x81] sm:$0xff]
        %v1012 = vld [vmem:[%s564 + $0x91] sm:$0xff]
        %v1013 = vld [vmem:[%s564 + $0x99] sm:$0xff]
        %v1014 = vld [vmem:[%s564 + $0xa9] sm:$0xff]
        %v1015 = vld [vmem:[%s564 + $0xb1] sm:$0xff]
        %v1016 = vld [vmem:[%s564 + $0xc1] sm:$0xff]
        %v1017 = vld [vmem:[%s564 + $0xc9] sm:$0xff]
        %v1018 = vld [vmem:[%s564 + $0xd9] sm:$0xff]
        %v1019 = vld [vmem:[%s564 + $0xe1] sm:$0xff]
        %v1020 = vld [vmem:[%s564 + $0xf1] sm:$0xff]
        %v1021 = vld [vmem:[%s564 + $0xf9] sm:$0xff]
        %v1022 = vld [vmem:[%s564 + $0x109] sm:$0xff]
        %v1023 = vld [vmem:[%s564 + $0x111] sm:$0xff]
        %1048 = vrot.lane.b32.xlu0 %v1000, 12
        %v1049 = vpop.permute.xlu0 %1048
        %1050 = vrot.lane.b32.xlu0 %v1001, 12
        %v1051 = vpop.permute.xlu0 %1050
        %1052 = vrot.lane.b32.xlu0 %v1002, 12
        %v1053 = vpop.permute.xlu0 %1052
        %1054 = vrot.lane.b32.xlu0 %v1003, 12
        %v1055 = vpop.permute.xlu0 %1054
        %1056 = vrot.lane.b32.xlu0 %v1004, 12
        %v1057 = vpop.permute.xlu0 %1056
        %1058 = vrot.lane.b32.xlu0 %v1005, 12
        %v1059 = vpop.permute.xlu0 %1058
        %1060 = vrot.lane.b32.xlu0 %v1006, 12
        %v1061 = vpop.permute.xlu0 %1060
        %1062 = vrot.lane.b32.xlu0 %v1007, 12
        %v1063 = vpop.permute.xlu0 %1062
        %1064 = vrot.lane.b32.xlu0 %v1008, 12
        %v1065 = vpop.permute.xlu0 %1064
        %1066 = vrot.lane.b32.xlu0 %v1009, 12
        %v1067 = vpop.permute.xlu0 %1066
        %1068 = vrot.lane.b32.xlu0 %v1010, 12
        %v1069 = vpop.permute.xlu0 %1068
        %1070 = vrot.lane.b32.xlu0 %v1011, 12
        %v1071 = vpop.permute.xlu0 %1070
        %1072 = vrot.lane.b32.xlu0 %v1012, 12
        %v1073 = vpop.permute.xlu0 %1072
        %1074 = vrot.lane.b32.xlu0 %v1013, 12
        %v1075 = vpop.permute.xlu0 %1074
        %1076 = vrot.lane.b32.xlu0 %v1014, 12
        %v1077 = vpop.permute.xlu0 %1076
        %1078 = vrot.lane.b32.xlu0 %v1015, 12
        %v1079 = vpop.permute.xlu0 %1078
        %1080 = vrot.lane.b32.xlu0 %v1016, 12
        %v1081 = vpop.permute.xlu0 %1080
        %1082 = vrot.lane.b32.xlu0 %v1017, 12
        %v1083 = vpop.permute.xlu0 %1082
        %1084 = vrot.lane.b32.xlu0 %v1018, 12
        %v1085 = vpop.permute.xlu0 %1084
        %1086 = vrot.lane.b32.xlu0 %v1019, 12
        %v1087 = vpop.permute.xlu0 %1086
        %1088 = vrot.lane.b32.xlu0 %v1020, 12
        %v1089 = vpop.permute.xlu0 %1088
        %1090 = vrot.lane.b32.xlu0 %v1021, 12
        %v1091 = vpop.permute.xlu0 %1090
        %1092 = vrot.lane.b32.xlu0 %v1022, 12
        %v1093 = vpop.permute.xlu0 %1092
        %1094 = vrot.lane.b32.xlu0 %v1023, 12
        %v1095 = vpop.permute.xlu0 %1094
        %vm1120 = vcmask 130144
        %1121 = vst.msk [vmem:[#allocation3] sm:$0xff] %vm1120, %v1049
        %1122 = vst.msk [vmem:[#allocation3 + $0x8] sm:$0xff] %vm1120, %v1051
        %1123 = vst.msk [vmem:[#allocation3 + $0x10] sm:$0xff] %vm1120, %v1053
        %1124 = vst.msk [vmem:[#allocation3 + $0x18] sm:$0xff] %vm1120, %v1055
        %1125 = vst.msk [vmem:[#allocation3 + $0x20] sm:$0xff] %vm1120, %v1057
        %1126 = vst.msk [vmem:[#allocation3 + $0x28] sm:$0xff] %vm1120, %v1059
        %1127 = vst.msk [vmem:[#allocation3 + $0x30] sm:$0xff] %vm1120, %v1061
        %1128 = vst.msk [vmem:[#allocation3 + $0x38] sm:$0xff] %vm1120, %v1063
        %1129 = vst.msk [vmem:[#allocation3 + $0x40] sm:$0xff] %vm1120, %v1065
        %1130 = vst.msk [vmem:[#allocation3 + $0x48] sm:$0xff] %vm1120, %v1067
        %1131 = vst.msk [vmem:[#allocation3 + $0x50] sm:$0xff] %vm1120, %v1069
        %1132 = vst.msk [vmem:[#allocation3 + $0x58] sm:$0xff] %vm1120, %v1071
        %1133 = vst.msk [vmem:[#allocation3 + $0x60] sm:$0xff] %vm1120, %v1073
        %1134 = vst.msk [vmem:[#allocation3 + $0x68] sm:$0xff] %vm1120, %v1075
        %1135 = vst.msk [vmem:[#allocation3 + $0x70] sm:$0xff] %vm1120, %v1077
        %1136 = vst.msk [vmem:[#allocation3 + $0x78] sm:$0xff] %vm1120, %v1079
        %1137 = vst.msk [vmem:[#allocation3 + $0x80] sm:$0xff] %vm1120, %v1081
        %1138 = vst.msk [vmem:[#allocation3 + $0x88] sm:$0xff] %vm1120, %v1083
        %1139 = vst.msk [vmem:[#allocation3 + $0x90] sm:$0xff] %vm1120, %v1085
        %1140 = vst.msk [vmem:[#allocation3 + $0x98] sm:$0xff] %vm1120, %v1087
        %1141 = vst.msk [vmem:[#allocation3 + $0xa0] sm:$0xff] %vm1120, %v1089
        %1142 = vst.msk [vmem:[#allocation3 + $0xa8] sm:$0xff] %vm1120, %v1091
        %1143 = vst.msk [vmem:[#allocation3 + $0xb0] sm:$0xff] %vm1120, %v1093
        %1144 = vst.msk [vmem:[#allocation3 + $0xb8] sm:$0xff] %vm1120, %v1095
        %s1145 = scalar_lea.vmem [#allocation2], 48
        %v1146 = vld [vmem:[%s1145] sm:$0xff]
        %v1147 = vld [vmem:[%s1145 + $0x8] sm:$0xff]
        %v1148 = vld [vmem:[%s1145 + $0x18] sm:$0xff]
        %v1149 = vld [vmem:[%s1145 + $0x20] sm:$0xff]
        %v1150 = vld [vmem:[%s1145 + $0x30] sm:$0xff]
        %v1151 = vld [vmem:[%s1145 + $0x38] sm:$0xff]
        %v1152 = vld [vmem:[%s1145 + $0x48] sm:$0xff]
        %v1153 = vld [vmem:[%s1145 + $0x50] sm:$0xff]
        %v1154 = vld [vmem:[%s1145 + $0x60] sm:$0xff]
        %v1155 = vld [vmem:[%s1145 + $0x68] sm:$0xff]
        %v1156 = vld [vmem:[%s1145 + $0x78] sm:$0xff]
        %v1157 = vld [vmem:[%s1145 + $0x80] sm:$0xff]
        %v1158 = vld [vmem:[%s1145 + $0x90] sm:$0xff]
        %v1159 = vld [vmem:[%s1145 + $0x98] sm:$0xff]
        %v1160 = vld [vmem:[%s1145 + $0xa8] sm:$0xff]
        %v1161 = vld [vmem:[%s1145 + $0xb0] sm:$0xff]
        %v1162 = vld [vmem:[%s1145 + $0xc0] sm:$0xff]
        %v1163 = vld [vmem:[%s1145 + $0xc8] sm:$0xff]
        %v1164 = vld [vmem:[%s1145 + $0xd8] sm:$0xff]
        %v1165 = vld [vmem:[%s1145 + $0xe0] sm:$0xff]
        %v1166 = vld [vmem:[%s1145 + $0xf0] sm:$0xff]
        %v1167 = vld [vmem:[%s1145 + $0xf8] sm:$0xff]
        %v1168 = vld [vmem:[%s1145 + $0x108] sm:$0xff]
        %v1169 = vld [vmem:[%s1145 + $0x110] sm:$0xff]
        %1194 = vrot.lane.b32.xlu0 %v1146, 16
        %v1195 = vpop.permute.xlu0 %1194
        %1196 = vrot.lane.b32.xlu0 %v1147, 16
        %v1197 = vpop.permute.xlu0 %1196
        %1198 = vrot.lane.b32.xlu0 %v1148, 16
        %v1199 = vpop.permute.xlu0 %1198
        %1200 = vrot.lane.b32.xlu0 %v1149, 16
        %v1201 = vpop.permute.xlu0 %1200
        %1202 = vrot.lane.b32.xlu0 %v1150, 16
        %v1203 = vpop.permute.xlu0 %1202
        %1204 = vrot.lane.b32.xlu0 %v1151, 16
        %v1205 = vpop.permute.xlu0 %1204
        %1206 = vrot.lane.b32.xlu0 %v1152, 16
        %v1207 = vpop.permute.xlu0 %1206
        %1208 = vrot.lane.b32.xlu0 %v1153, 16
        %v1209 = vpop.permute.xlu0 %1208
        %1210 = vrot.lane.b32.xlu0 %v1154, 16
        %v1211 = vpop.permute.xlu0 %1210
        %1212 = vrot.lane.b32.xlu0 %v1155, 16
        %v1213 = vpop.permute.xlu0 %1212
        %1214 = vrot.lane.b32.xlu0 %v1156, 16
        %v1215 = vpop.permute.xlu0 %1214
        %1216 = vrot.lane.b32.xlu0 %v1157, 16
        %v1217 = vpop.permute.xlu0 %1216
        %1218 = vrot.lane.b32.xlu0 %v1158, 16
        %v1219 = vpop.permute.xlu0 %1218
        %1220 = vrot.lane.b32.xlu0 %v1159, 16
        %v1221 = vpop.permute.xlu0 %1220
        %1222 = vrot.lane.b32.xlu0 %v1160, 16
        %v1223 = vpop.permute.xlu0 %1222
        %1224 = vrot.lane.b32.xlu0 %v1161, 16
        %v1225 = vpop.permute.xlu0 %1224
        %1226 = vrot.lane.b32.xlu0 %v1162, 16
        %v1227 = vpop.permute.xlu0 %1226
        %1228 = vrot.lane.b32.xlu0 %v1163, 16
        %v1229 = vpop.permute.xlu0 %1228
        %1230 = vrot.lane.b32.xlu0 %v1164, 16
        %v1231 = vpop.permute.xlu0 %1230
        %1232 = vrot.lane.b32.xlu0 %v1165, 16
        %v1233 = vpop.permute.xlu0 %1232
        %1234 = vrot.lane.b32.xlu0 %v1166, 16
        %v1235 = vpop.permute.xlu0 %1234
        %1236 = vrot.lane.b32.xlu0 %v1167, 16
        %v1237 = vpop.permute.xlu0 %1236
        %1238 = vrot.lane.b32.xlu0 %v1168, 16
        %v1239 = vpop.permute.xlu0 %1238
        %1240 = vrot.lane.b32.xlu0 %v1169, 16
        %v1241 = vpop.permute.xlu0 %1240
        %vm1266 = vcmask 162944
        %1267 = vst.msk [vmem:[#allocation3] sm:$0xff] %vm1266, %v1195
        %1268 = vst.msk [vmem:[#allocation3 + $0x8] sm:$0xff] %vm1266, %v1197
        %1269 = vst.msk [vmem:[#allocation3 + $0x10] sm:$0xff] %vm1266, %v1199
        %1270 = vst.msk [vmem:[#allocation3 + $0x18] sm:$0xff] %vm1266, %v1201
        %1271 = vst.msk [vmem:[#allocation3 + $0x20] sm:$0xff] %vm1266, %v1203
        %1272 = vst.msk [vmem:[#allocation3 + $0x28] sm:$0xff] %vm1266, %v1205
        %1273 = vst.msk [vmem:[#allocation3 + $0x30] sm:$0xff] %vm1266, %v1207
        %1274 = vst.msk [vmem:[#allocation3 + $0x38] sm:$0xff] %vm1266, %v1209
        %1275 = vst.msk [vmem:[#allocation3 + $0x40] sm:$0xff] %vm1266, %v1211
        %1276 = vst.msk [vmem:[#allocation3 + $0x48] sm:$0xff] %vm1266, %v1213
        %1277 = vst.msk [vmem:[#allocation3 + $0x50] sm:$0xff] %vm1266, %v1215
        %1278 = vst.msk [vmem:[#allocation3 + $0x58] sm:$0xff] %vm1266, %v1217
        %1279 = vst.msk [vmem:[#allocation3 + $0x60] sm:$0xff] %vm1266, %v1219
        %1280 = vst.msk [vmem:[#allocation3 + $0x68] sm:$0xff] %vm1266, %v1221
        %1281 = vst.msk [vmem:[#allocation3 + $0x70] sm:$0xff] %vm1266, %v1223
        %1282 = vst.msk [vmem:[#allocation3 + $0x78] sm:$0xff] %vm1266, %v1225
        %1283 = vst.msk [vmem:[#allocation3 + $0x80] sm:$0xff] %vm1266, %v1227
        %1284 = vst.msk [vmem:[#allocation3 + $0x88] sm:$0xff] %vm1266, %v1229
        %1285 = vst.msk [vmem:[#allocation3 + $0x90] sm:$0xff] %vm1266, %v1231
        %1286 = vst.msk [vmem:[#allocation3 + $0x98] sm:$0xff] %vm1266, %v1233
        %1287 = vst.msk [vmem:[#allocation3 + $0xa0] sm:$0xff] %vm1266, %v1235
        %1288 = vst.msk [vmem:[#allocation3 + $0xa8] sm:$0xff] %vm1266, %v1237
        %1289 = vst.msk [vmem:[#allocation3 + $0xb0] sm:$0xff] %vm1266, %v1239
        %1290 = vst.msk [vmem:[#allocation3 + $0xb8] sm:$0xff] %vm1266, %v1241
        %v1291 = vld [vmem:[%s1145 + $0x1] sm:$0xff]
        %v1292 = vld [vmem:[%s1145 + $0x9] sm:$0xff]
        %v1293 = vld [vmem:[%s1145 + $0x19] sm:$0xff]
        %v1294 = vld [vmem:[%s1145 + $0x21] sm:$0xff]
        %v1295 = vld [vmem:[%s1145 + $0x31] sm:$0xff]
        %v1296 = vld [vmem:[%s1145 + $0x39] sm:$0xff]
        %v1297 = vld [vmem:[%s1145 + $0x49] sm:$0xff]
        %v1298 = vld [vmem:[%s1145 + $0x51] sm:$0xff]
        %v1299 = vld [vmem:[%s1145 + $0x61] sm:$0xff]
        %v1300 = vld [vmem:[%s1145 + $0x69] sm:$0xff]
        %v1301 = vld [vmem:[%s1145 + $0x79] sm:$0xff]
        %v1302 = vld [vmem:[%s1145 + $0x81] sm:$0xff]
        %v1303 = vld [vmem:[%s1145 + $0x91] sm:$0xff]
        %v1304 = vld [vmem:[%s1145 + $0x99] sm:$0xff]
        %v1305 = vld [vmem:[%s1145 + $0xa9] sm:$0xff]
        %v1306 = vld [vmem:[%s1145 + $0xb1] sm:$0xff]
        %v1307 = vld [vmem:[%s1145 + $0xc1] sm:$0xff]
        %v1308 = vld [vmem:[%s1145 + $0xc9] sm:$0xff]
        %v1309 = vld [vmem:[%s1145 + $0xd9] sm:$0xff]
        %v1310 = vld [vmem:[%s1145 + $0xe1] sm:$0xff]
        %v1311 = vld [vmem:[%s1145 + $0xf1] sm:$0xff]
        %v1312 = vld [vmem:[%s1145 + $0xf9] sm:$0xff]
        %v1313 = vld [vmem:[%s1145 + $0x109] sm:$0xff]
        %v1314 = vld [vmem:[%s1145 + $0x111] sm:$0xff]
        %1339 = vrot.lane.b32.xlu0 %v1291, 20
        %v1340 = vpop.permute.xlu0 %1339
        %1341 = vrot.lane.b32.xlu0 %v1292, 20
        %v1342 = vpop.permute.xlu0 %1341
        %1343 = vrot.lane.b32.xlu0 %v1293, 20
        %v1344 = vpop.permute.xlu0 %1343
        %1345 = vrot.lane.b32.xlu0 %v1294, 20
        %v1346 = vpop.permute.xlu0 %1345
        %1347 = vrot.lane.b32.xlu0 %v1295, 20
        %v1348 = vpop.permute.xlu0 %1347
        %1349 = vrot.lane.b32.xlu0 %v1296, 20
        %v1350 = vpop.permute.xlu0 %1349
        %1351 = vrot.lane.b32.xlu0 %v1297, 20
        %v1352 = vpop.permute.xlu0 %1351
        %1353 = vrot.lane.b32.xlu0 %v1298, 20
        %v1354 = vpop.permute.xlu0 %1353
        %1355 = vrot.lane.b32.xlu0 %v1299, 20
        %v1356 = vpop.permute.xlu0 %1355
        %1357 = vrot.lane.b32.xlu0 %v1300, 20
        %v1358 = vpop.permute.xlu0 %1357
        %1359 = vrot.lane.b32.xlu0 %v1301, 20
        %v1360 = vpop.permute.xlu0 %1359
        %1361 = vrot.lane.b32.xlu0 %v1302, 20
        %v1362 = vpop.permute.xlu0 %1361
        %1363 = vrot.lane.b32.xlu0 %v1303, 20
        %v1364 = vpop.permute.xlu0 %1363
        %1365 = vrot.lane.b32.xlu0 %v1304, 20
        %v1366 = vpop.permute.xlu0 %1365
        %1367 = vrot.lane.b32.xlu0 %v1305, 20
        %v1368 = vpop.permute.xlu0 %1367
        %1369 = vrot.lane.b32.xlu0 %v1306, 20
        %v1370 = vpop.permute.xlu0 %1369
        %1371 = vrot.lane.b32.xlu0 %v1307, 20
        %v1372 = vpop.permute.xlu0 %1371
        %1373 = vrot.lane.b32.xlu0 %v1308, 20
        %v1374 = vpop.permute.xlu0 %1373
        %1375 = vrot.lane.b32.xlu0 %v1309, 20
        %v1376 = vpop.permute.xlu0 %1375
        %1377 = vrot.lane.b32.xlu0 %v1310, 20
        %v1378 = vpop.permute.xlu0 %1377
        %1379 = vrot.lane.b32.xlu0 %v1311, 20
        %v1380 = vpop.permute.xlu0 %1379
        %1381 = vrot.lane.b32.xlu0 %v1312, 20
        %v1382 = vpop.permute.xlu0 %1381
        %1383 = vrot.lane.b32.xlu0 %v1313, 20
        %v1384 = vpop.permute.xlu0 %1383
        %1385 = vrot.lane.b32.xlu0 %v1314, 20
        %v1386 = vpop.permute.xlu0 %1385
        %vm1411 = vcmask 195744
        %1412 = vst.msk [vmem:[#allocation3] sm:$0xff] %vm1411, %v1340
        %1413 = vst.msk [vmem:[#allocation3 + $0x8] sm:$0xff] %vm1411, %v1342
        %1414 = vst.msk [vmem:[#allocation3 + $0x10] sm:$0xff] %vm1411, %v1344
        %1415 = vst.msk [vmem:[#allocation3 + $0x18] sm:$0xff] %vm1411, %v1346
        %1416 = vst.msk [vmem:[#allocation3 + $0x20] sm:$0xff] %vm1411, %v1348
        %1417 = vst.msk [vmem:[#allocation3 + $0x28] sm:$0xff] %vm1411, %v1350
        %1418 = vst.msk [vmem:[#allocation3 + $0x30] sm:$0xff] %vm1411, %v1352
        %1419 = vst.msk [vmem:[#allocation3 + $0x38] sm:$0xff] %vm1411, %v1354
        %1420 = vst.msk [vmem:[#allocation3 + $0x40] sm:$0xff] %vm1411, %v1356
        %1421 = vst.msk [vmem:[#allocation3 + $0x48] sm:$0xff] %vm1411, %v1358
        %1422 = vst.msk [vmem:[#allocation3 + $0x50] sm:$0xff] %vm1411, %v1360
        %1423 = vst.msk [vmem:[#allocation3 + $0x58] sm:$0xff] %vm1411, %v1362
        %1424 = vst.msk [vmem:[#allocation3 + $0x60] sm:$0xff] %vm1411, %v1364
        %1425 = vst.msk [vmem:[#allocation3 + $0x68] sm:$0xff] %vm1411, %v1366
        %1426 = vst.msk [vmem:[#allocation3 + $0x70] sm:$0xff] %vm1411, %v1368
        %1427 = vst.msk [vmem:[#allocation3 + $0x78] sm:$0xff] %vm1411, %v1370
        %1428 = vst.msk [vmem:[#allocation3 + $0x80] sm:$0xff] %vm1411, %v1372
        %1429 = vst.msk [vmem:[#allocation3 + $0x88] sm:$0xff] %vm1411, %v1374
        %1430 = vst.msk [vmem:[#allocation3 + $0x90] sm:$0xff] %vm1411, %v1376
        %1431 = vst.msk [vmem:[#allocation3 + $0x98] sm:$0xff] %vm1411, %v1378
        %1432 = vst.msk [vmem:[#allocation3 + $0xa0] sm:$0xff] %vm1411, %v1380
        %1433 = vst.msk [vmem:[#allocation3 + $0xa8] sm:$0xff] %vm1411, %v1382
        %1434 = vst.msk [vmem:[#allocation3 + $0xb0] sm:$0xff] %vm1411, %v1384
        %1435 = vst.msk [vmem:[#allocation3 + $0xb8] sm:$0xff] %vm1411, %v1386
        %v1436 = vld [vmem:[#allocation3] sm:$0xff]
        %v1437 = vld [vmem:[#allocation3 + $0x8] sm:$0xff]
        %v1438 = vld [vmem:[#allocation3 + $0x10] sm:$0xff]
        %v1439 = vld [vmem:[#allocation3 + $0x18] sm:$0xff]
        %v1440 = vld [vmem:[#allocation3 + $0x20] sm:$0xff]
        %v1441 = vld [vmem:[#allocation3 + $0x28] sm:$0xff]
        %v1442 = vld [vmem:[#allocation3 + $0x30] sm:$0xff]
        %v1443 = vld [vmem:[#allocation3 + $0x38] sm:$0xff]
        %v1444 = vld [vmem:[#allocation3 + $0x40] sm:$0xff]
        %v1445 = vld [vmem:[#allocation3 + $0x48] sm:$0xff]
        %v1446 = vld [vmem:[#allocation3 + $0x50] sm:$0xff]
        %v1447 = vld [vmem:[#allocation3 + $0x58] sm:$0xff]
        %v1448 = vld [vmem:[#allocation3 + $0x60] sm:$0xff]
        %v1449 = vld [vmem:[#allocation3 + $0x68] sm:$0xff]
        %v1450 = vld [vmem:[#allocation3 + $0x70] sm:$0xff]
        %v1451 = vld [vmem:[#allocation3 + $0x78] sm:$0xff]
        %v1452 = vld [vmem:[#allocation3 + $0x80] sm:$0xff]
        %v1453 = vld [vmem:[#allocation3 + $0x88] sm:$0xff]
        %v1454 = vld [vmem:[#allocation3 + $0x90] sm:$0xff]
        %v1455 = vld [vmem:[#allocation3 + $0x98] sm:$0xff]
        %v1456 = vld [vmem:[#allocation3 + $0xa0] sm:$0xff]
        %v1457 = vld [vmem:[#allocation3 + $0xa8] sm:$0xff]
        %v1458 = vld [vmem:[#allocation3 + $0xb0] sm:$0xff]
        %v1459 = vld [vmem:[#allocation3 + $0xb8] sm:$0xff]
        %v1460 = vld [vmem:[%s3] sm:$0xff]
        %v1461 = vld [vmem:[%s3 + $0x8] sm:$0xff]
        %v1462 = vld [vmem:[%s3 + $0x10] sm:$0xff]
        %vm1463 = vcmask 195584
        %v1465 = vsel %vm1463, %v1436, 0
        %v1468 = vsel %vm1463, %v1437, 0
        %v1471 = vsel %vm1463, %v1438, 0
        %v1474 = vsel %vm1463, %v1439, 0
        %v1477 = vsel %vm1463, %v1440, 0
        %v1480 = vsel %vm1463, %v1441, 0
        %v1483 = vsel %vm1463, %v1442, 0
        %v1486 = vsel %vm1463, %v1443, 0
        %v1489 = vsel %vm1463, %v1444, 0
        %v1492 = vsel %vm1463, %v1445, 0
        %v1495 = vsel %vm1463, %v1446, 0
        %v1498 = vsel %vm1463, %v1447, 0
        %v1501 = vsel %vm1463, %v1448, 0
        %v1504 = vsel %vm1463, %v1449, 0
        %v1507 = vsel %vm1463, %v1450, 0
        %v1510 = vsel %vm1463, %v1451, 0
        %v1513 = vsel %vm1463, %v1452, 0
        %v1516 = vsel %vm1463, %v1453, 0
        %v1519 = vsel %vm1463, %v1454, 0
        %v1522 = vsel %vm1463, %v1455, 0
        %v1525 = vsel %vm1463, %v1456, 0
        %v1528 = vsel %vm1463, %v1457, 0
        %v1531 = vsel %vm1463, %v1458, 0
        %v1534 = vsel %vm1463, %v1459, 0
        %1536 = vmatprep.subr.mxu0 0.0
        %1537 = vmatpush1.msra.mxu0 %v1460
        %1538 = vmatprep.subr.mxu0 0.0
        %1539 = vmatpush1.msra.mxu0 %v1461
        %1540 = vmatprep.subr.mxu0 0.0
        %1541 = vmatpush1.msra.mxu0 %v1462
        %1542 = vmatprep.subr.mxu0 0.0
        %1543 = vmatpush1.msra.mxu0 0.0
        %1544 = vmatprep.subr.mxu0 0.0
        %1545 = vmatpush1.msra.mxu0 0.0
        %1546 = vmatprep.subr.mxu0 0.0
        %1547 = vmatpush1.msra.mxu0 0.0
        %1548 = vmatprep.subr.mxu0 0.0
        %1549 = vmatpush1.msra.mxu0 0.0
        %1550 = vmatprep.subr.mxu0 0.0
        %1551 = vmatpush1.msra.mxu0 0.0
        %1552 = vmatprep.subr.mxu0 0.0
        %1553 = vmatpush1.msra.mxu0 0.0
        %1554 = vmatprep.subr.mxu0 0.0
        %1555 = vmatpush1.msra.mxu0 0.0
        %1556 = vmatprep.subr.mxu0 0.0
        %1557 = vmatpush1.msra.mxu0 0.0
        %1558 = vmatprep.subr.mxu0 0.0
        %1559 = vmatpush1.msra.mxu0 0.0
        %1560 = vmatprep.subr.mxu0 0.0
        %1561 = vmatpush1.msra.mxu0 0.0
        %1562 = vmatprep.subr.mxu0 0.0
        %1563 = vmatpush1.msra.mxu0 0.0
        %1564 = vmatprep.subr.mxu0 0.0
        %1565 = vmatpush1.msra.mxu0 0.0
        %1566 = vmatprep.subr.mxu0 0.0
        %1567 = vmatpush1.msra.mxu0 0.0
        %1568 = vmatprep.subr.mxu0 0.0
        %1569 = vmatpush1.msra.mxu0 0.0
        %1570 = vmatprep.subr.mxu0 0.0
        %1571 = vmatpush1.msra.mxu0 0.0
        %1572 = vmatprep.subr.mxu0 0.0
        %1573 = vmatpush1.msra.mxu0 0.0
        %1574 = vmatprep.subr.mxu0 0.0
        %1575 = vmatpush1.msra.mxu0 0.0
        %1576 = vmatprep.subr.mxu0 0.0
        %1577 = vmatpush1.msra.mxu0 0.0
        %1578 = vmatprep.subr.mxu0 0.0
        %1579 = vmatpush1.msra.mxu0 0.0
        %1580 = vmatprep.subr.mxu0 0.0
        %1581 = vmatpush1.msra.mxu0 0.0
        %1582 = vmatprep.subr.mxu0 0.0
        %1583 = vmatpush1.msra.mxu0 0.0
        %1584 = vmatprep.subr.mxu0 0.0
        %1585 = vmatpush1.msra.mxu0 0.0
        %1586 = vmatprep.subr.mxu0 0.0
        %1587 = vmatpush1.msra.mxu0 0.0
        %1588 = vmatprep.subr.mxu0 0.0
        %1589 = vmatpush1.msra.mxu0 0.0
        %1590 = vmatprep.subr.mxu0 0.0
        %1591 = vmatpush1.msra.mxu0 0.0
        %1592 = vmatprep.subr.mxu0 0.0
        %1593 = vmatpush1.msra.mxu0 0.0
        %1594 = vmatprep.subr.mxu0 0.0
        %1595 = vmatpush1.msra.mxu0 0.0
        %1596 = vmatprep.subr.mxu0 0.0
        %1597 = vmatpush1.msra.mxu0 0.0
        %1598 = vmatprep.subr.mxu0 0.0
        %1599 = vmatpush1.msra.mxu0 0.0
        %1600 = vmatprep.mubr.f32.mxu0 0.0
        %1601 = vmatmul.mubr.f32.gmra.mrb[0].mxu0 %v1465
        %v1602 = vpop.f32.mrb[0].mxu0
        %v1603 = vadd.f32 0.0, %v1602
        %v1604 = vpop.f32.mrb[0].mxu0
        %1605 = vmatprep.mubr.f32.mxu0 0.0
        %1606 = vmatmul.mubr.f32.gmra.mrb[0].mxu0 %v1468
        %v1607 = vpop.f32.mrb[0].mxu0
        %v1608 = vadd.f32 0.0, %v1607
        %v1609 = vpop.f32.mrb[0].mxu0
        %1610 = vmatprep.mubr.f32.mxu0 0.0
        %1611 = vmatmul.mubr.f32.gmra.mrb[0].mxu0 %v1471
        %v1612 = vpop.f32.mrb[0].mxu0
        %v1613 = vadd.f32 0.0, %v1612
        %v1614 = vpop.f32.mrb[0].mxu0
        %1615 = vmatprep.mubr.f32.mxu0 0.0
        %1616 = vmatmul.mubr.f32.gmra.mrb[0].mxu0 %v1474
        %v1617 = vpop.f32.mrb[0].mxu0
        %v1618 = vadd.f32 0.0, %v1617
        %v1619 = vpop.f32.mrb[0].mxu0
        %1620 = vmatprep.mubr.f32.mxu0 0.0
        %1621 = vmatmul.mubr.f32.gmra.mrb[0].mxu0 %v1477
        %v1622 = vpop.f32.mrb[0].mxu0
        %v1623 = vadd.f32 0.0, %v1622
        %v1624 = vpop.f32.mrb[0].mxu0
        %1625 = vmatprep.mubr.f32.mxu0 0.0
        %1626 = vmatmul.mubr.f32.gmra.mrb[0].mxu0 %v1480
        %v1627 = vpop.f32.mrb[0].mxu0
        %v1628 = vadd.f32 0.0, %v1627
        %v1629 = vpop.f32.mrb[0].mxu0
        %1630 = vmatprep.mubr.f32.mxu0 0.0
        %1631 = vmatmul.mubr.f32.gmra.mrb[0].mxu0 %v1483
        %v1632 = vpop.f32.mrb[0].mxu0
        %v1633 = vadd.f32 0.0, %v1632
        %v1634 = vpop.f32.mrb[0].mxu0
        %1635 = vmatprep.mubr.f32.mxu0 0.0
        %1636 = vmatmul.mubr.f32.gmra.mrb[0].mxu0 %v1486
        %v1637 = vpop.f32.mrb[0].mxu0
        %v1638 = vadd.f32 0.0, %v1637
        %v1639 = vpop.f32.mrb[0].mxu0
        %1640 = vmatprep.mubr.f32.mxu0 0.0
        %1641 = vmatmul.mubr.f32.gmra.mrb[0].mxu0 %v1489
        %v1642 = vpop.f32.mrb[0].mxu0
        %v1643 = vadd.f32 0.0, %v1642
        %v1644 = vpop.f32.mrb[0].mxu0
        %1645 = vmatprep.mubr.f32.mxu0 0.0
        %1646 = vmatmul.mubr.f32.gmra.mrb[0].mxu0 %v1492
        %v1647 = vpop.f32.mrb[0].mxu0
        %v1648 = vadd.f32 0.0, %v1647
        %v1649 = vpop.f32.mrb[0].mxu0
        %1650 = vmatprep.mubr.f32.mxu0 0.0
        %1651 = vmatmul.mubr.f32.gmra.mrb[0].mxu0 %v1495
        %v1652 = vpop.f32.mrb[0].mxu0
        %v1653 = vadd.f32 0.0, %v1652
        %v1654 = vpop.f32.mrb[0].mxu0
        %1655 = vmatprep.mubr.f32.mxu0 0.0
        %1656 = vmatmul.mubr.f32.gmra.mrb[0].mxu0 %v1498
        %v1657 = vpop.f32.mrb[0].mxu0
        %v1658 = vadd.f32 0.0, %v1657
        %v1659 = vpop.f32.mrb[0].mxu0
        %1660 = vmatprep.mubr.f32.mxu0 0.0
        %1661 = vmatmul.mubr.f32.gmra.mrb[0].mxu0 %v1501
        %v1662 = vpop.f32.mrb[0].mxu0
        %v1663 = vadd.f32 0.0, %v1662
        %v1664 = vpop.f32.mrb[0].mxu0
        %1665 = vmatprep.mubr.f32.mxu0 0.0
        %1666 = vmatmul.mubr.f32.gmra.mrb[0].mxu0 %v1504
        %v1667 = vpop.f32.mrb[0].mxu0
        %v1668 = vadd.f32 0.0, %v1667
        %v1669 = vpop.f32.mrb[0].mxu0
        %1670 = vmatprep.mubr.f32.mxu0 0.0
        %1671 = vmatmul.mubr.f32.gmra.mrb[0].mxu0 %v1507
        %v1672 = vpop.f32.mrb[0].mxu0
        %v1673 = vadd.f32 0.0, %v1672
        %v1674 = vpop.f32.mrb[0].mxu0
        %1675 = vmatprep.mubr.f32.mxu0 0.0
        %1676 = vmatmul.mubr.f32.gmra.mrb[0].mxu0 %v1510
        %v1677 = vpop.f32.mrb[0].mxu0
        %v1678 = vadd.f32 0.0, %v1677
        %v1679 = vpop.f32.mrb[0].mxu0
        %1680 = vmatprep.mubr.f32.mxu0 0.0
        %1681 = vmatmul.mubr.f32.gmra.mrb[0].mxu0 %v1513
        %v1682 = vpop.f32.mrb[0].mxu0
        %v1683 = vadd.f32 0.0, %v1682
        %v1684 = vpop.f32.mrb[0].mxu0
        %1685 = vmatprep.mubr.f32.mxu0 0.0
        %1686 = vmatmul.mubr.f32.gmra.mrb[0].mxu0 %v1516
        %v1687 = vpop.f32.mrb[0].mxu0
        %v1688 = vadd.f32 0.0, %v1687
        %v1689 = vpop.f32.mrb[0].mxu0
        %1690 = vmatprep.mubr.f32.mxu0 0.0
        %1691 = vmatmul.mubr.f32.gmra.mrb[0].mxu0 %v1519
        %v1692 = vpop.f32.mrb[0].mxu0
        %v1693 = vadd.f32 0.0, %v1692
        %v1694 = vpop.f32.mrb[0].mxu0
        %1695 = vmatprep.mubr.f32.mxu0 0.0
        %1696 = vmatmul.mubr.f32.gmra.mrb[0].mxu0 %v1522
        %v1697 = vpop.f32.mrb[0].mxu0
        %v1698 = vadd.f32 0.0, %v1697
        %v1699 = vpop.f32.mrb[0].mxu0
        %1700 = vmatprep.mubr.f32.mxu0 0.0
        %1701 = vmatmul.mubr.f32.gmra.mrb[0].mxu0 %v1525
        %v1702 = vpop.f32.mrb[0].mxu0
        %v1703 = vadd.f32 0.0, %v1702
        %v1704 = vpop.f32.mrb[0].mxu0
        %1705 = vmatprep.mubr.f32.mxu0 0.0
        %1706 = vmatmul.mubr.f32.gmra.mrb[0].mxu0 %v1528
        %v1707 = vpop.f32.mrb[0].mxu0
        %v1708 = vadd.f32 0.0, %v1707
        %v1709 = vpop.f32.mrb[0].mxu0
        %1710 = vmatprep.mubr.f32.mxu0 0.0
        %1711 = vmatmul.mubr.f32.gmra.mrb[0].mxu0 %v1531
        %v1712 = vpop.f32.mrb[0].mxu0
        %v1713 = vadd.f32 0.0, %v1712
        %v1714 = vpop.f32.mrb[0].mxu0
        %1715 = vmatprep.mubr.f32.mxu0 0.0
        %1716 = vmatmul.mubr.f32.gmra.mrb[0].mxu0 %v1534
        %v1717 = vpop.f32.mrb[0].mxu0
        %v1718 = vadd.f32 0.0, %v1717
        %v1719 = vpop.f32.mrb[0].mxu0
        %1720 = vdwg.mxu0
        %vm1721 = vcmask 64512
        %1722 = vst.msk [vmem:[%s377] sm:$0xff] %vm1721, %v1603
        %1723 = vst.msk [vmem:[%s377 + $0x8] sm:$0xff] %vm1721, %v1608
        %1724 = vst.msk [vmem:[%s377 + $0x10] sm:$0xff] %vm1721, %v1613
        %1725 = vst.msk [vmem:[%s377 + $0x18] sm:$0xff] %vm1721, %v1618
        %1726 = vst.msk [vmem:[%s377 + $0x20] sm:$0xff] %vm1721, %v1623
        %1727 = vst.msk [vmem:[%s377 + $0x28] sm:$0xff] %vm1721, %v1628
        %1728 = vst.msk [vmem:[%s377 + $0x30] sm:$0xff] %vm1721, %v1633
        %1729 = vst.msk [vmem:[%s377 + $0x38] sm:$0xff] %vm1721, %v1638
        %1730 = vst.msk [vmem:[%s377 + $0x40] sm:$0xff] %vm1721, %v1643
        %1731 = vst.msk [vmem:[%s377 + $0x48] sm:$0xff] %vm1721, %v1648
        %1732 = vst.msk [vmem:[%s377 + $0x50] sm:$0xff] %vm1721, %v1653
        %1733 = vst.msk [vmem:[%s377 + $0x58] sm:$0xff] %vm1721, %v1658
        %1734 = vst.msk [vmem:[%s377 + $0x60] sm:$0xff] %vm1721, %v1663
        %1735 = vst.msk [vmem:[%s377 + $0x68] sm:$0xff] %vm1721, %v1668
        %1736 = vst.msk [vmem:[%s377 + $0x70] sm:$0xff] %vm1721, %v1673
        %1737 = vst.msk [vmem:[%s377 + $0x78] sm:$0xff] %vm1721, %v1678
        %1738 = vst.msk [vmem:[%s377 + $0x80] sm:$0xff] %vm1721, %v1683
        %1739 = vst.msk [vmem:[%s377 + $0x88] sm:$0xff] %vm1721, %v1688
        %1740 = vst.msk [vmem:[%s377 + $0x90] sm:$0xff] %vm1721, %v1693
        %1741 = vst.msk [vmem:[%s377 + $0x98] sm:$0xff] %vm1721, %v1698
        %1742 = vst.msk [vmem:[%s377 + $0xa0] sm:$0xff] %vm1721, %v1703
        %1743 = vst.msk [vmem:[%s377 + $0xa8] sm:$0xff] %vm1721, %v1708
        %1744 = vst.msk [vmem:[%s377 + $0xb0] sm:$0xff] %vm1721, %v1713
        %1745 = vst.msk [vmem:[%s377 + $0xb8] sm:$0xff] %vm1721, %v1718
        %v1746 = vsel %vm638, 1, 0
        %v1747 = vsel %vm639, 1, 0
        %v1748 = vsel %vm640, 1, 0
        %v1749 = vsel %vm641, 1, 0
        %v1750 = vsel %vm642, 1, 0
        %v1751 = vsel %vm643, 1, 0
        %v1752 = vsel %vm644, 1, 0
        %v1753 = vsel %vm645, 1, 0
        %v1754 = vsel %vm646, 1, 0
        %v1755 = vsel %vm647, 1, 0
        %v1756 = vsel %vm648, 1, 0
        %v1757 = vsel %vm649, 1, 0
        %v1758 = vsel %vm650, 1, 0
        %v1759 = vsel %vm651, 1, 0
        %v1760 = vsel %vm652, 1, 0
        %v1761 = vsel %vm653, 1, 0
        %v1762 = vsel %vm654, 1, 0
        %v1763 = vsel %vm655, 1, 0
        %v1764 = vsel %vm656, 1, 0
        %v1765 = vsel %vm657, 1, 0
        %v1766 = vsel %vm658, 1, 0
        %v1767 = vsel %vm659, 1, 0
        %v1768 = vsel %vm660, 1, 0
        %v1769 = vsel %vm661, 1, 0
        %vm1770 = vcmp.eq.s32.totalorder %v1746, 1
        %vm1771 = vcmp.eq.s32.totalorder %v1747, 1
        %vm1772 = vcmp.eq.s32.totalorder %v1748, 1
        %vm1773 = vcmp.eq.s32.totalorder %v1749, 1
        %vm1774 = vcmp.eq.s32.totalorder %v1750, 1
        %vm1775 = vcmp.eq.s32.totalorder %v1751, 1
        %vm1776 = vcmp.eq.s32.totalorder %v1752, 1
        %vm1777 = vcmp.eq.s32.totalorder %v1753, 1
        %vm1778 = vcmp.eq.s32.totalorder %v1754, 1
        %vm1779 = vcmp.eq.s32.totalorder %v1755, 1
        %vm1780 = vcmp.eq.s32.totalorder %v1756, 1
        %vm1781 = vcmp.eq.s32.totalorder %v1757, 1
        %vm1782 = vcmp.eq.s32.totalorder %v1758, 1
        %vm1783 = vcmp.eq.s32.totalorder %v1759, 1
        %vm1784 = vcmp.eq.s32.totalorder %v1760, 1
        %vm1785 = vcmp.eq.s32.totalorder %v1761, 1
        %vm1786 = vcmp.eq.s32.totalorder %v1762, 1
        %vm1787 = vcmp.eq.s32.totalorder %v1763, 1
        %vm1788 = vcmp.eq.s32.totalorder %v1764, 1
        %vm1789 = vcmp.eq.s32.totalorder %v1765, 1
        %vm1790 = vcmp.eq.s32.totalorder %v1766, 1
        %vm1791 = vcmp.eq.s32.totalorder %v1767, 1
        %vm1792 = vcmp.eq.s32.totalorder %v1768, 1
        %vm1793 = vcmp.eq.s32.totalorder %v1769, 1
        %v1794 = vsel %vm1770, %v1603, 0.0
        %v1795 = vsel %vm1771, %v1608, 0.0
        %v1796 = vsel %vm1772, %v1613, 0.0
        %v1797 = vsel %vm1773, %v1618, 0.0
        %v1798 = vsel %vm1774, %v1623, 0.0
        %v1799 = vsel %vm1775, %v1628, 0.0
        %v1800 = vsel %vm1776, %v1633, 0.0
        %v1801 = vsel %vm1777, %v1638, 0.0
        %v1802 = vsel %vm1778, %v1643, 0.0
        %v1803 = vsel %vm1779, %v1648, 0.0
        %v1804 = vsel %vm1780, %v1653, 0.0
        %v1805 = vsel %vm1781, %v1658, 0.0
        %v1806 = vsel %vm1782, %v1663, 0.0
        %v1807 = vsel %vm1783, %v1668, 0.0
        %v1808 = vsel %vm1784, %v1673, 0.0
        %v1809 = vsel %vm1785, %v1678, 0.0
        %v1810 = vsel %vm1786, %v1683, 0.0
        %v1811 = vsel %vm1787, %v1688, 0.0
        %v1812 = vsel %vm1788, %v1693, 0.0
        %v1813 = vsel %vm1789, %v1698, 0.0
        %v1814 = vsel %vm1790, %v1703, 0.0
        %v1815 = vsel %vm1791, %v1708, 0.0
        %v1816 = vsel %vm1792, %v1713, 0.0
        %v1817 = vsel %vm1793, %v1718, 0.0
        %v1818 = vsel %vm1721, %v1794, 0.0
        %v1819 = vsel %vm1721, %v1795, 0.0
        %v1820 = vadd.f32 %v1818, %v1819
        %v1821 = vsel %vm1721, %v1796, 0.0
        %v1822 = vadd.f32 %v1820, %v1821
        %v1823 = vsel %vm1721, %v1797, 0.0
        %v1824 = vadd.f32 %v1822, %v1823
        %v1825 = vsel %vm1721, %v1798, 0.0
        %v1826 = vadd.f32 %v1824, %v1825
        %v1827 = vsel %vm1721, %v1799, 0.0
        %v1828 = vadd.f32 %v1826, %v1827
        %v1829 = vsel %vm1721, %v1800, 0.0
        %v1830 = vadd.f32 %v1828, %v1829
        %v1831 = vsel %vm1721, %v1801, 0.0
        %v1832 = vadd.f32 %v1830, %v1831
        %v1833 = vsel %vm1721, %v1802, 0.0
        %v1834 = vadd.f32 %v1832, %v1833
        %v1835 = vsel %vm1721, %v1803, 0.0
        %v1836 = vadd.f32 %v1834, %v1835
        %v1837 = vsel %vm1721, %v1804, 0.0
        %v1838 = vadd.f32 %v1836, %v1837
        %v1839 = vsel %vm1721, %v1805, 0.0
        %v1840 = vadd.f32 %v1838, %v1839
        %v1841 = vsel %vm1721, %v1806, 0.0
        %v1842 = vadd.f32 %v1840, %v1841
        %v1843 = vsel %vm1721, %v1807, 0.0
        %v1844 = vadd.f32 %v1842, %v1843
        %v1845 = vsel %vm1721, %v1808, 0.0
        %v1846 = vadd.f32 %v1844, %v1845
        %v1847 = vsel %vm1721, %v1809, 0.0
        %v1848 = vadd.f32 %v1846, %v1847
        %v1849 = vsel %vm1721, %v1810, 0.0
        %v1850 = vadd.f32 %v1848, %v1849
        %v1851 = vsel %vm1721, %v1811, 0.0
        %v1852 = vadd.f32 %v1850, %v1851
        %v1853 = vsel %vm1721, %v1812, 0.0
        %v1854 = vadd.f32 %v1852, %v1853
        %v1855 = vsel %vm1721, %v1813, 0.0
        %v1856 = vadd.f32 %v1854, %v1855
        %v1857 = vsel %vm1721, %v1814, 0.0
        %v1858 = vadd.f32 %v1856, %v1857
        %v1859 = vsel %vm1721, %v1815, 0.0
        %v1860 = vadd.f32 %v1858, %v1859
        %v1861 = vsel %vm1721, %v1816, 0.0
        %v1862 = vadd.f32 %v1860, %v1861
        %v1863 = vsel %vm1721, %v1817, 0.0
        %v1864 = vadd.f32 %v1862, %v1863
        %v1865 = vrot.slane %v1864, 4
        %v1866 = vadd.f32 %v1864, %v1865
        %v1867 = vrot.slane %v1866, 2
        %v1868 = vadd.f32 %v1866, %v1867
        %v1869 = vrot.slane %v1868, 1
        %v1870 = vadd.f32 %v1868, %v1869
        %v1871 = vadd.f32 %v1870, 0.0
        %v1872 = vmul.f32 %v1794, %v1794
        %v1873 = vmul.f32 %v1795, %v1795
        %v1874 = vmul.f32 %v1796, %v1796
        %v1875 = vmul.f32 %v1797, %v1797
        %v1876 = vmul.f32 %v1798, %v1798
        %v1877 = vmul.f32 %v1799, %v1799
        %v1878 = vmul.f32 %v1800, %v1800
        %v1879 = vmul.f32 %v1801, %v1801
        %v1880 = vmul.f32 %v1802, %v1802
        %v1881 = vmul.f32 %v1803, %v1803
        %v1882 = vmul.f32 %v1804, %v1804
        %v1883 = vmul.f32 %v1805, %v1805
        %v1884 = vmul.f32 %v1806, %v1806
        %v1885 = vmul.f32 %v1807, %v1807
        %v1886 = vmul.f32 %v1808, %v1808
        %v1887 = vmul.f32 %v1809, %v1809
        %v1888 = vmul.f32 %v1810, %v1810
        %v1889 = vmul.f32 %v1811, %v1811
        %v1890 = vmul.f32 %v1812, %v1812
        %v1891 = vmul.f32 %v1813, %v1813
        %v1892 = vmul.f32 %v1814, %v1814
        %v1893 = vmul.f32 %v1815, %v1815
        %v1894 = vmul.f32 %v1816, %v1816
        %v1895 = vmul.f32 %v1817, %v1817
        %v1896 = vsel %vm1721, %v1872, 0.0
        %v1897 = vsel %vm1721, %v1873, 0.0
        %v1898 = vadd.f32 %v1896, %v1897
        %v1899 = vsel %vm1721, %v1874, 0.0
        %v1900 = vadd.f32 %v1898, %v1899
        %v1901 = vsel %vm1721, %v1875, 0.0
        %v1902 = vadd.f32 %v1900, %v1901
        %v1903 = vsel %vm1721, %v1876, 0.0
        %v1904 = vadd.f32 %v1902, %v1903
        %v1905 = vsel %vm1721, %v1877, 0.0
        %v1906 = vadd.f32 %v1904, %v1905
        %v1907 = vsel %vm1721, %v1878, 0.0
        %v1908 = vadd.f32 %v1906, %v1907
        %v1909 = vsel %vm1721, %v1879, 0.0
        %v1910 = vadd.f32 %v1908, %v1909
        %v1911 = vsel %vm1721, %v1880, 0.0
        %v1912 = vadd.f32 %v1910, %v1911
        %v1913 = vsel %vm1721, %v1881, 0.0
        %v1914 = vadd.f32 %v1912, %v1913
        %v1915 = vsel %vm1721, %v1882, 0.0
        %v1916 = vadd.f32 %v1914, %v1915
        %v1917 = vsel %vm1721, %v1883, 0.0
        %v1918 = vadd.f32 %v1916, %v1917
        %v1919 = vsel %vm1721, %v1884, 0.0
        %v1920 = vadd.f32 %v1918, %v1919
        %v1921 = vsel %vm1721, %v1885, 0.0
        %v1922 = vadd.f32 %v1920, %v1921
        %v1923 = vsel %vm1721, %v1886, 0.0
        %v1924 = vadd.f32 %v1922, %v1923
        %v1925 = vsel %vm1721, %v1887, 0.0
        %v1926 = vadd.f32 %v1924, %v1925
        %v1927 = vsel %vm1721, %v1888, 0.0
        %v1928 = vadd.f32 %v1926, %v1927
        %v1929 = vsel %vm1721, %v1889, 0.0
        %v1930 = vadd.f32 %v1928, %v1929
        %v1931 = vsel %vm1721, %v1890, 0.0
        %v1932 = vadd.f32 %v1930, %v1931
        %v1933 = vsel %vm1721, %v1891, 0.0
        %v1934 = vadd.f32 %v1932, %v1933
        %v1935 = vsel %vm1721, %v1892, 0.0
        %v1936 = vadd.f32 %v1934, %v1935
        %v1937 = vsel %vm1721, %v1893, 0.0
        %v1938 = vadd.f32 %v1936, %v1937
        %v1939 = vsel %vm1721, %v1894, 0.0
        %v1940 = vadd.f32 %v1938, %v1939
        %v1941 = vsel %vm1721, %v1895, 0.0
        %v1942 = vadd.f32 %v1940, %v1941
        %v1943 = vrot.slane %v1942, 4
        %v1944 = vadd.f32 %v1942, %v1943
        %v1945 = vrot.slane %v1944, 2
        %v1946 = vadd.f32 %v1944, %v1945
        %v1947 = vrot.slane %v1946, 1
        %v1948 = vadd.f32 %v1946, %v1947
        %v1949 = vadd.f32 %v1948, 0.0
        %v1950 = vld [vmem:[#allocation2 + $0x1] sm:$0xff]
        %v1951 = vld [vmem:[#allocation2 + $0x9] sm:$0xff]
        %v1952 = vld [vmem:[#allocation2 + $0x19] sm:$0xff]
        %v1953 = vld [vmem:[#allocation2 + $0x21] sm:$0xff]
        %v1954 = vld [vmem:[#allocation2 + $0x31] sm:$0xff]
        %v1955 = vld [vmem:[#allocation2 + $0x39] sm:$0xff]
        %v1956 = vld [vmem:[#allocation2 + $0x49] sm:$0xff]
        %v1957 = vld [vmem:[#allocation2 + $0x51] sm:$0xff]
        %v1958 = vld [vmem:[#allocation2 + $0x61] sm:$0xff]
        %v1959 = vld [vmem:[#allocation2 + $0x69] sm:$0xff]
        %v1960 = vld [vmem:[#allocation2 + $0x79] sm:$0xff]
        %v1961 = vld [vmem:[#allocation2 + $0x81] sm:$0xff]
        %v1962 = vld [vmem:[#allocation2 + $0x91] sm:$0xff]
        %v1963 = vld [vmem:[#allocation2 + $0x99] sm:$0xff]
        %v1964 = vld [vmem:[#allocation2 + $0xa9] sm:$0xff]
        %v1965 = vld [vmem:[#allocation2 + $0xb1] sm:$0xff]
        %v1966 = vld [vmem:[#allocation2 + $0xc1] sm:$0xff]
        %v1967 = vld [vmem:[#allocation2 + $0xc9] sm:$0xff]
        %v1968 = vld [vmem:[#allocation2 + $0xd9] sm:$0xff]
        %v1969 = vld [vmem:[#allocation2 + $0xe1] sm:$0xff]
        %v1970 = vld [vmem:[#allocation2 + $0xf1] sm:$0xff]
        %v1971 = vld [vmem:[#allocation2 + $0xf9] sm:$0xff]
        %v1972 = vld [vmem:[#allocation2 + $0x109] sm:$0xff]
        %v1973 = vld [vmem:[#allocation2 + $0x111] sm:$0xff]
        %1974 = vst.msk [vmem:[#allocation3] sm:$0xff] %vm471, %v1950
        %1975 = vst.msk [vmem:[#allocation3 + $0x8] sm:$0xff] %vm471, %v1951
        %1976 = vst.msk [vmem:[#allocation3 + $0x10] sm:$0xff] %vm471, %v1952
        %1977 = vst.msk [vmem:[#allocation3 + $0x18] sm:$0xff] %vm471, %v1953
        %1978 = vst.msk [vmem:[#allocation3 + $0x20] sm:$0xff] %vm471, %v1954
        %1979 = vst.msk [vmem:[#allocation3 + $0x28] sm:$0xff] %vm471, %v1955
        %1980 = vst.msk [vmem:[#allocation3 + $0x30] sm:$0xff] %vm471, %v1956
        %1981 = vst.msk [vmem:[#allocation3 + $0x38] sm:$0xff] %vm471, %v1957
        %1982 = vst.msk [vmem:[#allocation3 + $0x40] sm:$0xff] %vm471, %v1958
        %1983 = vst.msk [vmem:[#allocation3 + $0x48] sm:$0xff] %vm471, %v1959
        %1984 = vst.msk [vmem:[#allocation3 + $0x50] sm:$0xff] %vm471, %v1960
        %1985 = vst.msk [vmem:[#allocation3 + $0x58] sm:$0xff] %vm471, %v1961
        %1986 = vst.msk [vmem:[#allocation3 + $0x60] sm:$0xff] %vm471, %v1962
        %1987 = vst.msk [vmem:[#allocation3 + $0x68] sm:$0xff] %vm471, %v1963
        %1988 = vst.msk [vmem:[#allocation3 + $0x70] sm:$0xff] %vm471, %v1964
        %1989 = vst.msk [vmem:[#allocation3 + $0x78] sm:$0xff] %vm471, %v1965
        %1990 = vst.msk [vmem:[#allocation3 + $0x80] sm:$0xff] %vm471, %v1966
        %1991 = vst.msk [vmem:[#allocation3 + $0x88] sm:$0xff] %vm471, %v1967
        %1992 = vst.msk [vmem:[#allocation3 + $0x90] sm:$0xff] %vm471, %v1968
        %1993 = vst.msk [vmem:[#allocation3 + $0x98] sm:$0xff] %vm471, %v1969
        %1994 = vst.msk [vmem:[#allocation3 + $0xa0] sm:$0xff] %vm471, %v1970
        %1995 = vst.msk [vmem:[#allocation3 + $0xa8] sm:$0xff] %vm471, %v1971
        %1996 = vst.msk [vmem:[#allocation3 + $0xb0] sm:$0xff] %vm471, %v1972
        %1997 = vst.msk [vmem:[#allocation3 + $0xb8] sm:$0xff] %vm471, %v1973
        %v1998 = vld [vmem:[#allocation2 + $0x2] sm:$0xff]
        %v1999 = vld [vmem:[#allocation2 + $0xa] sm:$0xff]
        %v2000 = vld [vmem:[#allocation2 + $0x1a] sm:$0xff]
        %v2001 = vld [vmem:[#allocation2 + $0x22] sm:$0xff]
        %v2002 = vld [vmem:[#allocation2 + $0x32] sm:$0xff]
        %v2003 = vld [vmem:[#allocation2 + $0x3a] sm:$0xff]
        %v2004 = vld [vmem:[#allocation2 + $0x4a] sm:$0xff]
        %v2005 = vld [vmem:[#allocation2 + $0x52] sm:$0xff]
        %v2006 = vld [vmem:[#allocation2 + $0x62] sm:$0xff]
        %v2007 = vld [vmem:[#allocation2 + $0x6a] sm:$0xff]
        %v2008 = vld [vmem:[#allocation2 + $0x7a] sm:$0xff]
        %v2009 = vld [vmem:[#allocation2 + $0x82] sm:$0xff]
        %v2010 = vld [vmem:[#allocation2 + $0x92] sm:$0xff]
        %v2011 = vld [vmem:[#allocation2 + $0x9a] sm:$0xff]
        %v2012 = vld [vmem:[#allocation2 + $0xaa] sm:$0xff]
        %v2013 = vld [vmem:[#allocation2 + $0xb2] sm:$0xff]
        %v2014 = vld [vmem:[#allocation2 + $0xc2] sm:$0xff]
        %v2015 = vld [vmem:[#allocation2 + $0xca] sm:$0xff]
        %v2016 = vld [vmem:[#allocation2 + $0xda] sm:$0xff]
        %v2017 = vld [vmem:[#allocation2 + $0xe2] sm:$0xff]
        %v2018 = vld [vmem:[#allocation2 + $0xf2] sm:$0xff]
        %v2019 = vld [vmem:[#allocation2 + $0xfa] sm:$0xff]
        %v2020 = vld [vmem:[#allocation2 + $0x10a] sm:$0xff]
        %v2021 = vld [vmem:[#allocation2 + $0x112] sm:$0xff]
        %2046 = vrot.lane.b32.xlu0 %v1998, 4
        %v2047 = vpop.permute.xlu0 %2046
        %2048 = vrot.lane.b32.xlu0 %v1999, 4
        %v2049 = vpop.permute.xlu0 %2048
        %2050 = vrot.lane.b32.xlu0 %v2000, 4
        %v2051 = vpop.permute.xlu0 %2050
        %2052 = vrot.lane.b32.xlu0 %v2001, 4
        %v2053 = vpop.permute.xlu0 %2052
        %2054 = vrot.lane.b32.xlu0 %v2002, 4
        %v2055 = vpop.permute.xlu0 %2054
        %2056 = vrot.lane.b32.xlu0 %v2003, 4
        %v2057 = vpop.permute.xlu0 %2056
        %2058 = vrot.lane.b32.xlu0 %v2004, 4
        %v2059 = vpop.permute.xlu0 %2058
        %2060 = vrot.lane.b32.xlu0 %v2005, 4
        %v2061 = vpop.permute.xlu0 %2060
        %2062 = vrot.lane.b32.xlu0 %v2006, 4
        %v2063 = vpop.permute.xlu0 %2062
        %2064 = vrot.lane.b32.xlu0 %v2007, 4
        %v2065 = vpop.permute.xlu0 %2064
        %2066 = vrot.lane.b32.xlu0 %v2008, 4
        %v2067 = vpop.permute.xlu0 %2066
        %2068 = vrot.lane.b32.xlu0 %v2009, 4
        %v2069 = vpop.permute.xlu0 %2068
        %2070 = vrot.lane.b32.xlu0 %v2010, 4
        %v2071 = vpop.permute.xlu0 %2070
        %2072 = vrot.lane.b32.xlu0 %v2011, 4
        %v2073 = vpop.permute.xlu0 %2072
        %2074 = vrot.lane.b32.xlu0 %v2012, 4
        %v2075 = vpop.permute.xlu0 %2074
        %2076 = vrot.lane.b32.xlu0 %v2013, 4
        %v2077 = vpop.permute.xlu0 %2076
        %2078 = vrot.lane.b32.xlu0 %v2014, 4
        %v2079 = vpop.permute.xlu0 %2078
        %2080 = vrot.lane.b32.xlu0 %v2015, 4
        %v2081 = vpop.permute.xlu0 %2080
        %2082 = vrot.lane.b32.xlu0 %v2016, 4
        %v2083 = vpop.permute.xlu0 %2082
        %2084 = vrot.lane.b32.xlu0 %v2017, 4
        %v2085 = vpop.permute.xlu0 %2084
        %2086 = vrot.lane.b32.xlu0 %v2018, 4
        %v2087 = vpop.permute.xlu0 %2086
        %2088 = vrot.lane.b32.xlu0 %v2019, 4
        %v2089 = vpop.permute.xlu0 %2088
        %2090 = vrot.lane.b32.xlu0 %v2020, 4
        %v2091 = vpop.permute.xlu0 %2090
        %2092 = vrot.lane.b32.xlu0 %v2021, 4
        %v2093 = vpop.permute.xlu0 %2092
        %2118 = vst.msk [vmem:[#allocation3] sm:$0xff] %vm830, %v2047
        %2119 = vst.msk [vmem:[#allocation3 + $0x8] sm:$0xff] %vm830, %v2049
        %2120 = vst.msk [vmem:[#allocation3 + $0x10] sm:$0xff] %vm830, %v2051
        %2121 = vst.msk [vmem:[#allocation3 + $0x18] sm:$0xff] %vm830, %v2053
        %2122 = vst.msk [vmem:[#allocation3 + $0x20] sm:$0xff] %vm830, %v2055
        %2123 = vst.msk [vmem:[#allocation3 + $0x28] sm:$0xff] %vm830, %v2057
        %2124 = vst.msk [vmem:[#allocation3 + $0x30] sm:$0xff] %vm830, %v2059
        %2125 = vst.msk [vmem:[#allocation3 + $0x38] sm:$0xff] %vm830, %v2061
        %2126 = vst.msk [vmem:[#allocation3 + $0x40] sm:$0xff] %vm830, %v2063
        %2127 = vst.msk [vmem:[#allocation3 + $0x48] sm:$0xff] %vm830, %v2065
        %2128 = vst.msk [vmem:[#allocation3 + $0x50] sm:$0xff] %vm830, %v2067
        %2129 = vst.msk [vmem:[#allocation3 + $0x58] sm:$0xff] %vm830, %v2069
        %2130 = vst.msk [vmem:[#allocation3 + $0x60] sm:$0xff] %vm830, %v2071
        %2131 = vst.msk [vmem:[#allocation3 + $0x68] sm:$0xff] %vm830, %v2073
        %2132 = vst.msk [vmem:[#allocation3 + $0x70] sm:$0xff] %vm830, %v2075
        %2133 = vst.msk [vmem:[#allocation3 + $0x78] sm:$0xff] %vm830, %v2077
        %2134 = vst.msk [vmem:[#allocation3 + $0x80] sm:$0xff] %vm830, %v2079
        %2135 = vst.msk [vmem:[#allocation3 + $0x88] sm:$0xff] %vm830, %v2081
        %2136 = vst.msk [vmem:[#allocation3 + $0x90] sm:$0xff] %vm830, %v2083
        %2137 = vst.msk [vmem:[#allocation3 + $0x98] sm:$0xff] %vm830, %v2085
        %2138 = vst.msk [vmem:[#allocation3 + $0xa0] sm:$0xff] %vm830, %v2087
        %2139 = vst.msk [vmem:[#allocation3 + $0xa8] sm:$0xff] %vm830, %v2089
        %2140 = vst.msk [vmem:[#allocation3 + $0xb0] sm:$0xff] %vm830, %v2091
        %2141 = vst.msk [vmem:[#allocation3 + $0xb8] sm:$0xff] %vm830, %v2093
        %v2142 = vld [vmem:[%s564 + $0x1] sm:$0xff]
        %v2143 = vld [vmem:[%s564 + $0x9] sm:$0xff]
        %v2144 = vld [vmem:[%s564 + $0x19] sm:$0xff]
        %v2145 = vld [vmem:[%s564 + $0x21] sm:$0xff]
        %v2146 = vld [vmem:[%s564 + $0x31] sm:$0xff]
        %v2147 = vld [vmem:[%s564 + $0x39] sm:$0xff]
        %v2148 = vld [vmem:[%s564 + $0x49] sm:$0xff]
        %v2149 = vld [vmem:[%s564 + $0x51] sm:$0xff]
        %v2150 = vld [vmem:[%s564 + $0x61] sm:$0xff]
        %v2151 = vld [vmem:[%s564 + $0x69] sm:$0xff]
        %v2152 = vld [vmem:[%s564 + $0x79] sm:$0xff]
        %v2153 = vld [vmem:[%s564 + $0x81] sm:$0xff]
        %v2154 = vld [vmem:[%s564 + $0x91] sm:$0xff]
        %v2155 = vld [vmem:[%s564 + $0x99] sm:$0xff]
        %v2156 = vld [vmem:[%s564 + $0xa9] sm:$0xff]
        %v2157 = vld [vmem:[%s564 + $0xb1] sm:$0xff]
        %v2158 = vld [vmem:[%s564 + $0xc1] sm:$0xff]
        %v2159 = vld [vmem:[%s564 + $0xc9] sm:$0xff]
        %v2160 = vld [vmem:[%s564 + $0xd9] sm:$0xff]
        %v2161 = vld [vmem:[%s564 + $0xe1] sm:$0xff]
        %v2162 = vld [vmem:[%s564 + $0xf1] sm:$0xff]
        %v2163 = vld [vmem:[%s564 + $0xf9] sm:$0xff]
        %v2164 = vld [vmem:[%s564 + $0x109] sm:$0xff]
        %v2165 = vld [vmem:[%s564 + $0x111] sm:$0xff]
        %2190 = vrot.lane.b32.xlu0 %v2142, 8
        %v2191 = vpop.permute.xlu0 %2190
        %2192 = vrot.lane.b32.xlu0 %v2143, 8
        %v2193 = vpop.permute.xlu0 %2192
        %2194 = vrot.lane.b32.xlu0 %v2144, 8
        %v2195 = vpop.permute.xlu0 %2194
        %2196 = vrot.lane.b32.xlu0 %v2145, 8
        %v2197 = vpop.permute.xlu0 %2196
        %2198 = vrot.lane.b32.xlu0 %v2146, 8
        %v2199 = vpop.permute.xlu0 %2198
        %2200 = vrot.lane.b32.xlu0 %v2147, 8
        %v2201 = vpop.permute.xlu0 %2200
        %2202 = vrot.lane.b32.xlu0 %v2148, 8
        %v2203 = vpop.permute.xlu0 %2202
        %2204 = vrot.lane.b32.xlu0 %v2149, 8
        %v2205 = vpop.permute.xlu0 %2204
        %2206 = vrot.lane.b32.xlu0 %v2150, 8
        %v2207 = vpop.permute.xlu0 %2206
        %2208 = vrot.lane.b32.xlu0 %v2151, 8
        %v2209 = vpop.permute.xlu0 %2208
        %2210 = vrot.lane.b32.xlu0 %v2152, 8
        %v2211 = vpop.permute.xlu0 %2210
        %2212 = vrot.lane.b32.xlu0 %v2153, 8
        %v2213 = vpop.permute.xlu0 %2212
        %2214 = vrot.lane.b32.xlu0 %v2154, 8
        %v2215 = vpop.permute.xlu0 %2214
        %2216 = vrot.lane.b32.xlu0 %v2155, 8
        %v2217 = vpop.permute.xlu0 %2216
        %2218 = vrot.lane.b32.xlu0 %v2156, 8
        %v2219 = vpop.permute.xlu0 %2218
        %2220 = vrot.lane.b32.xlu0 %v2157, 8
        %v2221 = vpop.permute.xlu0 %2220
        %2222 = vrot.lane.b32.xlu0 %v2158, 8
        %v2223 = vpop.permute.xlu0 %2222
        %2224 = vrot.lane.b32.xlu0 %v2159, 8
        %v2225 = vpop.permute.xlu0 %2224
        %2226 = vrot.lane.b32.xlu0 %v2160, 8
        %v2227 = vpop.permute.xlu0 %2226
        %2228 = vrot.lane.b32.xlu0 %v2161, 8
        %v2229 = vpop.permute.xlu0 %2228
        %2230 = vrot.lane.b32.xlu0 %v2162, 8
        %v2231 = vpop.permute.xlu0 %2230
        %2232 = vrot.lane.b32.xlu0 %v2163, 8
        %v2233 = vpop.permute.xlu0 %2232
        %2234 = vrot.lane.b32.xlu0 %v2164, 8
        %v2235 = vpop.permute.xlu0 %2234
        %2236 = vrot.lane.b32.xlu0 %v2165, 8
        %v2237 = vpop.permute.xlu0 %2236
        %2262 = vst.msk [vmem:[#allocation3] sm:$0xff] %vm975, %v2191
        %2263 = vst.msk [vmem:[#allocation3 + $0x8] sm:$0xff] %vm975, %v2193
        %2264 = vst.msk [vmem:[#allocation3 + $0x10] sm:$0xff] %vm975, %v2195
        %2265 = vst.msk [vmem:[#allocation3 + $0x18] sm:$0xff] %vm975, %v2197
        %2266 = vst.msk [vmem:[#allocation3 + $0x20] sm:$0xff] %vm975, %v2199
        %2267 = vst.msk [vmem:[#allocation3 + $0x28] sm:$0xff] %vm975, %v2201
        %2268 = vst.msk [vmem:[#allocation3 + $0x30] sm:$0xff] %vm975, %v2203
        %2269 = vst.msk [vmem:[#allocation3 + $0x38] sm:$0xff] %vm975, %v2205
        %2270 = vst.msk [vmem:[#allocation3 + $0x40] sm:$0xff] %vm975, %v2207
        %2271 = vst.msk [vmem:[#allocation3 + $0x48] sm:$0xff] %vm975, %v2209
        %2272 = vst.msk [vmem:[#allocation3 + $0x50] sm:$0xff] %vm975, %v2211
        %2273 = vst.msk [vmem:[#allocation3 + $0x58] sm:$0xff] %vm975, %v2213
        %2274 = vst.msk [vmem:[#allocation3 + $0x60] sm:$0xff] %vm975, %v2215
        %2275 = vst.msk [vmem:[#allocation3 + $0x68] sm:$0xff] %vm975, %v2217
        %2276 = vst.msk [vmem:[#allocation3 + $0x70] sm:$0xff] %vm975, %v2219
        %2277 = vst.msk [vmem:[#allocation3 + $0x78] sm:$0xff] %vm975, %v2221
        %2278 = vst.msk [vmem:[#allocation3 + $0x80] sm:$0xff] %vm975, %v2223
        %2279 = vst.msk [vmem:[#allocation3 + $0x88] sm:$0xff] %vm975, %v2225
        %2280 = vst.msk [vmem:[#allocation3 + $0x90] sm:$0xff] %vm975, %v2227
        %2281 = vst.msk [vmem:[#allocation3 + $0x98] sm:$0xff] %vm975, %v2229
        %2282 = vst.msk [vmem:[#allocation3 + $0xa0] sm:$0xff] %vm975, %v2231
        %2283 = vst.msk [vmem:[#allocation3 + $0xa8] sm:$0xff] %vm975, %v2233
        %2284 = vst.msk [vmem:[#allocation3 + $0xb0] sm:$0xff] %vm975, %v2235
        %2285 = vst.msk [vmem:[#allocation3 + $0xb8] sm:$0xff] %vm975, %v2237
        %v2286 = vld [vmem:[%s564 + $0x2] sm:$0xff]
        %v2287 = vld [vmem:[%s564 + $0xa] sm:$0xff]
        %v2288 = vld [vmem:[%s564 + $0x1a] sm:$0xff]
        %v2289 = vld [vmem:[%s564 + $0x22] sm:$0xff]
        %v2290 = vld [vmem:[%s564 + $0x32] sm:$0xff]
        %v2291 = vld [vmem:[%s564 + $0x3a] sm:$0xff]
        %v2292 = vld [vmem:[%s564 + $0x4a] sm:$0xff]
        %v2293 = vld [vmem:[%s564 + $0x52] sm:$0xff]
        %v2294 = vld [vmem:[%s564 + $0x62] sm:$0xff]
        %v2295 = vld [vmem:[%s564 + $0x6a] sm:$0xff]
        %v2296 = vld [vmem:[%s564 + $0x7a] sm:$0xff]
        %v2297 = vld [vmem:[%s564 + $0x82] sm:$0xff]
        %v2298 = vld [vmem:[%s564 + $0x92] sm:$0xff]
        %v2299 = vld [vmem:[%s564 + $0x9a] sm:$0xff]
        %v2300 = vld [vmem:[%s564 + $0xaa] sm:$0xff]
        %v2301 = vld [vmem:[%s564 + $0xb2] sm:$0xff]
        %v2302 = vld [vmem:[%s564 + $0xc2] sm:$0xff]
        %v2303 = vld [vmem:[%s564 + $0xca] sm:$0xff]
        %v2304 = vld [vmem:[%s564 + $0xda] sm:$0xff]
        %v2305 = vld [vmem:[%s564 + $0xe2] sm:$0xff]
        %v2306 = vld [vmem:[%s564 + $0xf2] sm:$0xff]
        %v2307 = vld [vmem:[%s564 + $0xfa] sm:$0xff]
        %v2308 = vld [vmem:[%s564 + $0x10a] sm:$0xff]
        %v2309 = vld [vmem:[%s564 + $0x112] sm:$0xff]
        %2334 = vrot.lane.b32.xlu0 %v2286, 12
        %v2335 = vpop.permute.xlu0 %2334
        %2336 = vrot.lane.b32.xlu0 %v2287, 12
        %v2337 = vpop.permute.xlu0 %2336
        %2338 = vrot.lane.b32.xlu0 %v2288, 12
        %v2339 = vpop.permute.xlu0 %2338
        %2340 = vrot.lane.b32.xlu0 %v2289, 12
        %v2341 = vpop.permute.xlu0 %2340
        %2342 = vrot.lane.b32.xlu0 %v2290, 12
        %v2343 = vpop.permute.xlu0 %2342
        %2344 = vrot.lane.b32.xlu0 %v2291, 12
        %v2345 = vpop.permute.xlu0 %2344
        %2346 = vrot.lane.b32.xlu0 %v2292, 12
        %v2347 = vpop.permute.xlu0 %2346
        %2348 = vrot.lane.b32.xlu0 %v2293, 12
        %v2349 = vpop.permute.xlu0 %2348
        %2350 = vrot.lane.b32.xlu0 %v2294, 12
        %v2351 = vpop.permute.xlu0 %2350
        %2352 = vrot.lane.b32.xlu0 %v2295, 12
        %v2353 = vpop.permute.xlu0 %2352
        %2354 = vrot.lane.b32.xlu0 %v2296, 12
        %v2355 = vpop.permute.xlu0 %2354
        %2356 = vrot.lane.b32.xlu0 %v2297, 12
        %v2357 = vpop.permute.xlu0 %2356
        %2358 = vrot.lane.b32.xlu0 %v2298, 12
        %v2359 = vpop.permute.xlu0 %2358
        %2360 = vrot.lane.b32.xlu0 %v2299, 12
        %v2361 = vpop.permute.xlu0 %2360
        %2362 = vrot.lane.b32.xlu0 %v2300, 12
        %v2363 = vpop.permute.xlu0 %2362
        %2364 = vrot.lane.b32.xlu0 %v2301, 12
        %v2365 = vpop.permute.xlu0 %2364
        %2366 = vrot.lane.b32.xlu0 %v2302, 12
        %v2367 = vpop.permute.xlu0 %2366
        %2368 = vrot.lane.b32.xlu0 %v2303, 12
        %v2369 = vpop.permute.xlu0 %2368
        %2370 = vrot.lane.b32.xlu0 %v2304, 12
        %v2371 = vpop.permute.xlu0 %2370
        %2372 = vrot.lane.b32.xlu0 %v2305, 12
        %v2373 = vpop.permute.xlu0 %2372
        %2374 = vrot.lane.b32.xlu0 %v2306, 12
        %v2375 = vpop.permute.xlu0 %2374
        %2376 = vrot.lane.b32.xlu0 %v2307, 12
        %v2377 = vpop.permute.xlu0 %2376
        %2378 = vrot.lane.b32.xlu0 %v2308, 12
        %v2379 = vpop.permute.xlu0 %2378
        %2380 = vrot.lane.b32.xlu0 %v2309, 12
        %v2381 = vpop.permute.xlu0 %2380
        %2406 = vst.msk [vmem:[#allocation3] sm:$0xff] %vm1120, %v2335
        %2407 = vst.msk [vmem:[#allocation3 + $0x8] sm:$0xff] %vm1120, %v2337
        %2408 = vst.msk [vmem:[#allocation3 + $0x10] sm:$0xff] %vm1120, %v2339
        %2409 = vst.msk [vmem:[#allocation3 + $0x18] sm:$0xff] %vm1120, %v2341
        %2410 = vst.msk [vmem:[#allocation3 + $0x20] sm:$0xff] %vm1120, %v2343
        %2411 = vst.msk [vmem:[#allocation3 + $0x28] sm:$0xff] %vm1120, %v2345
        %2412 = vst.msk [vmem:[#allocation3 + $0x30] sm:$0xff] %vm1120, %v2347
        %2413 = vst.msk [vmem:[#allocation3 + $0x38] sm:$0xff] %vm1120, %v2349
        %2414 = vst.msk [vmem:[#allocation3 + $0x40] sm:$0xff] %vm1120, %v2351
        %2415 = vst.msk [vmem:[#allocation3 + $0x48] sm:$0xff] %vm1120, %v2353
        %2416 = vst.msk [vmem:[#allocation3 + $0x50] sm:$0xff] %vm1120, %v2355
        %2417 = vst.msk [vmem:[#allocation3 + $0x58] sm:$0xff] %vm1120, %v2357
        %2418 = vst.msk [vmem:[#allocation3 + $0x60] sm:$0xff] %vm1120, %v2359
        %2419 = vst.msk [vmem:[#allocation3 + $0x68] sm:$0xff] %vm1120, %v2361
        %2420 = vst.msk [vmem:[#allocation3 + $0x70] sm:$0xff] %vm1120, %v2363
        %2421 = vst.msk [vmem:[#allocation3 + $0x78] sm:$0xff] %vm1120, %v2365
        %2422 = vst.msk [vmem:[#allocation3 + $0x80] sm:$0xff] %vm1120, %v2367
        %2423 = vst.msk [vmem:[#allocation3 + $0x88] sm:$0xff] %vm1120, %v2369
        %2424 = vst.msk [vmem:[#allocation3 + $0x90] sm:$0xff] %vm1120, %v2371
        %2425 = vst.msk [vmem:[#allocation3 + $0x98] sm:$0xff] %vm1120, %v2373
        %2426 = vst.msk [vmem:[#allocation3 + $0xa0] sm:$0xff] %vm1120, %v2375
        %2427 = vst.msk [vmem:[#allocation3 + $0xa8] sm:$0xff] %vm1120, %v2377
        %2428 = vst.msk [vmem:[#allocation3 + $0xb0] sm:$0xff] %vm1120, %v2379
        %2429 = vst.msk [vmem:[#allocation3 + $0xb8] sm:$0xff] %vm1120, %v2381
        %v2430 = vld [vmem:[%s1145 + $0x1] sm:$0xff]
        %v2431 = vld [vmem:[%s1145 + $0x9] sm:$0xff]
        %v2432 = vld [vmem:[%s1145 + $0x19] sm:$0xff]
        %v2433 = vld [vmem:[%s1145 + $0x21] sm:$0xff]
        %v2434 = vld [vmem:[%s1145 + $0x31] sm:$0xff]
        %v2435 = vld [vmem:[%s1145 + $0x39] sm:$0xff]
        %v2436 = vld [vmem:[%s1145 + $0x49] sm:$0xff]
        %v2437 = vld [vmem:[%s1145 + $0x51] sm:$0xff]
        %v2438 = vld [vmem:[%s1145 + $0x61] sm:$0xff]
        %v2439 = vld [vmem:[%s1145 + $0x69] sm:$0xff]
        %v2440 = vld [vmem:[%s1145 + $0x79] sm:$0xff]
        %v2441 = vld [vmem:[%s1145 + $0x81] sm:$0xff]
        %v2442 = vld [vmem:[%s1145 + $0x91] sm:$0xff]
        %v2443 = vld [vmem:[%s1145 + $0x99] sm:$0xff]
        %v2444 = vld [vmem:[%s1145 + $0xa9] sm:$0xff]
        %v2445 = vld [vmem:[%s1145 + $0xb1] sm:$0xff]
        %v2446 = vld [vmem:[%s1145 + $0xc1] sm:$0xff]
        %v2447 = vld [vmem:[%s1145 + $0xc9] sm:$0xff]
        %v2448 = vld [vmem:[%s1145 + $0xd9] sm:$0xff]
        %v2449 = vld [vmem:[%s1145 + $0xe1] sm:$0xff]
        %v2450 = vld [vmem:[%s1145 + $0xf1] sm:$0xff]
        %v2451 = vld [vmem:[%s1145 + $0xf9] sm:$0xff]
        %v2452 = vld [vmem:[%s1145 + $0x109] sm:$0xff]
        %v2453 = vld [vmem:[%s1145 + $0x111] sm:$0xff]
        %2478 = vrot.lane.b32.xlu0 %v2430, 16
        %v2479 = vpop.permute.xlu0 %2478
        %2480 = vrot.lane.b32.xlu0 %v2431, 16
        %v2481 = vpop.permute.xlu0 %2480
        %2482 = vrot.lane.b32.xlu0 %v2432, 16
        %v2483 = vpop.permute.xlu0 %2482
        %2484 = vrot.lane.b32.xlu0 %v2433, 16
        %v2485 = vpop.permute.xlu0 %2484
        %2486 = vrot.lane.b32.xlu0 %v2434, 16
        %v2487 = vpop.permute.xlu0 %2486
        %2488 = vrot.lane.b32.xlu0 %v2435, 16
        %v2489 = vpop.permute.xlu0 %2488
        %2490 = vrot.lane.b32.xlu0 %v2436, 16
        %v2491 = vpop.permute.xlu0 %2490
        %2492 = vrot.lane.b32.xlu0 %v2437, 16
        %v2493 = vpop.permute.xlu0 %2492
        %2494 = vrot.lane.b32.xlu0 %v2438, 16
        %v2495 = vpop.permute.xlu0 %2494
        %2496 = vrot.lane.b32.xlu0 %v2439, 16
        %v2497 = vpop.permute.xlu0 %2496
        %2498 = vrot.lane.b32.xlu0 %v2440, 16
        %v2499 = vpop.permute.xlu0 %2498
        %2500 = vrot.lane.b32.xlu0 %v2441, 16
        %v2501 = vpop.permute.xlu0 %2500
        %2502 = vrot.lane.b32.xlu0 %v2442, 16
        %v2503 = vpop.permute.xlu0 %2502
        %2504 = vrot.lane.b32.xlu0 %v2443, 16
        %v2505 = vpop.permute.xlu0 %2504
        %2506 = vrot.lane.b32.xlu0 %v2444, 16
        %v2507 = vpop.permute.xlu0 %2506
        %2508 = vrot.lane.b32.xlu0 %v2445, 16
        %v2509 = vpop.permute.xlu0 %2508
        %2510 = vrot.lane.b32.xlu0 %v2446, 16
        %v2511 = vpop.permute.xlu0 %2510
        %2512 = vrot.lane.b32.xlu0 %v2447, 16
        %v2513 = vpop.permute.xlu0 %2512
        %2514 = vrot.lane.b32.xlu0 %v2448, 16
        %v2515 = vpop.permute.xlu0 %2514
        %2516 = vrot.lane.b32.xlu0 %v2449, 16
        %v2517 = vpop.permute.xlu0 %2516
        %2518 = vrot.lane.b32.xlu0 %v2450, 16
        %v2519 = vpop.permute.xlu0 %2518
        %2520 = vrot.lane.b32.xlu0 %v2451, 16
        %v2521 = vpop.permute.xlu0 %2520
        %2522 = vrot.lane.b32.xlu0 %v2452, 16
        %v2523 = vpop.permute.xlu0 %2522
        %2524 = vrot.lane.b32.xlu0 %v2453, 16
        %v2525 = vpop.permute.xlu0 %2524
        %2550 = vst.msk [vmem:[#allocation3] sm:$0xff] %vm1266, %v2479
        %2551 = vst.msk [vmem:[#allocation3 + $0x8] sm:$0xff] %vm1266, %v2481
        %2552 = vst.msk [vmem:[#allocation3 + $0x10] sm:$0xff] %vm1266, %v2483
        %2553 = vst.msk [vmem:[#allocation3 + $0x18] sm:$0xff] %vm1266, %v2485
        %2554 = vst.msk [vmem:[#allocation3 + $0x20] sm:$0xff] %vm1266, %v2487
        %2555 = vst.msk [vmem:[#allocation3 + $0x28] sm:$0xff] %vm1266, %v2489
        %2556 = vst.msk [vmem:[#allocation3 + $0x30] sm:$0xff] %vm1266, %v2491
        %2557 = vst.msk [vmem:[#allocation3 + $0x38] sm:$0xff] %vm1266, %v2493
        %2558 = vst.msk [vmem:[#allocation3 + $0x40] sm:$0xff] %vm1266, %v2495
        %2559 = vst.msk [vmem:[#allocation3 + $0x48] sm:$0xff] %vm1266, %v2497
        %2560 = vst.msk [vmem:[#allocation3 + $0x50] sm:$0xff] %vm1266, %v2499
        %2561 = vst.msk [vmem:[#allocation3 + $0x58] sm:$0xff] %vm1266, %v2501
        %2562 = vst.msk [vmem:[#allocation3 + $0x60] sm:$0xff] %vm1266, %v2503
        %2563 = vst.msk [vmem:[#allocation3 + $0x68] sm:$0xff] %vm1266, %v2505
        %2564 = vst.msk [vmem:[#allocation3 + $0x70] sm:$0xff] %vm1266, %v2507
        %2565 = vst.msk [vmem:[#allocation3 + $0x78] sm:$0xff] %vm1266, %v2509
        %2566 = vst.msk [vmem:[#allocation3 + $0x80] sm:$0xff] %vm1266, %v2511
        %2567 = vst.msk [vmem:[#allocation3 + $0x88] sm:$0xff] %vm1266, %v2513
        %2568 = vst.msk [vmem:[#allocation3 + $0x90] sm:$0xff] %vm1266, %v2515
        %2569 = vst.msk [vmem:[#allocation3 + $0x98] sm:$0xff] %vm1266, %v2517
        %2570 = vst.msk [vmem:[#allocation3 + $0xa0] sm:$0xff] %vm1266, %v2519
        %2571 = vst.msk [vmem:[#allocation3 + $0xa8] sm:$0xff] %vm1266, %v2521
        %2572 = vst.msk [vmem:[#allocation3 + $0xb0] sm:$0xff] %vm1266, %v2523
        %2573 = vst.msk [vmem:[#allocation3 + $0xb8] sm:$0xff] %vm1266, %v2525
        %v2574 = vld [vmem:[%s1145 + $0x2] sm:$0xff]
        %v2575 = vld [vmem:[%s1145 + $0xa] sm:$0xff]
        %v2576 = vld [vmem:[%s1145 + $0x1a] sm:$0xff]
        %v2577 = vld [vmem:[%s1145 + $0x22] sm:$0xff]
        %v2578 = vld [vmem:[%s1145 + $0x32] sm:$0xff]
        %v2579 = vld [vmem:[%s1145 + $0x3a] sm:$0xff]
        %v2580 = vld [vmem:[%s1145 + $0x4a] sm:$0xff]
        %v2581 = vld [vmem:[%s1145 + $0x52] sm:$0xff]
        %v2582 = vld [vmem:[%s1145 + $0x62] sm:$0xff]
        %v2583 = vld [vmem:[%s1145 + $0x6a] sm:$0xff]
        %v2584 = vld [vmem:[%s1145 + $0x7a] sm:$0xff]
        %v2585 = vld [vmem:[%s1145 + $0x82] sm:$0xff]
        %v2586 = vld [vmem:[%s1145 + $0x92] sm:$0xff]
        %v2587 = vld [vmem:[%s1145 + $0x9a] sm:$0xff]
        %v2588 = vld [vmem:[%s1145 + $0xaa] sm:$0xff]
        %v2589 = vld [vmem:[%s1145 + $0xb2] sm:$0xff]
        %v2590 = vld [vmem:[%s1145 + $0xc2] sm:$0xff]
        %v2591 = vld [vmem:[%s1145 + $0xca] sm:$0xff]
        %v2592 = vld [vmem:[%s1145 + $0xda] sm:$0xff]
        %v2593 = vld [vmem:[%s1145 + $0xe2] sm:$0xff]
        %v2594 = vld [vmem:[%s1145 + $0xf2] sm:$0xff]
        %v2595 = vld [vmem:[%s1145 + $0xfa] sm:$0xff]
        %v2596 = vld [vmem:[%s1145 + $0x10a] sm:$0xff]
        %v2597 = vld [vmem:[%s1145 + $0x112] sm:$0xff]
        %2622 = vrot.lane.b32.xlu0 %v2574, 20
        %v2623 = vpop.permute.xlu0 %2622
        %2624 = vrot.lane.b32.xlu0 %v2575, 20
        %v2625 = vpop.permute.xlu0 %2624
        %2626 = vrot.lane.b32.xlu0 %v2576, 20
        %v2627 = vpop.permute.xlu0 %2626
        %2628 = vrot.lane.b32.xlu0 %v2577, 20
        %v2629 = vpop.permute.xlu0 %2628
        %2630 = vrot.lane.b32.xlu0 %v2578, 20
        %v2631 = vpop.permute.xlu0 %2630
        %2632 = vrot.lane.b32.xlu0 %v2579, 20
        %v2633 = vpop.permute.xlu0 %2632
        %2634 = vrot.lane.b32.xlu0 %v2580, 20
        %v2635 = vpop.permute.xlu0 %2634
        %2636 = vrot.lane.b32.xlu0 %v2581, 20
        %v2637 = vpop.permute.xlu0 %2636
        %2638 = vrot.lane.b32.xlu0 %v2582, 20
        %v2639 = vpop.permute.xlu0 %2638
        %2640 = vrot.lane.b32.xlu0 %v2583, 20
        %v2641 = vpop.permute.xlu0 %2640
        %2642 = vrot.lane.b32.xlu0 %v2584, 20
        %v2643 = vpop.permute.xlu0 %2642
        %2644 = vrot.lane.b32.xlu0 %v2585, 20
        %v2645 = vpop.permute.xlu0 %2644
        %2646 = vrot.lane.b32.xlu0 %v2586, 20
        %v2647 = vpop.permute.xlu0 %2646
        %2648 = vrot.lane.b32.xlu0 %v2587, 20
        %v2649 = vpop.permute.xlu0 %2648
        %2650 = vrot.lane.b32.xlu0 %v2588, 20
        %v2651 = vpop.permute.xlu0 %2650
        %2652 = vrot.lane.b32.xlu0 %v2589, 20
        %v2653 = vpop.permute.xlu0 %2652
        %2654 = vrot.lane.b32.xlu0 %v2590, 20
        %v2655 = vpop.permute.xlu0 %2654
        %2656 = vrot.lane.b32.xlu0 %v2591, 20
        %v2657 = vpop.permute.xlu0 %2656
        %2658 = vrot.lane.b32.xlu0 %v2592, 20
        %v2659 = vpop.permute.xlu0 %2658
        %2660 = vrot.lane.b32.xlu0 %v2593, 20
        %v2661 = vpop.permute.xlu0 %2660
        %2662 = vrot.lane.b32.xlu0 %v2594, 20
        %v2663 = vpop.permute.xlu0 %2662
        %2664 = vrot.lane.b32.xlu0 %v2595, 20
        %v2665 = vpop.permute.xlu0 %2664
        %2666 = vrot.lane.b32.xlu0 %v2596, 20
        %v2667 = vpop.permute.xlu0 %2666
        %2668 = vrot.lane.b32.xlu0 %v2597, 20
        %v2669 = vpop.permute.xlu0 %2668
        %2694 = vst.msk [vmem:[#allocation3] sm:$0xff] %vm1411, %v2623
        %2695 = vst.msk [vmem:[#allocation3 + $0x8] sm:$0xff] %vm1411, %v2625
        %2696 = vst.msk [vmem:[#allocation3 + $0x10] sm:$0xff] %vm1411, %v2627
        %2697 = vst.msk [vmem:[#allocation3 + $0x18] sm:$0xff] %vm1411, %v2629
        %2698 = vst.msk [vmem:[#allocation3 + $0x20] sm:$0xff] %vm1411, %v2631
        %2699 = vst.msk [vmem:[#allocation3 + $0x28] sm:$0xff] %vm1411, %v2633
        %2700 = vst.msk [vmem:[#allocation3 + $0x30] sm:$0xff] %vm1411, %v2635
        %2701 = vst.msk [vmem:[#allocation3 + $0x38] sm:$0xff] %vm1411, %v2637
        %2702 = vst.msk [vmem:[#allocation3 + $0x40] sm:$0xff] %vm1411, %v2639
        %2703 = vst.msk [vmem:[#allocation3 + $0x48] sm:$0xff] %vm1411, %v2641
        %2704 = vst.msk [vmem:[#allocation3 + $0x50] sm:$0xff] %vm1411, %v2643
        %2705 = vst.msk [vmem:[#allocation3 + $0x58] sm:$0xff] %vm1411, %v2645
        %2706 = vst.msk [vmem:[#allocation3 + $0x60] sm:$0xff] %vm1411, %v2647
        %2707 = vst.msk [vmem:[#allocation3 + $0x68] sm:$0xff] %vm1411, %v2649
        %2708 = vst.msk [vmem:[#allocation3 + $0x70] sm:$0xff] %vm1411, %v2651
        %2709 = vst.msk [vmem:[#allocation3 + $0x78] sm:$0xff] %vm1411, %v2653
        %2710 = vst.msk [vmem:[#allocation3 + $0x80] sm:$0xff] %vm1411, %v2655
        %2711 = vst.msk [vmem:[#allocation3 + $0x88] sm:$0xff] %vm1411, %v2657
        %2712 = vst.msk [vmem:[#allocation3 + $0x90] sm:$0xff] %vm1411, %v2659
        %2713 = vst.msk [vmem:[#allocation3 + $0x98] sm:$0xff] %vm1411, %v2661
        %2714 = vst.msk [vmem:[#allocation3 + $0xa0] sm:$0xff] %vm1411, %v2663
        %2715 = vst.msk [vmem:[#allocation3 + $0xa8] sm:$0xff] %vm1411, %v2665
        %2716 = vst.msk [vmem:[#allocation3 + $0xb0] sm:$0xff] %vm1411, %v2667
        %2717 = vst.msk [vmem:[#allocation3 + $0xb8] sm:$0xff] %vm1411, %v2669
        %v2718 = vld [vmem:[#allocation3] sm:$0xff]
        %v2719 = vld [vmem:[#allocation3 + $0x8] sm:$0xff]
        %v2720 = vld [vmem:[#allocation3 + $0x10] sm:$0xff]
        %v2721 = vld [vmem:[#allocation3 + $0x18] sm:$0xff]
        %v2722 = vld [vmem:[#allocation3 + $0x20] sm:$0xff]
        %v2723 = vld [vmem:[#allocation3 + $0x28] sm:$0xff]
        %v2724 = vld [vmem:[#allocation3 + $0x30] sm:$0xff]
        %v2725 = vld [vmem:[#allocation3 + $0x38] sm:$0xff]
        %v2726 = vld [vmem:[#allocation3 + $0x40] sm:$0xff]
        %v2727 = vld [vmem:[#allocation3 + $0x48] sm:$0xff]
        %v2728 = vld [vmem:[#allocation3 + $0x50] sm:$0xff]
        %v2729 = vld [vmem:[#allocation3 + $0x58] sm:$0xff]
        %v2730 = vld [vmem:[#allocation3 + $0x60] sm:$0xff]
        %v2731 = vld [vmem:[#allocation3 + $0x68] sm:$0xff]
        %v2732 = vld [vmem:[#allocation3 + $0x70] sm:$0xff]
        %v2733 = vld [vmem:[#allocation3 + $0x78] sm:$0xff]
        %v2734 = vld [vmem:[#allocation3 + $0x80] sm:$0xff]
        %v2735 = vld [vmem:[#allocation3 + $0x88] sm:$0xff]
        %v2736 = vld [vmem:[#allocation3 + $0x90] sm:$0xff]
        %v2737 = vld [vmem:[#allocation3 + $0x98] sm:$0xff]
        %v2738 = vld [vmem:[#allocation3 + $0xa0] sm:$0xff]
        %v2739 = vld [vmem:[#allocation3 + $0xa8] sm:$0xff]
        %v2740 = vld [vmem:[#allocation3 + $0xb0] sm:$0xff]
        %v2741 = vld [vmem:[#allocation3 + $0xb8] sm:$0xff]
        %s2742 = scalar_lea.vmem %s3, 24
        %v2743 = vld [vmem:[%s2742] sm:$0xff]
        %v2744 = vld [vmem:[%s2742 + $0x8] sm:$0xff]
        %v2745 = vld [vmem:[%s2742 + $0x10] sm:$0xff]
        %v2747 = vsel %vm1463, %v2718, 0
        %v2750 = vsel %vm1463, %v2719, 0
        %v2753 = vsel %vm1463, %v2720, 0
        %v2756 = vsel %vm1463, %v2721, 0
        %v2759 = vsel %vm1463, %v2722, 0
        %v2762 = vsel %vm1463, %v2723, 0
        %v2765 = vsel %vm1463, %v2724, 0
        %v2768 = vsel %vm1463, %v2725, 0
        %v2771 = vsel %vm1463, %v2726, 0
        %v2774 = vsel %vm1463, %v2727, 0
        %v2777 = vsel %vm1463, %v2728, 0
        %v2780 = vsel %vm1463, %v2729, 0
        %v2783 = vsel %vm1463, %v2730, 0
        %v2786 = vsel %vm1463, %v2731, 0
        %v2789 = vsel %vm1463, %v2732, 0
        %v2792 = vsel %vm1463, %v2733, 0
        %v2795 = vsel %vm1463, %v2734, 0
        %v2798 = vsel %vm1463, %v2735, 0
        %v2801 = vsel %vm1463, %v2736, 0
        %v2804 = vsel %vm1463, %v2737, 0
        %v2807 = vsel %vm1463, %v2738, 0
        %v2810 = vsel %vm1463, %v2739, 0
        %v2813 = vsel %vm1463, %v2740, 0
        %v2816 = vsel %vm1463, %v2741, 0
        %2818 = vmatprep.subr.mxu0 0.0
        %2819 = vmatpush1.msra.mxu0 %v2743
        %2820 = vmatprep.subr.mxu0 0.0
        %2821 = vmatpush1.msra.mxu0 %v2744
        %2822 = vmatprep.subr.mxu0 0.0
        %2823 = vmatpush1.msra.mxu0 %v2745
        %2824 = vmatprep.subr.mxu0 0.0
        %2825 = vmatpush1.msra.mxu0 0.0
        %2826 = vmatprep.subr.mxu0 0.0
        %2827 = vmatpush1.msra.mxu0 0.0
        %2828 = vmatprep.subr.mxu0 0.0
        %2829 = vmatpush1.msra.mxu0 0.0
        %2830 = vmatprep.subr.mxu0 0.0
        %2831 = vmatpush1.msra.mxu0 0.0
        %2832 = vmatprep.subr.mxu0 0.0
        %2833 = vmatpush1.msra.mxu0 0.0
        %2834 = vmatprep.subr.mxu0 0.0
        %2835 = vmatpush1.msra.mxu0 0.0
        %2836 = vmatprep.subr.mxu0 0.0
        %2837 = vmatpush1.msra.mxu0 0.0
        %2838 = vmatprep.subr.mxu0 0.0
        %2839 = vmatpush1.msra.mxu0 0.0
        %2840 = vmatprep.subr.mxu0 0.0
        %2841 = vmatpush1.msra.mxu0 0.0
        %2842 = vmatprep.subr.mxu0 0.0
        %2843 = vmatpush1.msra.mxu0 0.0
        %2844 = vmatprep.subr.mxu0 0.0
        %2845 = vmatpush1.msra.mxu0 0.0
        %2846 = vmatprep.subr.mxu0 0.0
        %2847 = vmatpush1.msra.mxu0 0.0
        %2848 = vmatprep.subr.mxu0 0.0
        %2849 = vmatpush1.msra.mxu0 0.0
        %2850 = vmatprep.subr.mxu0 0.0
        %2851 = vmatpush1.msra.mxu0 0.0
        %2852 = vmatprep.subr.mxu0 0.0
        %2853 = vmatpush1.msra.mxu0 0.0
        %2854 = vmatprep.subr.mxu0 0.0
        %2855 = vmatpush1.msra.mxu0 0.0
        %2856 = vmatprep.subr.mxu0 0.0
        %2857 = vmatpush1.msra.mxu0 0.0
        %2858 = vmatprep.subr.mxu0 0.0
        %2859 = vmatpush1.msra.mxu0 0.0
        %2860 = vmatprep.subr.mxu0 0.0
        %2861 = vmatpush1.msra.mxu0 0.0
        %2862 = vmatprep.subr.mxu0 0.0
        %2863 = vmatpush1.msra.mxu0 0.0
        %2864 = vmatprep.subr.mxu0 0.0
        %2865 = vmatpush1.msra.mxu0 0.0
        %2866 = vmatprep.subr.mxu0 0.0
        %2867 = vmatpush1.msra.mxu0 0.0
        %2868 = vmatprep.subr.mxu0 0.0
        %2869 = vmatpush1.msra.mxu0 0.0
        %2870 = vmatprep.subr.mxu0 0.0
        %2871 = vmatpush1.msra.mxu0 0.0
        %2872 = vmatprep.subr.mxu0 0.0
        %2873 = vmatpush1.msra.mxu0 0.0
        %2874 = vmatprep.subr.mxu0 0.0
        %2875 = vmatpush1.msra.mxu0 0.0
        %2876 = vmatprep.subr.mxu0 0.0
        %2877 = vmatpush1.msra.mxu0 0.0
        %2878 = vmatprep.subr.mxu0 0.0
        %2879 = vmatpush1.msra.mxu0 0.0
        %2880 = vmatprep.subr.mxu0 0.0
        %2881 = vmatpush1.msra.mxu0 0.0
        %2882 = vmatprep.mubr.f32.mxu0 0.0
        %2883 = vmatmul.mubr.f32.gmra.mrb[0].mxu0 %v2747
        %v2884 = vpop.f32.mrb[0].mxu0
        %v2885 = vadd.f32 0.0, %v2884
        %v2886 = vpop.f32.mrb[0].mxu0
        %2887 = vmatprep.mubr.f32.mxu0 0.0
        %2888 = vmatmul.mubr.f32.gmra.mrb[0].mxu0 %v2750
        %v2889 = vpop.f32.mrb[0].mxu0
        %v2890 = vadd.f32 0.0, %v2889
        %v2891 = vpop.f32.mrb[0].mxu0
        %2892 = vmatprep.mubr.f32.mxu0 0.0
        %2893 = vmatmul.mubr.f32.gmra.mrb[0].mxu0 %v2753
        %v2894 = vpop.f32.mrb[0].mxu0
        %v2895 = vadd.f32 0.0, %v2894
        %v2896 = vpop.f32.mrb[0].mxu0
        %2897 = vmatprep.mubr.f32.mxu0 0.0
        %2898 = vmatmul.mubr.f32.gmra.mrb[0].mxu0 %v2756
        %v2899 = vpop.f32.mrb[0].mxu0
        %v2900 = vadd.f32 0.0, %v2899
        %v2901 = vpop.f32.mrb[0].mxu0
        %2902 = vmatprep.mubr.f32.mxu0 0.0
        %2903 = vmatmul.mubr.f32.gmra.mrb[0].mxu0 %v2759
        %v2904 = vpop.f32.mrb[0].mxu0
        %v2905 = vadd.f32 0.0, %v2904
        %v2906 = vpop.f32.mrb[0].mxu0
        %2907 = vmatprep.mubr.f32.mxu0 0.0
        %2908 = vmatmul.mubr.f32.gmra.mrb[0].mxu0 %v2762
        %v2909 = vpop.f32.mrb[0].mxu0
        %v2910 = vadd.f32 0.0, %v2909
        %v2911 = vpop.f32.mrb[0].mxu0
        %2912 = vmatprep.mubr.f32.mxu0 0.0
        %2913 = vmatmul.mubr.f32.gmra.mrb[0].mxu0 %v2765
        %v2914 = vpop.f32.mrb[0].mxu0
        %v2915 = vadd.f32 0.0, %v2914
        %v2916 = vpop.f32.mrb[0].mxu0
        %2917 = vmatprep.mubr.f32.mxu0 0.0
        %2918 = vmatmul.mubr.f32.gmra.mrb[0].mxu0 %v2768
        %v2919 = vpop.f32.mrb[0].mxu0
        %v2920 = vadd.f32 0.0, %v2919
        %v2921 = vpop.f32.mrb[0].mxu0
        %2922 = vmatprep.mubr.f32.mxu0 0.0
        %2923 = vmatmul.mubr.f32.gmra.mrb[0].mxu0 %v2771
        %v2924 = vpop.f32.mrb[0].mxu0
        %v2925 = vadd.f32 0.0, %v2924
        %v2926 = vpop.f32.mrb[0].mxu0
        %2927 = vmatprep.mubr.f32.mxu0 0.0
        %2928 = vmatmul.mubr.f32.gmra.mrb[0].mxu0 %v2774
        %v2929 = vpop.f32.mrb[0].mxu0
        %v2930 = vadd.f32 0.0, %v2929
        %v2931 = vpop.f32.mrb[0].mxu0
        %2932 = vmatprep.mubr.f32.mxu0 0.0
        %2933 = vmatmul.mubr.f32.gmra.mrb[0].mxu0 %v2777
        %v2934 = vpop.f32.mrb[0].mxu0
        %v2935 = vadd.f32 0.0, %v2934
        %v2936 = vpop.f32.mrb[0].mxu0
        %2937 = vmatprep.mubr.f32.mxu0 0.0
        %2938 = vmatmul.mubr.f32.gmra.mrb[0].mxu0 %v2780
        %v2939 = vpop.f32.mrb[0].mxu0
        %v2940 = vadd.f32 0.0, %v2939
        %v2941 = vpop.f32.mrb[0].mxu0
        %2942 = vmatprep.mubr.f32.mxu0 0.0
        %2943 = vmatmul.mubr.f32.gmra.mrb[0].mxu0 %v2783
        %v2944 = vpop.f32.mrb[0].mxu0
        %v2945 = vadd.f32 0.0, %v2944
        %v2946 = vpop.f32.mrb[0].mxu0
        %2947 = vmatprep.mubr.f32.mxu0 0.0
        %2948 = vmatmul.mubr.f32.gmra.mrb[0].mxu0 %v2786
        %v2949 = vpop.f32.mrb[0].mxu0
        %v2950 = vadd.f32 0.0, %v2949
        %v2951 = vpop.f32.mrb[0].mxu0
        %2952 = vmatprep.mubr.f32.mxu0 0.0
        %2953 = vmatmul.mubr.f32.gmra.mrb[0].mxu0 %v2789
        %v2954 = vpop.f32.mrb[0].mxu0
        %v2955 = vadd.f32 0.0, %v2954
        %v2956 = vpop.f32.mrb[0].mxu0
        %2957 = vmatprep.mubr.f32.mxu0 0.0
        %2958 = vmatmul.mubr.f32.gmra.mrb[0].mxu0 %v2792
        %v2959 = vpop.f32.mrb[0].mxu0
        %v2960 = vadd.f32 0.0, %v2959
        %v2961 = vpop.f32.mrb[0].mxu0
        %2962 = vmatprep.mubr.f32.mxu0 0.0
        %2963 = vmatmul.mubr.f32.gmra.mrb[0].mxu0 %v2795
        %v2964 = vpop.f32.mrb[0].mxu0
        %v2965 = vadd.f32 0.0, %v2964
        %v2966 = vpop.f32.mrb[0].mxu0
        %2967 = vmatprep.mubr.f32.mxu0 0.0
        %2968 = vmatmul.mubr.f32.gmra.mrb[0].mxu0 %v2798
        %v2969 = vpop.f32.mrb[0].mxu0
        %v2970 = vadd.f32 0.0, %v2969
        %v2971 = vpop.f32.mrb[0].mxu0
        %2972 = vmatprep.mubr.f32.mxu0 0.0
        %2973 = vmatmul.mubr.f32.gmra.mrb[0].mxu0 %v2801
        %v2974 = vpop.f32.mrb[0].mxu0
        %v2975 = vadd.f32 0.0, %v2974
        %v2976 = vpop.f32.mrb[0].mxu0
        %2977 = vmatprep.mubr.f32.mxu0 0.0
        %2978 = vmatmul.mubr.f32.gmra.mrb[0].mxu0 %v2804
        %v2979 = vpop.f32.mrb[0].mxu0
        %v2980 = vadd.f32 0.0, %v2979
        %v2981 = vpop.f32.mrb[0].mxu0
        %2982 = vmatprep.mubr.f32.mxu0 0.0
        %2983 = vmatmul.mubr.f32.gmra.mrb[0].mxu0 %v2807
        %v2984 = vpop.f32.mrb[0].mxu0
        %v2985 = vadd.f32 0.0, %v2984
        %v2986 = vpop.f32.mrb[0].mxu0
        %2987 = vmatprep.mubr.f32.mxu0 0.0
        %2988 = vmatmul.mubr.f32.gmra.mrb[0].mxu0 %v2810
        %v2989 = vpop.f32.mrb[0].mxu0
        %v2990 = vadd.f32 0.0, %v2989
        %v2991 = vpop.f32.mrb[0].mxu0
        %2992 = vmatprep.mubr.f32.mxu0 0.0
        %2993 = vmatmul.mubr.f32.gmra.mrb[0].mxu0 %v2813
        %v2994 = vpop.f32.mrb[0].mxu0
        %v2995 = vadd.f32 0.0, %v2994
        %v2996 = vpop.f32.mrb[0].mxu0
        %2997 = vmatprep.mubr.f32.mxu0 0.0
        %2998 = vmatmul.mubr.f32.gmra.mrb[0].mxu0 %v2816
        %v2999 = vpop.f32.mrb[0].mxu0
        %v3000 = vadd.f32 0.0, %v2999
        %v3001 = vpop.f32.mrb[0].mxu0
        %3002 = vdwg.mxu0
        %3027 = vrot.lane.b32.xlu0 %v2885, 8
        %v3028 = vpop.permute.xlu0 %3027
        %3029 = vrot.lane.b32.xlu0 %v2890, 8
        %v3030 = vpop.permute.xlu0 %3029
        %3031 = vrot.lane.b32.xlu0 %v2895, 8
        %v3032 = vpop.permute.xlu0 %3031
        %3033 = vrot.lane.b32.xlu0 %v2900, 8
        %v3034 = vpop.permute.xlu0 %3033
        %3035 = vrot.lane.b32.xlu0 %v2905, 8
        %v3036 = vpop.permute.xlu0 %3035
        %3037 = vrot.lane.b32.xlu0 %v2910, 8
        %v3038 = vpop.permute.xlu0 %3037
        %3039 = vrot.lane.b32.xlu0 %v2915, 8
        %v3040 = vpop.permute.xlu0 %3039
        %3041 = vrot.lane.b32.xlu0 %v2920, 8
        %v3042 = vpop.permute.xlu0 %3041
        %3043 = vrot.lane.b32.xlu0 %v2925, 8
        %v3044 = vpop.permute.xlu0 %3043
        %3045 = vrot.lane.b32.xlu0 %v2930, 8
        %v3046 = vpop.permute.xlu0 %3045
        %3047 = vrot.lane.b32.xlu0 %v2935, 8
        %v3048 = vpop.permute.xlu0 %3047
        %3049 = vrot.lane.b32.xlu0 %v2940, 8
        %v3050 = vpop.permute.xlu0 %3049
        %3051 = vrot.lane.b32.xlu0 %v2945, 8
        %v3052 = vpop.permute.xlu0 %3051
        %3053 = vrot.lane.b32.xlu0 %v2950, 8
        %v3054 = vpop.permute.xlu0 %3053
        %3055 = vrot.lane.b32.xlu0 %v2955, 8
        %v3056 = vpop.permute.xlu0 %3055
        %3057 = vrot.lane.b32.xlu0 %v2960, 8
        %v3058 = vpop.permute.xlu0 %3057
        %3059 = vrot.lane.b32.xlu0 %v2965, 8
        %v3060 = vpop.permute.xlu0 %3059
        %3061 = vrot.lane.b32.xlu0 %v2970, 8
        %v3062 = vpop.permute.xlu0 %3061
        %3063 = vrot.lane.b32.xlu0 %v2975, 8
        %v3064 = vpop.permute.xlu0 %3063
        %3065 = vrot.lane.b32.xlu0 %v2980, 8
        %v3066 = vpop.permute.xlu0 %3065
        %3067 = vrot.lane.b32.xlu0 %v2985, 8
        %v3068 = vpop.permute.xlu0 %3067
        %3069 = vrot.lane.b32.xlu0 %v2990, 8
        %v3070 = vpop.permute.xlu0 %3069
        %3071 = vrot.lane.b32.xlu0 %v2995, 8
        %v3072 = vpop.permute.xlu0 %3071
        %3073 = vrot.lane.b32.xlu0 %v3000, 8
        %v3074 = vpop.permute.xlu0 %3073
        %vm3099 = vcmask 130112
        %3100 = vst.msk [vmem:[%s377] sm:$0xff] %vm3099, %v3028
        %3101 = vst.msk [vmem:[%s377 + $0x8] sm:$0xff] %vm3099, %v3030
        %3102 = vst.msk [vmem:[%s377 + $0x10] sm:$0xff] %vm3099, %v3032
        %3103 = vst.msk [vmem:[%s377 + $0x18] sm:$0xff] %vm3099, %v3034
        %3104 = vst.msk [vmem:[%s377 + $0x20] sm:$0xff] %vm3099, %v3036
        %3105 = vst.msk [vmem:[%s377 + $0x28] sm:$0xff] %vm3099, %v3038
        %3106 = vst.msk [vmem:[%s377 + $0x30] sm:$0xff] %vm3099, %v3040
        %3107 = vst.msk [vmem:[%s377 + $0x38] sm:$0xff] %vm3099, %v3042
        %3108 = vst.msk [vmem:[%s377 + $0x40] sm:$0xff] %vm3099, %v3044
        %3109 = vst.msk [vmem:[%s377 + $0x48] sm:$0xff] %vm3099, %v3046
        %3110 = vst.msk [vmem:[%s377 + $0x50] sm:$0xff] %vm3099, %v3048
        %3111 = vst.msk [vmem:[%s377 + $0x58] sm:$0xff] %vm3099, %v3050
        %3112 = vst.msk [vmem:[%s377 + $0x60] sm:$0xff] %vm3099, %v3052
        %3113 = vst.msk [vmem:[%s377 + $0x68] sm:$0xff] %vm3099, %v3054
        %3114 = vst.msk [vmem:[%s377 + $0x70] sm:$0xff] %vm3099, %v3056
        %3115 = vst.msk [vmem:[%s377 + $0x78] sm:$0xff] %vm3099, %v3058
        %3116 = vst.msk [vmem:[%s377 + $0x80] sm:$0xff] %vm3099, %v3060
        %3117 = vst.msk [vmem:[%s377 + $0x88] sm:$0xff] %vm3099, %v3062
        %3118 = vst.msk [vmem:[%s377 + $0x90] sm:$0xff] %vm3099, %v3064
        %3119 = vst.msk [vmem:[%s377 + $0x98] sm:$0xff] %vm3099, %v3066
        %3120 = vst.msk [vmem:[%s377 + $0xa0] sm:$0xff] %vm3099, %v3068
        %3121 = vst.msk [vmem:[%s377 + $0xa8] sm:$0xff] %vm3099, %v3070
        %3122 = vst.msk [vmem:[%s377 + $0xb0] sm:$0xff] %vm3099, %v3072
        %3123 = vst.msk [vmem:[%s377 + $0xb8] sm:$0xff] %vm3099, %v3074
        %v3124 = vsel %vm1770, %v2885, 0.0
        %v3125 = vsel %vm1771, %v2890, 0.0
        %v3126 = vsel %vm1772, %v2895, 0.0
        %v3127 = vsel %vm1773, %v2900, 0.0
        %v3128 = vsel %vm1774, %v2905, 0.0
        %v3129 = vsel %vm1775, %v2910, 0.0
        %v3130 = vsel %vm1776, %v2915, 0.0
        %v3131 = vsel %vm1777, %v2920, 0.0
        %v3132 = vsel %vm1778, %v2925, 0.0
        %v3133 = vsel %vm1779, %v2930, 0.0
        %v3134 = vsel %vm1780, %v2935, 0.0
        %v3135 = vsel %vm1781, %v2940, 0.0
        %v3136 = vsel %vm1782, %v2945, 0.0
        %v3137 = vsel %vm1783, %v2950, 0.0
        %v3138 = vsel %vm1784, %v2955, 0.0
        %v3139 = vsel %vm1785, %v2960, 0.0
        %v3140 = vsel %vm1786, %v2965, 0.0
        %v3141 = vsel %vm1787, %v2970, 0.0
        %v3142 = vsel %vm1788, %v2975, 0.0
        %v3143 = vsel %vm1789, %v2980, 0.0
        %v3144 = vsel %vm1790, %v2985, 0.0
        %v3145 = vsel %vm1791, %v2990, 0.0
        %v3146 = vsel %vm1792, %v2995, 0.0
        %v3147 = vsel %vm1793, %v3000, 0.0
        %v3148 = vsel %vm1721, %v3124, 0.0
        %v3149 = vsel %vm1721, %v3125, 0.0
        %v3150 = vadd.f32 %v3148, %v3149
        %v3151 = vsel %vm1721, %v3126, 0.0
        %v3152 = vadd.f32 %v3150, %v3151
        %v3153 = vsel %vm1721, %v3127, 0.0
        %v3154 = vadd.f32 %v3152, %v3153
        %v3155 = vsel %vm1721, %v3128, 0.0
        %v3156 = vadd.f32 %v3154, %v3155
        %v3157 = vsel %vm1721, %v3129, 0.0
        %v3158 = vadd.f32 %v3156, %v3157
        %v3159 = vsel %vm1721, %v3130, 0.0
        %v3160 = vadd.f32 %v3158, %v3159
        %v3161 = vsel %vm1721, %v3131, 0.0
        %v3162 = vadd.f32 %v3160, %v3161
        %v3163 = vsel %vm1721, %v3132, 0.0
        %v3164 = vadd.f32 %v3162, %v3163
        %v3165 = vsel %vm1721, %v3133, 0.0
        %v3166 = vadd.f32 %v3164, %v3165
        %v3167 = vsel %vm1721, %v3134, 0.0
        %v3168 = vadd.f32 %v3166, %v3167
        %v3169 = vsel %vm1721, %v3135, 0.0
        %v3170 = vadd.f32 %v3168, %v3169
        %v3171 = vsel %vm1721, %v3136, 0.0
        %v3172 = vadd.f32 %v3170, %v3171
        %v3173 = vsel %vm1721, %v3137, 0.0
        %v3174 = vadd.f32 %v3172, %v3173
        %v3175 = vsel %vm1721, %v3138, 0.0
        %v3176 = vadd.f32 %v3174, %v3175
        %v3177 = vsel %vm1721, %v3139, 0.0
        %v3178 = vadd.f32 %v3176, %v3177
        %v3179 = vsel %vm1721, %v3140, 0.0
        %v3180 = vadd.f32 %v3178, %v3179
        %v3181 = vsel %vm1721, %v3141, 0.0
        %v3182 = vadd.f32 %v3180, %v3181
        %v3183 = vsel %vm1721, %v3142, 0.0
        %v3184 = vadd.f32 %v3182, %v3183
        %v3185 = vsel %vm1721, %v3143, 0.0
        %v3186 = vadd.f32 %v3184, %v3185
        %v3187 = vsel %vm1721, %v3144, 0.0
        %v3188 = vadd.f32 %v3186, %v3187
        %v3189 = vsel %vm1721, %v3145, 0.0
        %v3190 = vadd.f32 %v3188, %v3189
        %v3191 = vsel %vm1721, %v3146, 0.0
        %v3192 = vadd.f32 %v3190, %v3191
        %v3193 = vsel %vm1721, %v3147, 0.0
        %v3194 = vadd.f32 %v3192, %v3193
        %v3195 = vrot.slane %v3194, 4
        %v3196 = vadd.f32 %v3194, %v3195
        %v3197 = vrot.slane %v3196, 2
        %v3198 = vadd.f32 %v3196, %v3197
        %v3199 = vrot.slane %v3198, 1
        %v3200 = vadd.f32 %v3198, %v3199
        %v3201 = vadd.f32 %v1871, %v3200
        %v3202 = vmul.f32 %v3124, %v3124
        %v3203 = vmul.f32 %v3125, %v3125
        %v3204 = vmul.f32 %v3126, %v3126
        %v3205 = vmul.f32 %v3127, %v3127
        %v3206 = vmul.f32 %v3128, %v3128
        %v3207 = vmul.f32 %v3129, %v3129
        %v3208 = vmul.f32 %v3130, %v3130
        %v3209 = vmul.f32 %v3131, %v3131
        %v3210 = vmul.f32 %v3132, %v3132
        %v3211 = vmul.f32 %v3133, %v3133
        %v3212 = vmul.f32 %v3134, %v3134
        %v3213 = vmul.f32 %v3135, %v3135
        %v3214 = vmul.f32 %v3136, %v3136
        %v3215 = vmul.f32 %v3137, %v3137
        %v3216 = vmul.f32 %v3138, %v3138
        %v3217 = vmul.f32 %v3139, %v3139
        %v3218 = vmul.f32 %v3140, %v3140
        %v3219 = vmul.f32 %v3141, %v3141
        %v3220 = vmul.f32 %v3142, %v3142
        %v3221 = vmul.f32 %v3143, %v3143
        %v3222 = vmul.f32 %v3144, %v3144
        %v3223 = vmul.f32 %v3145, %v3145
        %v3224 = vmul.f32 %v3146, %v3146
        %v3225 = vmul.f32 %v3147, %v3147
        %v3226 = vsel %vm1721, %v3202, 0.0
        %v3227 = vsel %vm1721, %v3203, 0.0
        %v3228 = vadd.f32 %v3226, %v3227
        %v3229 = vsel %vm1721, %v3204, 0.0
        %v3230 = vadd.f32 %v3228, %v3229
        %v3231 = vsel %vm1721, %v3205, 0.0
        %v3232 = vadd.f32 %v3230, %v3231
        %v3233 = vsel %vm1721, %v3206, 0.0
        %v3234 = vadd.f32 %v3232, %v3233
        %v3235 = vsel %vm1721, %v3207, 0.0
        %v3236 = vadd.f32 %v3234, %v3235
        %v3237 = vsel %vm1721, %v3208, 0.0
        %v3238 = vadd.f32 %v3236, %v3237
        %v3239 = vsel %vm1721, %v3209, 0.0
        %v3240 = vadd.f32 %v3238, %v3239
        %v3241 = vsel %vm1721, %v3210, 0.0
        %v3242 = vadd.f32 %v3240, %v3241
        %v3243 = vsel %vm1721, %v3211, 0.0
        %v3244 = vadd.f32 %v3242, %v3243
        %v3245 = vsel %vm1721, %v3212, 0.0
        %v3246 = vadd.f32 %v3244, %v3245
        %v3247 = vsel %vm1721, %v3213, 0.0
        %v3248 = vadd.f32 %v3246, %v3247
        %v3249 = vsel %vm1721, %v3214, 0.0
        %v3250 = vadd.f32 %v3248, %v3249
        %v3251 = vsel %vm1721, %v3215, 0.0
        %v3252 = vadd.f32 %v3250, %v3251
        %v3253 = vsel %vm1721, %v3216, 0.0
        %v3254 = vadd.f32 %v3252, %v3253
        %v3255 = vsel %vm1721, %v3217, 0.0
        %v3256 = vadd.f32 %v3254, %v3255
        %v3257 = vsel %vm1721, %v3218, 0.0
        %v3258 = vadd.f32 %v3256, %v3257
        %v3259 = vsel %vm1721, %v3219, 0.0
        %v3260 = vadd.f32 %v3258, %v3259
        %v3261 = vsel %vm1721, %v3220, 0.0
        %v3262 = vadd.f32 %v3260, %v3261
        %v3263 = vsel %vm1721, %v3221, 0.0
        %v3264 = vadd.f32 %v3262, %v3263
        %v3265 = vsel %vm1721, %v3222, 0.0
        %v3266 = vadd.f32 %v3264, %v3265
        %v3267 = vsel %vm1721, %v3223, 0.0
        %v3268 = vadd.f32 %v3266, %v3267
        %v3269 = vsel %vm1721, %v3224, 0.0
        %v3270 = vadd.f32 %v3268, %v3269
        %v3271 = vsel %vm1721, %v3225, 0.0
        %v3272 = vadd.f32 %v3270, %v3271
        %v3273 = vrot.slane %v3272, 4
        %v3274 = vadd.f32 %v3272, %v3273
        %v3275 = vrot.slane %v3274, 2
        %v3276 = vadd.f32 %v3274, %v3275
        %v3277 = vrot.slane %v3276, 1
        %v3278 = vadd.f32 %v3276, %v3277
        %v3279 = vadd.f32 %v1949, %v3278
        %vm3280 = vcmask 57344
        %3281 = vst.msk [vmem:[%s463] sm:$0x1] %vm3280, %v3201
        %3282 = vst.msk [vmem:[%s470] sm:$0x1] %vm3280, %v3279
        %s3283 = sand.u32 %s161, 1
        %s3284 = sand.u32 %s161, 1
        %s3285 = smul.addr %s3284, 192
        %s3286 = scalar_lea.vmem [#allocation4], %s3285
        %p3287 = scmp.lt.s32.totalorder %s22, 1
        %s3288 = scalar_select %p3287, %s22, 1
        %p3289 = scmp.lt.s32.totalorder %s23, 2
        %s3290 = scalar_select %p3289, %s23, 2
        %s3291 = smul.addr %s3288, 3
        %s3292 = sadd.s32 %s3290, %s3291
        %s3293 = scalar_lea.vmem %s5, %s3292
        %p3294 = scmp.lt.s32.totalorder %s22, 1
        %s3295 = scalar_select %p3294, %s22, 1
        %p3296 = scmp.lt.s32.totalorder %s23, 2
        %s3297 = scalar_select %p3296, %s23, 2
        %s3298 = smul.addr %s3295, 3
        %s3299 = sadd.s32 %s3297, %s3298
        %s3300 = scalar_lea.vmem %s6, %s3299
        // Predicated region
        $region45: #{up_conv_forward.2} parent=35 // pred_check
          %p3301 = pneg %p171
        $region46: #{up_conv_forward.2} parent=35 // pred_check_branch
          %3303 = sbr.rel (%p3301) target = $region48
        $region47: #{up_conv_forward.2} parent=35 // pred_region
          %s3304 = smul.u32 12, %s23
          %s3305 = ssub.s32 32, %s3304
          %p3306 = scmp.lt.s32.totalorder %s3305, 12
          %s3307 = scalar_select %p3306, %s3305, 12
          %s3308 = smul.u32 128, %s3307
          %s3309 = smul.u32 %s3308, 2
          %p3310 = scmp.ne.s32.totalorder 0, %s3309
          %s3311 = smul.addr %s3304, 2
          %s3312 = smul.addr %s22, 64
          %s3313 = sadd.s32 %s3311, %s3312
          %s3314 = smul.addr %s3313, 8
          %s3315 = scalar_lea.vmem %s4, %s3314
          %s3316 = smul.u32 %s3307, 2
          // Predicated region
          $region49: #{up_conv_forward.2} parent=47 // pred_check
            %p3317 = pneg %p3310
          $region50: #{up_conv_forward.2} parent=47 // pred_check_branch
            %3319 = sbr.rel (%p3317) target = $region52
          $region51: #{up_conv_forward.2} parent=47 // pred_region
            // Predicated region
            $region53: #{up_conv_forward.2} parent=51 // pred_check
              _
            $region54: #{up_conv_forward.2} parent=51 // pred_check_branch
              %3321 = sbr.rel (0) target = $region56
            $region55: #{up_conv_forward.2} parent=51 // pred_region
              // Predicated region
              $region75: #{up_conv_forward.2} parent=55 // pred_check
                _
              $region76: #{up_conv_forward.2} parent=55 // pred_check_branch
                %3417 = sbr.rel (0) target = $region78
              $region77: #{up_conv_forward.2} parent=55 // pred_region
                %s3418 = sdiv.u32.pop %s3316, 24
                %s3419 = srem.u32.pop %s3316, 24
                // While loop
                $region79: #{up_conv_forward.2} parent=77 // loop_pre_header
                  _
                $region80: #{up_conv_forward.2} parent=77 // loop_header
                  %s3421 = sphi 0, %s3423
                  %p3422 = scmp.ge.s32.totalorder %s3421, %s3418
                  %s3426 = sphi 0, %s3479
                  %s3427 = sphi %s3286, %s3482
                  %s3428 = sphi %s3315, %s3483
                $region81: #{up_conv_forward.2} parent=77 // loop_header_branch
                  %3425 = sbr.rel (%p3422) target = $region85
                $region82: #{up_conv_forward.2} parent=77 // loop_body
                  %v3429 = vld [vmem:[%s3427] sm:$0xff]
                  %3430 = vst [vmem:[%s3428] sm:$0xff] %v3429
                  %v3431 = vld [vmem:[%s3427 + $0x8] sm:$0xff]
                  %3432 = vst [vmem:[%s3428 + $0x8] sm:$0xff] %v3431
                  %v3433 = vld [vmem:[%s3427 + $0x10] sm:$0xff]
                  %3434 = vst [vmem:[%s3428 + $0x10] sm:$0xff] %v3433
                  %v3435 = vld [vmem:[%s3427 + $0x18] sm:$0xff]
                  %3436 = vst [vmem:[%s3428 + $0x18] sm:$0xff] %v3435
                  %v3437 = vld [vmem:[%s3427 + $0x20] sm:$0xff]
                  %3438 = vst [vmem:[%s3428 + $0x20] sm:$0xff] %v3437
                  %v3439 = vld [vmem:[%s3427 + $0x28] sm:$0xff]
                  %3440 = vst [vmem:[%s3428 + $0x28] sm:$0xff] %v3439
                  %v3441 = vld [vmem:[%s3427 + $0x30] sm:$0xff]
                  %3442 = vst [vmem:[%s3428 + $0x30] sm:$0xff] %v3441
                  %v3443 = vld [vmem:[%s3427 + $0x38] sm:$0xff]
                  %3444 = vst [vmem:[%s3428 + $0x38] sm:$0xff] %v3443
                  %v3445 = vld [vmem:[%s3427 + $0x40] sm:$0xff]
                  %3446 = vst [vmem:[%s3428 + $0x40] sm:$0xff] %v3445
                  %v3447 = vld [vmem:[%s3427 + $0x48] sm:$0xff]
                  %3448 = vst [vmem:[%s3428 + $0x48] sm:$0xff] %v3447
                  %v3449 = vld [vmem:[%s3427 + $0x50] sm:$0xff]
                  %3450 = vst [vmem:[%s3428 + $0x50] sm:$0xff] %v3449
                  %v3451 = vld [vmem:[%s3427 + $0x58] sm:$0xff]
                  %3452 = vst [vmem:[%s3428 + $0x58] sm:$0xff] %v3451
                  %v3453 = vld [vmem:[%s3427 + $0x60] sm:$0xff]
                  %3454 = vst [vmem:[%s3428 + $0x60] sm:$0xff] %v3453
                  %v3455 = vld [vmem:[%s3427 + $0x68] sm:$0xff]
                  %3456 = vst [vmem:[%s3428 + $0x68] sm:$0xff] %v3455
                  %v3457 = vld [vmem:[%s3427 + $0x70] sm:$0xff]
                  %3458 = vst [vmem:[%s3428 + $0x70] sm:$0xff] %v3457
                  %v3459 = vld [vmem:[%s3427 + $0x78] sm:$0xff]
                  %3460 = vst [vmem:[%s3428 + $0x78] sm:$0xff] %v3459
                  %v3461 = vld [vmem:[%s3427 + $0x80] sm:$0xff]
                  %3462 = vst [vmem:[%s3428 + $0x80] sm:$0xff] %v3461
                  %v3463 = vld [vmem:[%s3427 + $0x88] sm:$0xff]
                  %3464 = vst [vmem:[%s3428 + $0x88] sm:$0xff] %v3463
                  %v3465 = vld [vmem:[%s3427 + $0x90] sm:$0xff]
                  %3466 = vst [vmem:[%s3428 + $0x90] sm:$0xff] %v3465
                  %v3467 = vld [vmem:[%s3427 + $0x98] sm:$0xff]
                  %3468 = vst [vmem:[%s3428 + $0x98] sm:$0xff] %v3467
                  %v3469 = vld [vmem:[%s3427 + $0xa0] sm:$0xff]
                  %3470 = vst [vmem:[%s3428 + $0xa0] sm:$0xff] %v3469
                  %v3471 = vld [vmem:[%s3427 + $0xa8] sm:$0xff]
                  %3472 = vst [vmem:[%s3428 + $0xa8] sm:$0xff] %v3471
                  %v3473 = vld [vmem:[%s3427 + $0xb0] sm:$0xff]
                  %3474 = vst [vmem:[%s3428 + $0xb0] sm:$0xff] %v3473
                  %v3475 = vld [vmem:[%s3427 + $0xb8] sm:$0xff]
                  %3476 = vst [vmem:[%s3428 + $0xb8] sm:$0xff] %v3475
                  %s3477 = sadd.s32 1, %s3426
                  %p3478 = scmp.ge.s32.totalorder %s3477, %s3418
                  %s3479 = scalar_select %p3478, 0, %s3477
                  %s3480 = smul.u32 %s3479, 192
                  %s3481 = smul.u32 %s3479, 192
                  %s3482 = scalar_lea.vmem %s3286, %s3480 [#allocation4]
                  %s3483 = scalar_lea.vmem %s3315, %s3481
                $region83: #{up_conv_forward.2} parent=77 // loop_footer
                  %s3423 = sadd.s32 %s3421, 1
                $region84: #{up_conv_forward.2} parent=77 // loop_footer_branch
                  %3420 = sbr.rel target = $region80
                $region85: #{up_conv_forward.2} parent=77 // loop_exit
                  _
                %s3484 = sdiv.u32.pop %s3316, 24
                %s3485 = srem.u32.pop %s3316, 24
                %s3486 = smul.u32 %s3484, 24
                %s3487 = smul.u32 8, %s3486
                %s3488 = scalar_lea.vmem %s3286, %s3487 [#allocation4]
                %s3489 = smul.u32 8, %s3486
                %s3490 = scalar_lea.vmem %s3315, %s3489
                // While loop
                $region86: #{up_conv_forward.2} parent=77 // loop_pre_header
                  _
                $region87: #{up_conv_forward.2} parent=77 // loop_header
                  %s3492 = sphi 0, %s3494
                  %p3493 = scmp.ge.s32.totalorder %s3492, %s3485
                  %s3497 = sphi 0, %s3504
                  %s3498 = sphi %s3488, %s3507
                  %s3499 = sphi %s3490, %s3508
                $region88: #{up_conv_forward.2} parent=77 // loop_header_branch
                  %3496 = sbr.rel (%p3493) target = $region92
                $region89: #{up_conv_forward.2} parent=77 // loop_body
                  %v3500 = vld [vmem:[%s3498] sm:$0xff]
                  %3501 = vst [vmem:[%s3499] sm:$0xff] %v3500
                  %s3502 = sadd.s32 1, %s3497
                  %p3503 = scmp.ge.s32.totalorder %s3502, %s3485
                  %s3504 = scalar_select %p3503, 0, %s3502
                  %s3505 = smul.u32 %s3504, 8
                  %s3506 = smul.u32 %s3504, 8
                  %s3507 = scalar_lea.vmem %s3488, %s3505 [#allocation4]
                  %s3508 = scalar_lea.vmem %s3490, %s3506
                $region90: #{up_conv_forward.2} parent=77 // loop_footer
                  %s3494 = sadd.s32 %s3492, 1
                $region91: #{up_conv_forward.2} parent=77 // loop_footer_branch
                  %3491 = sbr.rel target = $region87
                $region92: #{up_conv_forward.2} parent=77 // loop_exit
                  _
              $region78: #{up_conv_forward.2} parent=55 // pred_fallthru
                _
              // Predicated region
              $region93: #{up_conv_forward.2} parent=55 // pred_check
                _
              $region94: #{up_conv_forward.2} parent=55 // pred_check_branch
                %3510 = sbr.rel target = $region96
              $region95: #{up_conv_forward.2} parent=55 // pred_region
                _
              $region96: #{up_conv_forward.2} parent=55 // pred_fallthru
                _
            $region56: #{up_conv_forward.2} parent=51 // pred_fallthru
              _
            // Predicated region
            $region57: #{up_conv_forward.2} parent=51 // pred_check
              _
            $region58: #{up_conv_forward.2} parent=51 // pred_check_branch
              %3323 = sbr.rel target = $region60
            $region59: #{up_conv_forward.2} parent=51 // pred_region
              %s3325 = sdiv.u32.pop %s3316, 24
              %s3326 = srem.u32.pop %s3316, 24
              // While loop
              $region61: #{up_conv_forward.2} parent=59 // loop_pre_header
                _
              $region62: #{up_conv_forward.2} parent=59 // loop_header
                %s3328 = sphi 0, %s3330
                %p3329 = scmp.ge.s32.totalorder %s3328, %s3325
                %s3333 = sphi 0, %s3386
                %s3334 = sphi %s3286, %s3389
                %s3335 = sphi %s3315, %s3390
              $region63: #{up_conv_forward.2} parent=59 // loop_header_branch
                %3332 = sbr.rel (%p3329) target = $region67
              $region64: #{up_conv_forward.2} parent=59 // loop_body
                %v3336 = vld [vmem:[%s3334] sm:$0xff]
                %3337 = vst [vmem:[%s3335] sm:$0xff] %v3336
                %v3338 = vld [vmem:[%s3334 + $0x8] sm:$0xff]
                %3339 = vst [vmem:[%s3335 + $0x8] sm:$0xff] %v3338
                %v3340 = vld [vmem:[%s3334 + $0x10] sm:$0xff]
                %3341 = vst [vmem:[%s3335 + $0x10] sm:$0xff] %v3340
                %v3342 = vld [vmem:[%s3334 + $0x18] sm:$0xff]
                %3343 = vst [vmem:[%s3335 + $0x18] sm:$0xff] %v3342
                %v3344 = vld [vmem:[%s3334 + $0x20] sm:$0xff]
                %3345 = vst [vmem:[%s3335 + $0x20] sm:$0xff] %v3344
                %v3346 = vld [vmem:[%s3334 + $0x28] sm:$0xff]
                %3347 = vst [vmem:[%s3335 + $0x28] sm:$0xff] %v3346
                %v3348 = vld [vmem:[%s3334 + $0x30] sm:$0xff]
                %3349 = vst [vmem:[%s3335 + $0x30] sm:$0xff] %v3348
                %v3350 = vld [vmem:[%s3334 + $0x38] sm:$0xff]
                %3351 = vst [vmem:[%s3335 + $0x38] sm:$0xff] %v3350
                %v3352 = vld [vmem:[%s3334 + $0x40] sm:$0xff]
                %3353 = vst [vmem:[%s3335 + $0x40] sm:$0xff] %v3352
                %v3354 = vld [vmem:[%s3334 + $0x48] sm:$0xff]
                %3355 = vst [vmem:[%s3335 + $0x48] sm:$0xff] %v3354
                %v3356 = vld [vmem:[%s3334 + $0x50] sm:$0xff]
                %3357 = vst [vmem:[%s3335 + $0x50] sm:$0xff] %v3356
                %v3358 = vld [vmem:[%s3334 + $0x58] sm:$0xff]
                %3359 = vst [vmem:[%s3335 + $0x58] sm:$0xff] %v3358
                %v3360 = vld [vmem:[%s3334 + $0x60] sm:$0xff]
                %3361 = vst [vmem:[%s3335 + $0x60] sm:$0xff] %v3360
                %v3362 = vld [vmem:[%s3334 + $0x68] sm:$0xff]
                %3363 = vst [vmem:[%s3335 + $0x68] sm:$0xff] %v3362
                %v3364 = vld [vmem:[%s3334 + $0x70] sm:$0xff]
                %3365 = vst [vmem:[%s3335 + $0x70] sm:$0xff] %v3364
                %v3366 = vld [vmem:[%s3334 + $0x78] sm:$0xff]
                %3367 = vst [vmem:[%s3335 + $0x78] sm:$0xff] %v3366
                %v3368 = vld [vmem:[%s3334 + $0x80] sm:$0xff]
                %3369 = vst [vmem:[%s3335 + $0x80] sm:$0xff] %v3368
                %v3370 = vld [vmem:[%s3334 + $0x88] sm:$0xff]
                %3371 = vst [vmem:[%s3335 + $0x88] sm:$0xff] %v3370
                %v3372 = vld [vmem:[%s3334 + $0x90] sm:$0xff]
                %3373 = vst [vmem:[%s3335 + $0x90] sm:$0xff] %v3372
                %v3374 = vld [vmem:[%s3334 + $0x98] sm:$0xff]
                %3375 = vst [vmem:[%s3335 + $0x98] sm:$0xff] %v3374
                %v3376 = vld [vmem:[%s3334 + $0xa0] sm:$0xff]
                %3377 = vst [vmem:[%s3335 + $0xa0] sm:$0xff] %v3376
                %v3378 = vld [vmem:[%s3334 + $0xa8] sm:$0xff]
                %3379 = vst [vmem:[%s3335 + $0xa8] sm:$0xff] %v3378
                %v3380 = vld [vmem:[%s3334 + $0xb0] sm:$0xff]
                %3381 = vst [vmem:[%s3335 + $0xb0] sm:$0xff] %v3380
                %v3382 = vld [vmem:[%s3334 + $0xb8] sm:$0xff]
                %3383 = vst [vmem:[%s3335 + $0xb8] sm:$0xff] %v3382
                %s3384 = sadd.s32 1, %s3333
                %p3385 = scmp.ge.s32.totalorder %s3384, %s3325
                %s3386 = scalar_select %p3385, 0, %s3384
                %s3387 = smul.u32 %s3386, 192
                %s3388 = smul.u32 %s3386, 192
                %s3389 = scalar_lea.vmem %s3286, %s3387 [#allocation4]
                %s3390 = scalar_lea.vmem %s3315, %s3388
              $region65: #{up_conv_forward.2} parent=59 // loop_footer
                %s3330 = sadd.s32 %s3328, 1
              $region66: #{up_conv_forward.2} parent=59 // loop_footer_branch
                %3327 = sbr.rel target = $region62
              $region67: #{up_conv_forward.2} parent=59 // loop_exit
                _
              %s3391 = sdiv.u32.pop %s3316, 24
              %s3392 = srem.u32.pop %s3316, 24
              %s3393 = smul.u32 %s3391, 24
              %s3394 = smul.u32 8, %s3393
              %s3395 = scalar_lea.vmem %s3286, %s3394 [#allocation4]
              %s3396 = smul.u32 8, %s3393
              %s3397 = scalar_lea.vmem %s3315, %s3396
              // While loop
              $region68: #{up_conv_forward.2} parent=59 // loop_pre_header
                _
              $region69: #{up_conv_forward.2} parent=59 // loop_header
                %s3399 = sphi 0, %s3401
                %p3400 = scmp.ge.s32.totalorder %s3399, %s3392
                %s3404 = sphi 0, %s3411
                %s3405 = sphi %s3395, %s3414
                %s3406 = sphi %s3397, %s3415
              $region70: #{up_conv_forward.2} parent=59 // loop_header_branch
                %3403 = sbr.rel (%p3400) target = $region74
              $region71: #{up_conv_forward.2} parent=59 // loop_body
                %v3407 = vld [vmem:[%s3405] sm:$0xff]
                %3408 = vst [vmem:[%s3406] sm:$0xff] %v3407
                %s3409 = sadd.s32 1, %s3404
                %p3410 = scmp.ge.s32.totalorder %s3409, %s3392
                %s3411 = scalar_select %p3410, 0, %s3409
                %s3412 = smul.u32 %s3411, 8
                %s3413 = smul.u32 %s3411, 8
                %s3414 = scalar_lea.vmem %s3395, %s3412 [#allocation4]
                %s3415 = scalar_lea.vmem %s3397, %s3413
              $region72: #{up_conv_forward.2} parent=59 // loop_footer
                %s3401 = sadd.s32 %s3399, 1
              $region73: #{up_conv_forward.2} parent=59 // loop_footer_branch
                %3398 = sbr.rel target = $region69
              $region74: #{up_conv_forward.2} parent=59 // loop_exit
                _
            $region60: #{up_conv_forward.2} parent=51 // pred_fallthru
              _
          $region52: #{up_conv_forward.2} parent=47 // pred_fallthru
            _
          %3511 = vnop
        $region48: #{up_conv_forward.2} parent=35 // pred_fallthru
          _
        // Predicated region
        $region97: #{up_conv_forward.2} parent=35 // pred_check
          %p3512 = pneg %p199
        $region98: #{up_conv_forward.2} parent=35 // pred_check_branch
          %3514 = sbr.rel (%p3512) target = $region100
        $region99: #{up_conv_forward.2} parent=35 // pred_region
          _
        $region100: #{up_conv_forward.2} parent=35 // pred_fallthru
          _
        // Predicated region
        $region101: #{up_conv_forward.2} parent=35 // pred_check
          %p3515 = pneg %p227
        $region102: #{up_conv_forward.2} parent=35 // pred_check_branch
          %3517 = sbr.rel (%p3515) target = $region104
        $region103: #{up_conv_forward.2} parent=35 // pred_region
          _
        $region104: #{up_conv_forward.2} parent=35 // pred_fallthru
          _
      $region36: #{up_conv_forward.2} parent=5 // pred_fallthru
        _
      %p3518 = scmp.le.s32.totalorder 2, %s13
      // Predicated region
      $region105: #{up_conv_forward.2} parent=5 // pred_check
        %p3519 = pneg %p3518
      $region106: #{up_conv_forward.2} parent=5 // pred_check_branch
        %3521 = sbr.rel (%p3519) target = $region108
      $region107: #{up_conv_forward.2} parent=5 // pred_region
        %s3522 = ssub.s32 %s13, 2
        // Predicated region
        $region109: #{up_conv_forward.2} parent=107 // pred_check
          %p3523 = pneg %p177
        $region110: #{up_conv_forward.2} parent=107 // pred_check_branch
          %3525 = sbr.rel (%p3523) target = $region112
        $region111: #{up_conv_forward.2} parent=107 // pred_region
          %s3526 = sand.u32 %s162, 1
          %s3527 = sand.u32 %s162, 1
          %s3528 = smul.addr %s3527, 192
          %s3529 = scalar_lea.vmem [#allocation4], %s3528
        $region112: #{up_conv_forward.2} parent=107 // pred_fallthru
          _
        // Predicated region
        $region113: #{up_conv_forward.2} parent=107 // pred_check
          %p3530 = pneg %p205
        $region114: #{up_conv_forward.2} parent=107 // pred_check_branch
          %3532 = sbr.rel (%p3530) target = $region116
        $region115: #{up_conv_forward.2} parent=107 // pred_region
          %p3533 = scmp.lt.s32.totalorder %s24, 1
          %s3534 = scalar_select %p3533, %s24, 1
          %p3535 = scmp.lt.s32.totalorder %s25, 2
          %s3536 = scalar_select %p3535, %s25, 2
          %s3537 = smul.addr %s3534, 3
          %s3538 = sadd.s32 %s3536, %s3537
          %s3539 = scalar_lea.vmem %s5, %s3538
        $region116: #{up_conv_forward.2} parent=107 // pred_fallthru
          _
        // Predicated region
        $region117: #{up_conv_forward.2} parent=107 // pred_check
          %p3540 = pneg %p233
        $region118: #{up_conv_forward.2} parent=107 // pred_check_branch
          %3542 = sbr.rel (%p3540) target = $region120
        $region119: #{up_conv_forward.2} parent=107 // pred_region
          %p3543 = scmp.lt.s32.totalorder %s24, 1
          %s3544 = scalar_select %p3543, %s24, 1
          %p3545 = scmp.lt.s32.totalorder %s25, 2
          %s3546 = scalar_select %p3545, %s25, 2
          %s3547 = smul.addr %s3544, 3
          %s3548 = sadd.s32 %s3546, %s3547
          %s3549 = scalar_lea.vmem %s6, %s3548
        $region120: #{up_conv_forward.2} parent=107 // pred_fallthru
          _
      $region108: #{up_conv_forward.2} parent=5 // pred_fallthru
        _
    $region6: #{up_conv_forward.2} parent=1 // loop_footer
      %s17 = sadd.s32 1, %s13
    $region7: #{up_conv_forward.2} parent=1 // loop_footer_branch
      %12 = sbr.rel target = $region3
    $region8: #{up_conv_forward.2} parent=1 // loop_exit
      _

</llo_original>
